<compile_context>
chip_gen: v7x
topology: tpu7x:2x2x1
jax: 0.10.0
libtpu: 0.0.40
codegen_flags: <defaults>
</compile_context>

<pallas_src>
import functools

import jax
import jax.numpy as jnp
from jax.experimental import pallas as pl
from jax.experimental.pallas import tpu as pltpu

HP = 128          # padded lane width per hidden / gate block
DEC_P = 128       # padded decoder hidden width (real 64)
OUT_P = 128       # padded output width (real out_dim, lane-dense store)


# ----------------------------- Pallas kernel --------------------------------
def lstm_interp_kernel(xg_ref, xf_ref, keep_ref,
                       we_ref, be_ref,
                       w0_ref, b0_ref,
                       w1_ref, b1_ref,
                       wd1_ref, bd1_ref,
                       wd2_ref, bd2_ref,
                       out_ref, *, hid, hp):
    tm = xg_ref.shape[0]
    in_dim = xg_ref.shape[1]

    xg = xg_ref[...]
    xf = xf_ref[...]

    # ---- fused encoder: one (2*tm, in_dim) @ (in_dim, HP) matmul ----
    enc_in = jnp.concatenate([xg, xf], axis=0)
    enc = jnp.dot(enc_in, we_ref[...], preferred_element_type=jnp.float32) + be_ref[...]
    X = enc[:tm]        # encoded ground-motion graph
    S = enc[tm:]        # encoded self.x  -> initial H0 = C0 = H1 = C1

    def sig(v):
        # sigmoid(x) = 0.5*(tanh(0.5*x)+1): one EUP push instead of exp+recip
        return 0.5 * jnp.tanh(0.5 * v) + 0.5

    def lstm_cell(x, h, c, w_ref, b_ref):
        # fused [x, h] @ [Wih ; Whh]  (gate blocks padded to 128 lanes each,
        # so the i/f/g/o slices below are lane-tile aligned)
        xh = jnp.concatenate([x, h], axis=-1)                    # (tm, 2*HP)
        gates = (jnp.dot(xh, w_ref[...], preferred_element_type=jnp.float32)
                 + b_ref[...])                                   # (tm, 4*HP)
        i = sig(gates[:, 0 * hp:1 * hp])
        f = sig(gates[:, 1 * hp:2 * hp])
        g = jnp.tanh(gates[:, 2 * hp:3 * hp])
        o = sig(gates[:, 3 * hp:4 * hp])
        c_new = f * c + i * g
        h_new = o * jnp.tanh(c_new)
        return h_new, c_new

    # layer 0
    H0, _C0 = lstm_cell(X, S, S, w0_ref, b0_ref)

    # next_cell_input: overwrite hidden cols [hid-20, hid) with the ground-motion
    # values.  Those values already live in Xg's last 20 input columns (same
    # per-segment overwrite the model applies), so no extra HBM stream is needed.
    gm20 = xg[:, in_dim - 20:in_dim]                             # (tm, 20)
    pieces = []
    if hid - 20 > 0:
        pieces.append(jnp.zeros((tm, hid - 20), jnp.float32))
    pieces.append(gm20)
    if hp - hid > 0:
        pieces.append(jnp.zeros((tm, hp - hid), jnp.float32))
    gm_placed = jnp.concatenate(pieces, axis=-1)                 # (tm, HP)
    H_gm = H0 * keep_ref[...] + gm_placed                        # precomputed keep mask

    # layer 1
    H1, C1 = lstm_cell(H_gm, S, S, w1_ref, b1_ref)

    # decoder: concat([H1, C1]) @ stacked Wd1, ReLU, @ padded Wd2
    hc = jnp.concatenate([H1, C1], axis=-1)                      # (tm, 2*HP)
    hdec = (jnp.dot(hc, wd1_ref[...], preferred_element_type=jnp.float32)
            + bd1_ref[...])
    hdec = jnp.maximum(hdec, 0.0)
    y = jnp.dot(hdec, wd2_ref[...], preferred_element_type=jnp.float32) + bd2_ref[...]
    out_ref[...] = y                                             # lane-dense (tm, 128) store


# ----------------------------- padding helpers --------------------------------
def _pad2(a, rows, cols):
    return jnp.zeros((rows, cols), jnp.float32).at[:a.shape[0], :a.shape[1]].set(a)


def _pad_gate_cols(w, hid, hp):
    """(rows, 4*hid) -> (rows, 4*hp): gate k placed at cols [k*hp, k*hp+hid)."""
    out = jnp.zeros((w.shape[0], 4 * hp), jnp.float32)
    for k in range(4):
        out = out.at[:, k * hp:k * hp + hid].set(w[:, k * hid:(k + 1) * hid])
    return out


def _stack_cell_w(wih, whh, hid, hp):
    wi = _pad2(_pad_gate_cols(wih, hid, hp), hp, 4 * hp)
    wh = _pad2(_pad_gate_cols(whh, hid, hp), hp, 4 * hp)
    return jnp.concatenate([wi, wh], axis=0)                     # (2*hp, 4*hp)


def _stack_dec_w(wd1h, wd1c, hid, hp, dec_p):
    w = jnp.zeros((2 * hp, dec_p), jnp.float32)
    w = w.at[:hid, :wd1h.shape[1]].set(wd1h)
    w = w.at[hp:hp + hid, :wd1c.shape[1]].set(wd1c)
    return w


def _pick_tm(n, cap=512):
    """Largest multiple-of-8 divisor of n that is <= cap and keeps grid >= 2."""
    best = None
    for t in range(8, min(cap, n) + 1, 8):
        if n % t == 0 and n // t >= 2:
            best = t
    return best if best is not None else n


# ------------------------------- wrapper -------------------------------------
def lstm_interpretability_forward(graph_node, x_feat, gm_1, gm_2, ptr, params):
    N, in_dim = graph_node.shape
    hid = params["We"].shape[1]
    out_dim = params["Wd2"].shape[1]
    dec_hid = params["Wd2"].shape[0]
    bs = len(ptr) - 1
    assert N % 8 == 0, "pad node count to a multiple of 8"
    assert in_dim >= 20 and 20 <= hid <= HP and dec_hid <= DEC_P and out_dim <= OUT_P

    # --- glue: vectorized per-batch-segment gm overwrite (no Python .at loop) ---
    ptr_arr = jnp.asarray(ptr, jnp.int32)
    seg_id = jnp.searchsorted(ptr_arr, jnp.arange(N, dtype=jnp.int32), side="right") - 1
    g1_rows = gm_1.reshape(bs, 10)[seg_id]                       # (N, 10)
    g2_rows = gm_2.reshape(bs, 10)[seg_id]                       # (N, 10)
    Xg = jnp.concatenate([graph_node[:, :in_dim - 20], g1_rows, g2_rows], axis=1)

    # --- pad / stack parameters into the lane-aligned kernel layout ---
    p = params
    We_p = _pad2(p["We"], in_dim, HP)
    be_p = _pad2(p["be"], 1, HP)
    W0_s = _stack_cell_w(p["Wih0"], p["Whh0"], hid, HP)
    b0_p = _pad_gate_cols(p["b0"], hid, HP)
    W1_s = _stack_cell_w(p["Wih1"], p["Whh1"], hid, HP)
    b1_p = _pad_gate_cols(p["b1"], hid, HP)
    Wd1_s = _stack_dec_w(p["Wd1h"], p["Wd1c"], hid, HP, DEC_P)
    bd1_p = _pad2(p["bd1"], 1, DEC_P)
    Wd2_p = _pad2(p["Wd2"], DEC_P, OUT_P)
    bd2_p = _pad2(p["bd2"], 1, OUT_P)
    keep = jnp.ones((1, HP), jnp.float32).at[:, hid - 20:hid].set(0.0)

    tm = _pick_tm(N)
    grid = (N // tm,)

    row_in = pl.BlockSpec((tm, in_dim), lambda i: (i, 0))

    def full(a):
        # constant block index -> DMA'd once, stays VMEM-resident across the grid
        return pl.BlockSpec(a.shape, lambda i: (0, 0))

    in_specs = [row_in, row_in, full(keep),
                full(We_p), full(be_p),
                full(W0_s), full(b0_p),
                full(W1_s), full(b1_p),
                full(Wd1_s), full(bd1_p),
                full(Wd2_p), full(bd2_p)]
    out_spec = pl.BlockSpec((tm, OUT_P), lambda i: (i, 0))

    kernel = functools.partial(lstm_interp_kernel, hid=hid, hp=HP)

    out_padded = pl.pallas_call(
        kernel,
        out_shape=jax.ShapeDtypeStruct((N, OUT_P), jnp.float32),
        grid_spec=pltpu.PrefetchScalarGridSpec(
            num_scalar_prefetch=0,
            grid=grid,
            in_specs=in_specs,
            out_specs=out_spec,
        ),
        compiler_params=pltpu.CompilerParams(dimension_semantics=("parallel",)),
    )(Xg, x_feat, keep,
      We_p, be_p,
      W0_s, b0_p,
      W1_s, b1_p,
      Wd1_s, bd1_p,
      Wd2_p, bd2_p)

    return out_padded[:, :out_dim]


# --------------------------- pure-JAX reference -------------------------------
def reference_forward(graph_node, x_feat, gm_1, gm_2, ptr, params):
    N, in_dim = graph_node.shape
    hid = params["We"].shape[1]
    bs = len(ptr) - 1

    def enc(v):
        return v @ params["We"] + params["be"]

    def cell(x, h, c, wih, whh, b):
        g = x @ wih + h @ whh + b
        i = jax.nn.sigmoid(g[:, :hid])
        f = jax.nn.sigmoid(g[:, hid:2 * hid])
        gg = jnp.tanh(g[:, 2 * hid:3 * hid])
        o = jax.nn.sigmoid(g[:, 3 * hid:])
        c2 = f * c + i * gg
        return o * jnp.tanh(c2), c2

    Xg = graph_node
    for b in range(bs):
        r = slice(int(ptr[b]), int(ptr[b + 1]))
        Xg = Xg.at[r, in_dim - 20:in_dim - 10].set(gm_1[b * 10:(b + 1) * 10])
        Xg = Xg.at[r, in_dim - 10:in_dim].set(gm_2[b * 10:(b + 1) * 10])
    X = enc(Xg)
    H0 = C0 = H1 = C1 = enc(x_feat)
    H0, C0 = cell(X, H0, C0, params["Wih0"], params["Whh0"], params["b0"])
    Hgm = H0
    for b in range(bs):
        r = slice(int(ptr[b]), int(ptr[b + 1]))
        Hgm = Hgm.at[r, hid - 20:hid - 10].set(gm_1[b * 10:(b + 1) * 10])
        Hgm = Hgm.at[r, hid - 10:hid].set(gm_2[b * 10:(b + 1) * 10])
    H1, C1 = cell(Hgm, H1, C1, params["Wih1"], params["Whh1"], params["b1"])
    state = jnp.concatenate([H1, C1], axis=1)
    Wd1 = jnp.concatenate([params["Wd1h"], params["Wd1c"]], axis=0)
    h = jnp.maximum(state @ Wd1 + params["bd1"], 0.0)
    return h @ params["Wd2"] + params["bd2"]


# --------------------------------- main ---------------------------------------
if __name__ == "__main__":
    N, in_dim, hid, out_dim = 512, 32, 32, 8
    bs = 2
    ptr = [0, 256, 512]

    key = jax.random.PRNGKey(0)
    ks = jax.random.split(key, 20)
    s = 0.1

    graph_node = jax.random.normal(ks[0], (N, in_dim), jnp.float32)
    x_feat = jax.random.normal(ks[1], (N, in_dim), jnp.float32)
    gm_1 = jax.random.normal(ks[2], (10 * bs,), jnp.float32)
    gm_2 = jax.random.normal(ks[3], (10 * bs,), jnp.float32)

    params = {
        # graph_encoder: MLP(in_dim, [], hid)
        "We":  s * jax.random.normal(ks[4], (in_dim, hid), jnp.float32),
        "be":  s * jax.random.normal(ks[5], (1, hid), jnp.float32),
        # LSTMCell 0 (weights stored transposed: [in, 4*hid]); b = b_ih + b_hh combined
        "Wih0": s * jax.random.normal(ks[6], (hid, 4 * hid), jnp.float32),
        "Whh0": s * jax.random.normal(ks[7], (hid, 4 * hid), jnp.float32),
        "b0":   s * jax.random.normal(ks[8], (1, 4 * hid), jnp.float32),
        # LSTMCell 1
        "Wih1": s * jax.random.normal(ks[9], (hid, 4 * hid), jnp.float32),
        "Whh1": s * jax.random.normal(ks[10], (hid, 4 * hid), jnp.float32),
        "b1":   s * jax.random.normal(ks[11], (1, 4 * hid), jnp.float32),
        # response_decoder: MLP(2*hid, [64], out_dim) -> Linear(2*hid,64)+ReLU, Linear(64,out)
        "Wd1h": s * jax.random.normal(ks[12], (hid, 64), jnp.float32),
        "Wd1c": s * jax.random.normal(ks[13], (hid, 64), jnp.float32),
        "bd1":  s * jax.random.normal(ks[14], (1, 64), jnp.float32),
        "Wd2":  s * jax.random.normal(ks[15], (64, out_dim), jnp.float32),
        "bd2":  s * jax.random.normal(ks[16], (1, out_dim), jnp.float32),
    }

    y = lstm_interpretability_forward(graph_node, x_feat, gm_1, gm_2, ptr, params)
    y = jax.block_until_ready(y)

    y_ref = reference_forward(graph_node, x_feat, gm_1, gm_2, ptr, params)
    assert y.shape == (N, out_dim)
    assert jnp.allclose(y, y_ref, rtol=2e-2, atol=2e-2), "mismatch vs reference"

    print("KERNEL_OK")
</pallas_src>

<mosaic_0001>
module attributes {stable_mosaic.version = 11 : i64} {
  func.func @lstm_interp_kernel(%arg0: i32, %arg1: memref<256x32xf32, #tpu.memory_space<vmem>>, %arg2: memref<256x32xf32, #tpu.memory_space<vmem>>, %arg3: memref<1x128xf32, #tpu.memory_space<vmem>>, %arg4: memref<32x128xf32, #tpu.memory_space<vmem>>, %arg5: memref<1x128xf32, #tpu.memory_space<vmem>>, %arg6: memref<256x512xf32, #tpu.memory_space<vmem>>, %arg7: memref<1x512xf32, #tpu.memory_space<vmem>>, %arg8: memref<256x512xf32, #tpu.memory_space<vmem>>, %arg9: memref<1x512xf32, #tpu.memory_space<vmem>>, %arg10: memref<256x128xf32, #tpu.memory_space<vmem>>, %arg11: memref<1x128xf32, #tpu.memory_space<vmem>>, %arg12: memref<128x128xf32, #tpu.memory_space<vmem>>, %arg13: memref<1x128xf32, #tpu.memory_space<vmem>>, %arg14: memref<256x128xf32, #tpu.memory_space<vmem>>) attributes {dimension_semantics = [#tpu.dimension_semantics<parallel>], iteration_bounds = array<i64: 2>, scalar_prefetch = 0 : i64, scratch_operands = 0 : i64, tpu.core_type = #tpu.core_type<tc>, window_params = [{transform_indices = @transform_0, window_bounds = array<i64: 256, 32>}, {transform_indices = @transform_1, window_bounds = array<i64: 256, 32>}, {pipeline_mode = #tpu.pipeline_mode<synchronous>, transform_indices = @transform_2, window_bounds = array<i64: 1, 128>}, {pipeline_mode = #tpu.pipeline_mode<synchronous>, transform_indices = @transform_3, window_bounds = array<i64: 32, 128>}, {pipeline_mode = #tpu.pipeline_mode<synchronous>, transform_indices = @transform_4, window_bounds = array<i64: 1, 128>}, {pipeline_mode = #tpu.pipeline_mode<synchronous>, transform_indices = @transform_5, window_bounds = array<i64: 256, 512>}, {pipeline_mode = #tpu.pipeline_mode<synchronous>, transform_indices = @transform_6, window_bounds = array<i64: 1, 512>}, {pipeline_mode = #tpu.pipeline_mode<synchronous>, transform_indices = @transform_7, window_bounds = array<i64: 256, 512>}, {pipeline_mode = #tpu.pipeline_mode<synchronous>, transform_indices = @transform_8, window_bounds = array<i64: 1, 512>}, {pipeline_mode = #tpu.pipeline_mode<synchronous>, transform_indices = @transform_9, window_bounds = array<i64: 256, 128>}, {pipeline_mode = #tpu.pipeline_mode<synchronous>, transform_indices = @transform_10, window_bounds = array<i64: 1, 128>}, {pipeline_mode = #tpu.pipeline_mode<synchronous>, transform_indices = @transform_11, window_bounds = array<i64: 128, 128>}, {pipeline_mode = #tpu.pipeline_mode<synchronous>, transform_indices = @transform_12, window_bounds = array<i64: 1, 128>}, {transform_indices = @transform_13, window_bounds = array<i64: 256, 128>}]} {
    %c0 = arith.constant 0 : index
    %c0_0 = arith.constant 0 : index
    %0 = vector.load %arg1[%c0, %c0_0] : memref<256x32xf32, #tpu.memory_space<vmem>>, vector<256x32xf32>
    %c0_1 = arith.constant 0 : index
    %c0_2 = arith.constant 0 : index
    %1 = vector.load %arg2[%c0_1, %c0_2] : memref<256x32xf32, #tpu.memory_space<vmem>>, vector<256x32xf32>
    %2 = tpu.concatenate %0, %1 in 0 : vector<256x32xf32>, vector<256x32xf32> -> vector<512x32xf32>
    %c0_3 = arith.constant 0 : index
    %c0_4 = arith.constant 0 : index
    %3 = vector.load %arg4[%c0_3, %c0_4] : memref<32x128xf32, #tpu.memory_space<vmem>>, vector<32x128xf32>
    %cst = arith.constant dense<0.000000e+00> : vector<512x128xf32>
    %4 = tpu.matmul %2, %3, %cst {dimension_numbers = #tpu.dot_dimension_numbers<[1], [0], [0], [1], [0, 0, 1, 1], [], []>} : vector<512x32xf32>, vector<32x128xf32>, vector<512x128xf32> -> vector<512x128xf32>
    %c0_5 = arith.constant 0 : index
    %c0_6 = arith.constant 0 : index
    %5 = vector.load %arg5[%c0_5, %c0_6] : memref<1x128xf32, #tpu.memory_space<vmem>>, vector<1x128xf32>
    %6 = vector.broadcast %5 : vector<1x128xf32> to vector<512x128xf32>
    %7 = arith.addf %4, %6 : vector<512x128xf32>
    %8 = vector.extract_strided_slice %7 {offsets = [0, 0], sizes = [256, 128], strides = [1, 1]} : vector<512x128xf32> to vector<256x128xf32>
    %9 = vector.extract_strided_slice %7 {offsets = [256, 0], sizes = [256, 128], strides = [1, 1]} : vector<512x128xf32> to vector<256x128xf32>
    %10 = tpu.concatenate %8, %9 in 1 : vector<256x128xf32>, vector<256x128xf32> -> vector<256x256xf32>
    %c0_7 = arith.constant 0 : index
    %c0_8 = arith.constant 0 : index
    %11 = vector.load %arg6[%c0_7, %c0_8] : memref<256x512xf32, #tpu.memory_space<vmem>>, vector<256x512xf32>
    %cst_9 = arith.constant dense<0.000000e+00> : vector<256x512xf32>
    %12 = tpu.matmul %10, %11, %cst_9 {dimension_numbers = #tpu.dot_dimension_numbers<[1], [0], [0], [1], [0, 0, 1, 1], [], []>} : vector<256x256xf32>, vector<256x512xf32>, vector<256x512xf32> -> vector<256x512xf32>
    %c0_10 = arith.constant 0 : index
    %c0_11 = arith.constant 0 : index
    %13 = vector.load %arg7[%c0_10, %c0_11] : memref<1x512xf32, #tpu.memory_space<vmem>>, vector<1x512xf32>
    %14 = vector.broadcast %13 : vector<1x512xf32> to vector<256x512xf32>
    %15 = arith.addf %12, %14 : vector<256x512xf32>
    %16 = vector.extract_strided_slice %15 {offsets = [0, 0], sizes = [256, 128], strides = [1, 1]} : vector<256x512xf32> to vector<256x128xf32>
    %cst_12 = arith.constant 5.000000e-01 : f32
    %17 = vector.broadcast %cst_12 : f32 to vector<256x128xf32>
    %18 = arith.mulf %17, %16 : vector<256x128xf32>
    %19 = math.tanh %18 : vector<256x128xf32>
    %cst_13 = arith.constant 5.000000e-01 : f32
    %20 = vector.broadcast %cst_13 : f32 to vector<256x128xf32>
    %21 = arith.mulf %20, %19 : vector<256x128xf32>
    %cst_14 = arith.constant 5.000000e-01 : f32
    %22 = vector.broadcast %cst_14 : f32 to vector<256x128xf32>
    %23 = arith.addf %21, %22 : vector<256x128xf32>
    %24 = vector.extract_strided_slice %15 {offsets = [0, 128], sizes = [256, 128], strides = [1, 1]} : vector<256x512xf32> to vector<256x128xf32>
    %cst_15 = arith.constant 5.000000e-01 : f32
    %25 = vector.broadcast %cst_15 : f32 to vector<256x128xf32>
    %26 = arith.mulf %25, %24 : vector<256x128xf32>
    %27 = math.tanh %26 : vector<256x128xf32>
    %cst_16 = arith.constant 5.000000e-01 : f32
    %28 = vector.broadcast %cst_16 : f32 to vector<256x128xf32>
    %29 = arith.mulf %28, %27 : vector<256x128xf32>
    %cst_17 = arith.constant 5.000000e-01 : f32
    %30 = vector.broadcast %cst_17 : f32 to vector<256x128xf32>
    %31 = arith.addf %29, %30 : vector<256x128xf32>
    %32 = vector.extract_strided_slice %15 {offsets = [0, 256], sizes = [256, 128], strides = [1, 1]} : vector<256x512xf32> to vector<256x128xf32>
    %33 = math.tanh %32 : vector<256x128xf32>
    %34 = vector.extract_strided_slice %15 {offsets = [0, 384], sizes = [256, 128], strides = [1, 1]} : vector<256x512xf32> to vector<256x128xf32>
    %cst_18 = arith.constant 5.000000e-01 : f32
    %35 = vector.broadcast %cst_18 : f32 to vector<256x128xf32>
    %36 = arith.mulf %35, %34 : vector<256x128xf32>
    %37 = math.tanh %36 : vector<256x128xf32>
    %cst_19 = arith.constant 5.000000e-01 : f32
    %38 = vector.broadcast %cst_19 : f32 to vector<256x128xf32>
    %39 = arith.mulf %38, %37 : vector<256x128xf32>
    %cst_20 = arith.constant 5.000000e-01 : f32
    %40 = vector.broadcast %cst_20 : f32 to vector<256x128xf32>
    %41 = arith.addf %39, %40 : vector<256x128xf32>
    %42 = arith.mulf %31, %9 : vector<256x128xf32>
    %43 = arith.mulf %23, %33 : vector<256x128xf32>
    %44 = arith.addf %42, %43 : vector<256x128xf32>
    %45 = math.tanh %44 : vector<256x128xf32>
    %46 = arith.mulf %41, %45 : vector<256x128xf32>
    %47 = vector.extract_strided_slice %0 {offsets = [0, 12], sizes = [256, 20], strides = [1, 1]} : vector<256x32xf32> to vector<256x20xf32>
    %cst_21 = arith.constant 0.000000e+00 : f32
    %48 = vector.broadcast %cst_21 : f32 to vector<256x12xf32>
    %cst_22 = arith.constant 0.000000e+00 : f32
    %49 = vector.broadcast %cst_22 : f32 to vector<256x96xf32>
    %50 = tpu.concatenate %48, %47, %49 in 1 : vector<256x12xf32>, vector<256x20xf32>, vector<256x96xf32> -> vector<256x128xf32>
    %c0_23 = arith.constant 0 : index
    %c0_24 = arith.constant 0 : index
    %51 = vector.load %arg3[%c0_23, %c0_24] : memref<1x128xf32, #tpu.memory_space<vmem>>, vector<1x128xf32>
    %52 = vector.broadcast %51 : vector<1x128xf32> to vector<256x128xf32>
    %53 = arith.mulf %46, %52 : vector<256x128xf32>
    %54 = arith.addf %53, %50 : vector<256x128xf32>
    %55 = tpu.concatenate %54, %9 in 1 : vector<256x128xf32>, vector<256x128xf32> -> vector<256x256xf32>
    %c0_25 = arith.constant 0 : index
    %c0_26 = arith.constant 0 : index
    %56 = vector.load %arg8[%c0_25, %c0_26] : memref<256x512xf32, #tpu.memory_space<vmem>>, vector<256x512xf32>
    %cst_27 = arith.constant dense<0.000000e+00> : vector<256x512xf32>
    %57 = tpu.matmul %55, %56, %cst_27 {dimension_numbers = #tpu.dot_dimension_numbers<[1], [0], [0], [1], [0, 0, 1, 1], [], []>} : vector<256x256xf32>, vector<256x512xf32>, vector<256x512xf32> -> vector<256x512xf32>
    %c0_28 = arith.constant 0 : index
    %c0_29 = arith.constant 0 : index
    %58 = vector.load %arg9[%c0_28, %c0_29] : memref<1x512xf32, #tpu.memory_space<vmem>>, vector<1x512xf32>
    %59 = vector.broadcast %58 : vector<1x512xf32> to vector<256x512xf32>
    %60 = arith.addf %57, %59 : vector<256x512xf32>
    %61 = vector.extract_strided_slice %60 {offsets = [0, 0], sizes = [256, 128], strides = [1, 1]} : vector<256x512xf32> to vector<256x128xf32>
    %cst_30 = arith.constant 5.000000e-01 : f32
    %62 = vector.broadcast %cst_30 : f32 to vector<256x128xf32>
    %63 = arith.mulf %62, %61 : vector<256x128xf32>
    %64 = math.tanh %63 : vector<256x128xf32>
    %cst_31 = arith.constant 5.000000e-01 : f32
    %65 = vector.broadcast %cst_31 : f32 to vector<256x128xf32>
    %66 = arith.mulf %65, %64 : vector<256x128xf32>
    %cst_32 = arith.constant 5.000000e-01 : f32
    %67 = vector.broadcast %cst_32 : f32 to vector<256x128xf32>
    %68 = arith.addf %66, %67 : vector<256x128xf32>
    %69 = vector.extract_strided_slice %60 {offsets = [0, 128], sizes = [256, 128], strides = [1, 1]} : vector<256x512xf32> to vector<256x128xf32>
    %cst_33 = arith.constant 5.000000e-01 : f32
    %70 = vector.broadcast %cst_33 : f32 to vector<256x128xf32>
    %71 = arith.mulf %70, %69 : vector<256x128xf32>
    %72 = math.tanh %71 : vector<256x128xf32>
    %cst_34 = arith.constant 5.000000e-01 : f32
    %73 = vector.broadcast %cst_34 : f32 to vector<256x128xf32>
    %74 = arith.mulf %73, %72 : vector<256x128xf32>
    %cst_35 = arith.constant 5.000000e-01 : f32
    %75 = vector.broadcast %cst_35 : f32 to vector<256x128xf32>
    %76 = arith.addf %74, %75 : vector<256x128xf32>
    %77 = vector.extract_strided_slice %60 {offsets = [0, 256], sizes = [256, 128], strides = [1, 1]} : vector<256x512xf32> to vector<256x128xf32>
    %78 = math.tanh %77 : vector<256x128xf32>
    %79 = vector.extract_strided_slice %60 {offsets = [0, 384], sizes = [256, 128], strides = [1, 1]} : vector<256x512xf32> to vector<256x128xf32>
    %cst_36 = arith.constant 5.000000e-01 : f32
    %80 = vector.broadcast %cst_36 : f32 to vector<256x128xf32>
    %81 = arith.mulf %80, %79 : vector<256x128xf32>
    %82 = math.tanh %81 : vector<256x128xf32>
    %cst_37 = arith.constant 5.000000e-01 : f32
    %83 = vector.broadcast %cst_37 : f32 to vector<256x128xf32>
    %84 = arith.mulf %83, %82 : vector<256x128xf32>
    %cst_38 = arith.constant 5.000000e-01 : f32
    %85 = vector.broadcast %cst_38 : f32 to vector<256x128xf32>
    %86 = arith.addf %84, %85 : vector<256x128xf32>
    %87 = arith.mulf %76, %9 : vector<256x128xf32>
    %88 = arith.mulf %68, %78 : vector<256x128xf32>
    %89 = arith.addf %87, %88 : vector<256x128xf32>
    %90 = math.tanh %89 : vector<256x128xf32>
    %91 = arith.mulf %86, %90 : vector<256x128xf32>
    %92 = tpu.concatenate %91, %89 in 1 : vector<256x128xf32>, vector<256x128xf32> -> vector<256x256xf32>
    %c0_39 = arith.constant 0 : index
    %c0_40 = arith.constant 0 : index
    %93 = vector.load %arg10[%c0_39, %c0_40] : memref<256x128xf32, #tpu.memory_space<vmem>>, vector<256x128xf32>
    %cst_41 = arith.constant dense<0.000000e+00> : vector<256x128xf32>
    %94 = tpu.matmul %92, %93, %cst_41 {dimension_numbers = #tpu.dot_dimension_numbers<[1], [0], [0], [1], [0, 0, 1, 1], [], []>} : vector<256x256xf32>, vector<256x128xf32>, vector<256x128xf32> -> vector<256x128xf32>
    %c0_42 = arith.constant 0 : index
    %c0_43 = arith.constant 0 : index
    %95 = vector.load %arg11[%c0_42, %c0_43] : memref<1x128xf32, #tpu.memory_space<vmem>>, vector<1x128xf32>
    %96 = vector.broadcast %95 : vector<1x128xf32> to vector<256x128xf32>
    %97 = arith.addf %94, %96 : vector<256x128xf32>
    %cst_44 = arith.constant 0.000000e+00 : f32
    %98 = vector.broadcast %cst_44 : f32 to vector<256x128xf32>
    %99 = arith.maximumf %97, %98 : vector<256x128xf32>
    %c0_45 = arith.constant 0 : index
    %c0_46 = arith.constant 0 : index
    %100 = vector.load %arg12[%c0_45, %c0_46] : memref<128x128xf32, #tpu.memory_space<vmem>>, vector<128x128xf32>
    %cst_47 = arith.constant dense<0.000000e+00> : vector<256x128xf32>
    %101 = tpu.matmul %99, %100, %cst_47 {dimension_numbers = #tpu.dot_dimension_numbers<[1], [0], [0], [1], [0, 0, 1, 1], [], []>} : vector<256x128xf32>, vector<128x128xf32>, vector<256x128xf32> -> vector<256x128xf32>
    %c0_48 = arith.constant 0 : index
    %c0_49 = arith.constant 0 : index
    %102 = vector.load %arg13[%c0_48, %c0_49] : memref<1x128xf32, #tpu.memory_space<vmem>>, vector<1x128xf32>
    %103 = vector.broadcast %102 : vector<1x128xf32> to vector<256x128xf32>
    %104 = arith.addf %101, %103 : vector<256x128xf32>
    %c0_50 = arith.constant 0 : index
    %c0_51 = arith.constant 0 : index
    %105 = vector.load %arg14[%c0_50, %c0_51] : memref<256x128xf32, #tpu.memory_space<vmem>>, vector<256x128xf32>
    tpu.vector_store %arg14[%c0_50, %c0_51], %104 {strides = array<i32>} : memref<256x128xf32, #tpu.memory_space<vmem>>, vector<256x128xf32>,
    return
  }
  func.func @transform_0(%arg0: i32) -> (i32, i32) {
    %c0_i32 = arith.constant 0 : i32
    %c0_i32_0 = arith.constant 0 : i32
    return %arg0, %c0_i32 : i32, i32
  }
  func.func @transform_1(%arg0: i32) -> (i32, i32) {
    %c0_i32 = arith.constant 0 : i32
    %c0_i32_0 = arith.constant 0 : i32
    return %arg0, %c0_i32 : i32, i32
  }
  func.func @transform_2(%arg0: i32) -> (i32, i32) {
    %c0_i32 = arith.constant 0 : i32
    %c0_i32_0 = arith.constant 0 : i32
    %c0_i32_1 = arith.constant 0 : i32
    return %c0_i32, %c0_i32_0 : i32, i32
  }
  func.func @transform_3(%arg0: i32) -> (i32, i32) {
    %c0_i32 = arith.constant 0 : i32
    %c0_i32_0 = arith.constant 0 : i32
    %c0_i32_1 = arith.constant 0 : i32
    return %c0_i32, %c0_i32_0 : i32, i32
  }
  func.func @transform_4(%arg0: i32) -> (i32, i32) {
    %c0_i32 = arith.constant 0 : i32
    %c0_i32_0 = arith.constant 0 : i32
    %c0_i32_1 = arith.constant 0 : i32
    return %c0_i32, %c0_i32_0 : i32, i32
  }
  func.func @transform_5(%arg0: i32) -> (i32, i32) {
    %c0_i32 = arith.constant 0 : i32
    %c0_i32_0 = arith.constant 0 : i32
    %c0_i32_1 = arith.constant 0 : i32
    return %c0_i32, %c0_i32_0 : i32, i32
  }
  func.func @transform_6(%arg0: i32) -> (i32, i32) {
    %c0_i32 = arith.constant 0 : i32
    %c0_i32_0 = arith.constant 0 : i32
    %c0_i32_1 = arith.constant 0 : i32
    return %c0_i32, %c0_i32_0 : i32, i32
  }
  func.func @transform_7(%arg0: i32) -> (i32, i32) {
    %c0_i32 = arith.constant 0 : i32
    %c0_i32_0 = arith.constant 0 : i32
    %c0_i32_1 = arith.constant 0 : i32
    return %c0_i32, %c0_i32_0 : i32, i32
  }
  func.func @transform_8(%arg0: i32) -> (i32, i32) {
    %c0_i32 = arith.constant 0 : i32
    %c0_i32_0 = arith.constant 0 : i32
    %c0_i32_1 = arith.constant 0 : i32
    return %c0_i32, %c0_i32_0 : i32, i32
  }
  func.func @transform_9(%arg0: i32) -> (i32, i32) {
    %c0_i32 = arith.constant 0 : i32
    %c0_i32_0 = arith.constant 0 : i32
    %c0_i32_1 = arith.constant 0 : i32
    return %c0_i32, %c0_i32_0 : i32, i32
  }
  func.func @transform_10(%arg0: i32) -> (i32, i32) {
    %c0_i32 = arith.constant 0 : i32
    %c0_i32_0 = arith.constant 0 : i32
    %c0_i32_1 = arith.constant 0 : i32
    return %c0_i32, %c0_i32_0 : i32, i32
  }
  func.func @transform_11(%arg0: i32) -> (i32, i32) {
    %c0_i32 = arith.constant 0 : i32
    %c0_i32_0 = arith.constant 0 : i32
    %c0_i32_1 = arith.constant 0 : i32
    return %c0_i32, %c0_i32_0 : i32, i32
  }
  func.func @transform_12(%arg0: i32) -> (i32, i32) {
    %c0_i32 = arith.constant 0 : i32
    %c0_i32_0 = arith.constant 0 : i32
    %c0_i32_1 = arith.constant 0 : i32
    return %c0_i32, %c0_i32_0 : i32, i32
  }
  func.func @transform_13(%arg0: i32) -> (i32, i32) {
    %c0_i32 = arith.constant 0 : i32
    %c0_i32_0 = arith.constant 0 : i32
    return %arg0, %c0_i32 : i32, i32
  }
}

</mosaic_0001>

<llo_original>
// kernel: tpu_custom_call.1
$region0: #{tpu_custom_call.1}
  #allocation0 [shape = 'u32[]', space=smem, size = 0x4, offset = 0x4, fixed_abs, tag = 'smem constant byte address 0x4 - core index']
  #allocation1 [shape = 'u32[144,128]{1,0:T(1,128)}', space=vmem, size = 0x12000, scoped, tag = 'internal scratch']
  %s0 = inlined_call_operand.vmem [shape: f32[512,32], index: 0, kind: input, shape index: {}]
  %s1 = inlined_call_operand.vmem [shape: f32[512,32], index: 1, kind: input, shape index: {}]
  %s2 = inlined_call_operand.vmem [shape: f32[1,128], index: 2, kind: input, shape index: {}]
  %s3 = inlined_call_operand.hbm [shape: f32[32,128], index: 3, kind: input, shape index: {}]
  %s4 = inlined_call_operand.vmem [shape: f32[1,128], index: 4, kind: input, shape index: {}]
  %s5 = inlined_call_operand.vmem [shape: f32[256,512], index: 5, kind: input, shape index: {}]
  %s6 = inlined_call_operand.vmem [shape: f32[1,512], index: 6, kind: input, shape index: {}]
  %s7 = inlined_call_operand.hbm [shape: f32[256,512], index: 7, kind: input, shape index: {}]
  %s8 = inlined_call_operand.vmem [shape: f32[1,512], index: 8, kind: input, shape index: {}]
  %s9 = inlined_call_operand.vmem [shape: f32[256,128], index: 9, kind: input, shape index: {}]
  %s10 = inlined_call_operand.vmem [shape: f32[1,128], index: 10, kind: input, shape index: {}]
  %s11 = inlined_call_operand.hbm [shape: f32[128,128], index: 11, kind: input, shape index: {}]
  %s12 = inlined_call_operand.vmem [shape: f32[1,128], index: 12, kind: input, shape index: {}]
  %s13 = inlined_call_operand.hbm [shape: f32[512,128], index: 13, kind: output, shape index: {}]
  %s14 = sld [smem:[#allocation0]]
  $region97: #{tpu_custom_call.1} parent=0
    _
  %s16 = ssub.s32 1, %s14
  %s17 = scalar_select 0, %s16, %s14
  $region1: #{tpu_custom_call.1} parent=0
    #allocation2 [shape = 'u8[16384]{0}', space=vmem, size = 0x4000, scoped, tag = 'input window, operand 3, single buffered']
    #allocation3 [shape = 's32[2]{0}', space=sflag, size = 0x8, scoped, tag = 'scoped memory for tpu_custom_call.1']
    #allocation4 [shape = 's32[2]{0}', space=sflag, size = 0x8, scoped, tag = 'scoped memory for tpu_custom_call.1']
    #allocation5 [shape = 'u8[524288]{0}', space=vmem, size = 0x80000, scoped, tag = 'input window, operand 7, single buffered']
    #allocation6 [shape = 's32[1]{0}', space=sflag, size = 0x4, scoped, tag = 'scoped memory for tpu_custom_call.1']
    #allocation7 [shape = 'u8[65536]{0}', space=vmem, size = 0x10000, scoped, tag = 'input window, operand 11, single buffered']
    #allocation8 [shape = 'u8[262144]{0}', space=vmem, size = 0x40000, scoped, tag = 'output window, operand 0']
    %18 = vsyncpa [#allocation3], 0
    %19 = vsyncpa [#allocation6], 0
    %20 = vsyncpa [#allocation4], 0
    %s21 = scalar_lea.sflag [#allocation4], 1
    %22 = vsyncpa %s21, 0
    loop: start=0, step=1, limit=4
    $region2: #{tpu_custom_call.1} parent=1 // loop_pre_header
      _
    $region3: #{tpu_custom_call.1} parent=1 // loop_header
      %s24 = sphi 0, %s28
      %p25 = scmp.ge.s32.totalorder %s24, 4
      %s34 = sphi 0, %s36
      %s37 = sphi 0, %s34
      %s38 = sphi 0, %s37
      %s54 = sphi 0, %s38
      %s60 = sphi 0, %s62
      %s63 = sphi 0, %s60
      %s64 = sphi 0, %s63
      %s80 = sphi 0, %s64
      %s84 = sphi 0, %s84
      %s86 = sphi 0, %s84
      %s87 = sphi 0, %s86
      %s101 = sphi 0, %s87
      %s105 = sphi 0, %s105
      %s107 = sphi 0, %s105
      %s108 = sphi 0, %s107
      %s122 = sphi 0, %s108
      %s126 = sphi 0, %s126
      %s128 = sphi 0, %s126
      %s129 = sphi 0, %s128
      %s143 = sphi 0, %s129
      %s147 = sphi 0, %s147
      %s149 = sphi 0, %s147
      %s150 = sphi 0, %s149
      %s164 = sphi 0, %s150
      %s168 = sphi 0, %s168
      %s170 = sphi 0, %s168
      %s171 = sphi 0, %s170
      %s185 = sphi 0, %s171
      %s189 = sphi 0, %s189
      %s191 = sphi 0, %s189
      %s192 = sphi 0, %s191
      %s206 = sphi 0, %s192
      %s210 = sphi 0, %s210
      %s212 = sphi 0, %s210
      %s213 = sphi 0, %s212
      %s227 = sphi 0, %s213
      %s231 = sphi 0, %s231
      %s233 = sphi 0, %s231
      %s234 = sphi 0, %s233
      %s248 = sphi 0, %s234
      %s252 = sphi 0, %s252
      %s254 = sphi 0, %s252
      %s255 = sphi 0, %s254
      %s269 = sphi 0, %s255
      %s273 = sphi 0, %s273
      %s275 = sphi 0, %s273
      %s276 = sphi 0, %s275
      %s290 = sphi 0, %s276
      %s294 = sphi 0, %s294
      %s296 = sphi 0, %s294
      %s297 = sphi 0, %s296
      %s311 = sphi 0, %s297
      %s317 = sphi 0, %s319
      %s320 = sphi 0, %s317
      %s321 = sphi 0, %s320
      %s337 = sphi 0, %s321
    $region4: #{tpu_custom_call.1} parent=1 // loop_header_branch
      %27 = sbr.rel (%p25) target = $region8
    $region5: #{tpu_custom_call.1} parent=1 // loop_body
      %s29 = ssub.s32 %s24, 1
      %s30 = ssub.s32 %s24, 2
      %s31 = sadd.s32 %s24, 1
      %s32 = ssub.s32 %s24, %s31
      %p33 = scmp.eq.s32.totalorder %s32, 0
      %s35 = sadd.s32 %s34, 1
      %s36 = scalar_select %p33, %s34, %s35
      %p39 = pneg %p33
      %p40 = scmp.eq.s32.totalorder %s24, 1
      %p41 = por %p39, %p40
      %p42 = scmp.ne.s32.totalorder %s34, %s37
      %p43 = scmp.eq.s32.totalorder %s24, 0
      %p44 = por %p42, %p43
      %p45 = scmp.ne.s32.totalorder %s34, %s37
      %p46 = scmp.eq.s32.totalorder %s29, 1
      %p47 = por %p45, %p46
      %p48 = scmp.ne.s32.totalorder %s37, %s38
      %p49 = scmp.eq.s32.totalorder %s29, 0
      %p50 = por %p48, %p49
      %p51 = scmp.ne.s32.totalorder %s37, %s38
      %p52 = scmp.eq.s32.totalorder %s30, 1
      %p53 = por %p51, %p52
      %p55 = scmp.ne.s32.totalorder %s38, %s54
      %p56 = scmp.eq.s32.totalorder %s30, 0
      %p57 = por %p55, %p56
      %s58 = ssub.s32 %s24, %s31
      %p59 = scmp.eq.s32.totalorder %s58, 0
      %s61 = sadd.s32 %s60, 1
      %s62 = scalar_select %p59, %s60, %s61
      %p65 = pneg %p59
      %p66 = scmp.eq.s32.totalorder %s24, 1
      %p67 = por %p65, %p66
      %p68 = scmp.ne.s32.totalorder %s60, %s63
      %p69 = scmp.eq.s32.totalorder %s24, 0
      %p70 = por %p68, %p69
      %p71 = scmp.ne.s32.totalorder %s60, %s63
      %p72 = scmp.eq.s32.totalorder %s29, 1
      %p73 = por %p71, %p72
      %p74 = scmp.ne.s32.totalorder %s63, %s64
      %p75 = scmp.eq.s32.totalorder %s29, 0
      %p76 = por %p74, %p75
      %p77 = scmp.ne.s32.totalorder %s63, %s64
      %p78 = scmp.eq.s32.totalorder %s30, 1
      %p79 = por %p77, %p78
      %p81 = scmp.ne.s32.totalorder %s64, %s80
      %p82 = scmp.eq.s32.totalorder %s30, 0
      %p83 = por %p81, %p82
      %s85 = sadd.s32 %s84, 1
      %p88 = scmp.eq.s32.totalorder %s24, 1
      %p89 = scmp.ne.s32.totalorder %s84, %s86
      %p90 = scmp.eq.s32.totalorder %s24, 0
      %p91 = por %p89, %p90
      %p92 = scmp.ne.s32.totalorder %s84, %s86
      %p93 = scmp.eq.s32.totalorder %s29, 1
      %p94 = por %p92, %p93
      %p95 = scmp.ne.s32.totalorder %s86, %s87
      %p96 = scmp.eq.s32.totalorder %s29, 0
      %p97 = por %p95, %p96
      %p98 = scmp.ne.s32.totalorder %s86, %s87
      %p99 = scmp.eq.s32.totalorder %s30, 1
      %p100 = por %p98, %p99
      %p102 = scmp.ne.s32.totalorder %s87, %s101
      %p103 = scmp.eq.s32.totalorder %s30, 0
      %p104 = por %p102, %p103
      %s106 = sadd.s32 %s105, 1
      %p109 = scmp.eq.s32.totalorder %s24, 1
      %p110 = scmp.ne.s32.totalorder %s105, %s107
      %p111 = scmp.eq.s32.totalorder %s24, 0
      %p112 = por %p110, %p111
      %p113 = scmp.ne.s32.totalorder %s105, %s107
      %p114 = scmp.eq.s32.totalorder %s29, 1
      %p115 = por %p113, %p114
      %p116 = scmp.ne.s32.totalorder %s107, %s108
      %p117 = scmp.eq.s32.totalorder %s29, 0
      %p118 = por %p116, %p117
      %p119 = scmp.ne.s32.totalorder %s107, %s108
      %p120 = scmp.eq.s32.totalorder %s30, 1
      %p121 = por %p119, %p120
      %p123 = scmp.ne.s32.totalorder %s108, %s122
      %p124 = scmp.eq.s32.totalorder %s30, 0
      %p125 = por %p123, %p124
      %s127 = sadd.s32 %s126, 1
      %p130 = scmp.eq.s32.totalorder %s24, 1
      %p131 = scmp.ne.s32.totalorder %s126, %s128
      %p132 = scmp.eq.s32.totalorder %s24, 0
      %p133 = por %p131, %p132
      %p134 = scmp.ne.s32.totalorder %s126, %s128
      %p135 = scmp.eq.s32.totalorder %s29, 1
      %p136 = por %p134, %p135
      %p137 = scmp.ne.s32.totalorder %s128, %s129
      %p138 = scmp.eq.s32.totalorder %s29, 0
      %p139 = por %p137, %p138
      %p140 = scmp.ne.s32.totalorder %s128, %s129
      %p141 = scmp.eq.s32.totalorder %s30, 1
      %p142 = por %p140, %p141
      %p144 = scmp.ne.s32.totalorder %s129, %s143
      %p145 = scmp.eq.s32.totalorder %s30, 0
      %p146 = por %p144, %p145
      %s148 = sadd.s32 %s147, 1
      %p151 = scmp.eq.s32.totalorder %s24, 1
      %p152 = scmp.ne.s32.totalorder %s147, %s149
      %p153 = scmp.eq.s32.totalorder %s24, 0
      %p154 = por %p152, %p153
      %p155 = scmp.ne.s32.totalorder %s147, %s149
      %p156 = scmp.eq.s32.totalorder %s29, 1
      %p157 = por %p155, %p156
      %p158 = scmp.ne.s32.totalorder %s149, %s150
      %p159 = scmp.eq.s32.totalorder %s29, 0
      %p160 = por %p158, %p159
      %p161 = scmp.ne.s32.totalorder %s149, %s150
      %p162 = scmp.eq.s32.totalorder %s30, 1
      %p163 = por %p161, %p162
      %p165 = scmp.ne.s32.totalorder %s150, %s164
      %p166 = scmp.eq.s32.totalorder %s30, 0
      %p167 = por %p165, %p166
      %s169 = sadd.s32 %s168, 1
      %p172 = scmp.eq.s32.totalorder %s24, 1
      %p173 = scmp.ne.s32.totalorder %s168, %s170
      %p174 = scmp.eq.s32.totalorder %s24, 0
      %p175 = por %p173, %p174
      %p176 = scmp.ne.s32.totalorder %s168, %s170
      %p177 = scmp.eq.s32.totalorder %s29, 1
      %p178 = por %p176, %p177
      %p179 = scmp.ne.s32.totalorder %s170, %s171
      %p180 = scmp.eq.s32.totalorder %s29, 0
      %p181 = por %p179, %p180
      %p182 = scmp.ne.s32.totalorder %s170, %s171
      %p183 = scmp.eq.s32.totalorder %s30, 1
      %p184 = por %p182, %p183
      %p186 = scmp.ne.s32.totalorder %s171, %s185
      %p187 = scmp.eq.s32.totalorder %s30, 0
      %p188 = por %p186, %p187
      %s190 = sadd.s32 %s189, 1
      %p193 = scmp.eq.s32.totalorder %s24, 1
      %p194 = scmp.ne.s32.totalorder %s189, %s191
      %p195 = scmp.eq.s32.totalorder %s24, 0
      %p196 = por %p194, %p195
      %p197 = scmp.ne.s32.totalorder %s189, %s191
      %p198 = scmp.eq.s32.totalorder %s29, 1
      %p199 = por %p197, %p198
      %p200 = scmp.ne.s32.totalorder %s191, %s192
      %p201 = scmp.eq.s32.totalorder %s29, 0
      %p202 = por %p200, %p201
      %p203 = scmp.ne.s32.totalorder %s191, %s192
      %p204 = scmp.eq.s32.totalorder %s30, 1
      %p205 = por %p203, %p204
      %p207 = scmp.ne.s32.totalorder %s192, %s206
      %p208 = scmp.eq.s32.totalorder %s30, 0
      %p209 = por %p207, %p208
      %s211 = sadd.s32 %s210, 1
      %p214 = scmp.eq.s32.totalorder %s24, 1
      %p215 = scmp.ne.s32.totalorder %s210, %s212
      %p216 = scmp.eq.s32.totalorder %s24, 0
      %p217 = por %p215, %p216
      %p218 = scmp.ne.s32.totalorder %s210, %s212
      %p219 = scmp.eq.s32.totalorder %s29, 1
      %p220 = por %p218, %p219
      %p221 = scmp.ne.s32.totalorder %s212, %s213
      %p222 = scmp.eq.s32.totalorder %s29, 0
      %p223 = por %p221, %p222
      %p224 = scmp.ne.s32.totalorder %s212, %s213
      %p225 = scmp.eq.s32.totalorder %s30, 1
      %p226 = por %p224, %p225
      %p228 = scmp.ne.s32.totalorder %s213, %s227
      %p229 = scmp.eq.s32.totalorder %s30, 0
      %p230 = por %p228, %p229
      %s232 = sadd.s32 %s231, 1
      %p235 = scmp.eq.s32.totalorder %s24, 1
      %p236 = scmp.ne.s32.totalorder %s231, %s233
      %p237 = scmp.eq.s32.totalorder %s24, 0
      %p238 = por %p236, %p237
      %p239 = scmp.ne.s32.totalorder %s231, %s233
      %p240 = scmp.eq.s32.totalorder %s29, 1
      %p241 = por %p239, %p240
      %p242 = scmp.ne.s32.totalorder %s233, %s234
      %p243 = scmp.eq.s32.totalorder %s29, 0
      %p244 = por %p242, %p243
      %p245 = scmp.ne.s32.totalorder %s233, %s234
      %p246 = scmp.eq.s32.totalorder %s30, 1
      %p247 = por %p245, %p246
      %p249 = scmp.ne.s32.totalorder %s234, %s248
      %p250 = scmp.eq.s32.totalorder %s30, 0
      %p251 = por %p249, %p250
      %s253 = sadd.s32 %s252, 1
      %p256 = scmp.eq.s32.totalorder %s24, 1
      %p257 = scmp.ne.s32.totalorder %s252, %s254
      %p258 = scmp.eq.s32.totalorder %s24, 0
      %p259 = por %p257, %p258
      %p260 = scmp.ne.s32.totalorder %s252, %s254
      %p261 = scmp.eq.s32.totalorder %s29, 1
      %p262 = por %p260, %p261
      %p263 = scmp.ne.s32.totalorder %s254, %s255
      %p264 = scmp.eq.s32.totalorder %s29, 0
      %p265 = por %p263, %p264
      %p266 = scmp.ne.s32.totalorder %s254, %s255
      %p267 = scmp.eq.s32.totalorder %s30, 1
      %p268 = por %p266, %p267
      %p270 = scmp.ne.s32.totalorder %s255, %s269
      %p271 = scmp.eq.s32.totalorder %s30, 0
      %p272 = por %p270, %p271
      %s274 = sadd.s32 %s273, 1
      %p277 = scmp.eq.s32.totalorder %s24, 1
      %p278 = scmp.ne.s32.totalorder %s273, %s275
      %p279 = scmp.eq.s32.totalorder %s24, 0
      %p280 = por %p278, %p279
      %p281 = scmp.ne.s32.totalorder %s273, %s275
      %p282 = scmp.eq.s32.totalorder %s29, 1
      %p283 = por %p281, %p282
      %p284 = scmp.ne.s32.totalorder %s275, %s276
      %p285 = scmp.eq.s32.totalorder %s29, 0
      %p286 = por %p284, %p285
      %p287 = scmp.ne.s32.totalorder %s275, %s276
      %p288 = scmp.eq.s32.totalorder %s30, 1
      %p289 = por %p287, %p288
      %p291 = scmp.ne.s32.totalorder %s276, %s290
      %p292 = scmp.eq.s32.totalorder %s30, 0
      %p293 = por %p291, %p292
      %s295 = sadd.s32 %s294, 1
      %p298 = scmp.eq.s32.totalorder %s24, 1
      %p299 = scmp.ne.s32.totalorder %s294, %s296
      %p300 = scmp.eq.s32.totalorder %s24, 0
      %p301 = por %p299, %p300
      %p302 = scmp.ne.s32.totalorder %s294, %s296
      %p303 = scmp.eq.s32.totalorder %s29, 1
      %p304 = por %p302, %p303
      %p305 = scmp.ne.s32.totalorder %s296, %s297
      %p306 = scmp.eq.s32.totalorder %s29, 0
      %p307 = por %p305, %p306
      %p308 = scmp.ne.s32.totalorder %s296, %s297
      %p309 = scmp.eq.s32.totalorder %s30, 1
      %p310 = por %p308, %p309
      %p312 = scmp.ne.s32.totalorder %s297, %s311
      %p313 = scmp.eq.s32.totalorder %s30, 0
      %p314 = por %p312, %p313
      %s315 = ssub.s32 %s24, %s31
      %p316 = scmp.eq.s32.totalorder %s315, 0
      %s318 = sadd.s32 %s317, 1
      %s319 = scalar_select %p316, %s317, %s318
      %p322 = pneg %p316
      %p323 = scmp.eq.s32.totalorder %s24, 1
      %p324 = por %p322, %p323
      %p325 = scmp.ne.s32.totalorder %s317, %s320
      %p326 = scmp.eq.s32.totalorder %s24, 0
      %p327 = por %p325, %p326
      %p328 = scmp.ne.s32.totalorder %s317, %s320
      %p329 = scmp.eq.s32.totalorder %s29, 1
      %p330 = por %p328, %p329
      %p331 = scmp.ne.s32.totalorder %s320, %s321
      %p332 = scmp.eq.s32.totalorder %s29, 0
      %p333 = por %p331, %p332
      %p334 = scmp.ne.s32.totalorder %s320, %s321
      %p335 = scmp.eq.s32.totalorder %s30, 1
      %p336 = por %p334, %p335
      %p338 = scmp.ne.s32.totalorder %s321, %s337
      %p339 = scmp.eq.s32.totalorder %s30, 0
      %p340 = por %p338, %p339
      %p341 = scmp.le.s32.totalorder 1, %s24
      %p342 = scmp.lt.s32.totalorder %s24, 3
      %p343 = pnand %p341, %p342
      %p344 = pneg %p343
      // Predicated region
      $region9: #{tpu_custom_call.1} parent=5 // pred_check
        _
      $region10: #{tpu_custom_call.1} parent=5 // pred_check_branch
        %346 = sbr.rel (%p343) target = $region12
      $region11: #{tpu_custom_call.1} parent=5 // pred_region
        %s347 = ssub.s32 %s24, 1
        // Predicated region
        $region13: #{tpu_custom_call.1} parent=11 // pred_check
          %p348 = pneg %p97
        $region14: #{tpu_custom_call.1} parent=11 // pred_check_branch
          %350 = sbr.rel (%p348) target = $region16
        $region15: #{tpu_custom_call.1} parent=11 // pred_region
          _
        $region16: #{tpu_custom_call.1} parent=11 // pred_fallthru
          _
        // Predicated region
        $region17: #{tpu_custom_call.1} parent=11 // pred_check
          %p351 = pneg %p118
        $region18: #{tpu_custom_call.1} parent=11 // pred_check_branch
          %353 = sbr.rel (%p351) target = $region20
        $region19: #{tpu_custom_call.1} parent=11 // pred_region
          %s355 = ssub.s32 512, 512
          %356 = vsyncadd [#allocation3], %s355
          %s357 = sshll.u32 [#allocation2], 4
          %s358 = int_to_ptr.vmem [resolvable:$true] %s357
          %363 = dma.hbm_to_vmem [thread:$0]  %s3, 512, %s358, [#allocation3], 128, 128, 8
        $region20: #{tpu_custom_call.1} parent=11 // pred_fallthru
          _
        // Predicated region
        $region21: #{tpu_custom_call.1} parent=11 // pred_check
          %p364 = pneg %p139
        $region22: #{tpu_custom_call.1} parent=11 // pred_check_branch
          %366 = sbr.rel (%p364) target = $region24
        $region23: #{tpu_custom_call.1} parent=11 // pred_region
          _
        $region24: #{tpu_custom_call.1} parent=11 // pred_fallthru
          _
        // Predicated region
        $region25: #{tpu_custom_call.1} parent=11 // pred_check
          %p367 = pneg %p160
        $region26: #{tpu_custom_call.1} parent=11 // pred_check_branch
          %369 = sbr.rel (%p367) target = $region28
        $region27: #{tpu_custom_call.1} parent=11 // pred_region
          _
        $region28: #{tpu_custom_call.1} parent=11 // pred_fallthru
          _
        // Predicated region
        $region29: #{tpu_custom_call.1} parent=11 // pred_check
          %p370 = pneg %p181
        $region30: #{tpu_custom_call.1} parent=11 // pred_check_branch
          %372 = sbr.rel (%p370) target = $region32
        $region31: #{tpu_custom_call.1} parent=11 // pred_region
          _
        $region32: #{tpu_custom_call.1} parent=11 // pred_fallthru
          _
        // Predicated region
        $region33: #{tpu_custom_call.1} parent=11 // pred_check
          %p373 = pneg %p202
        $region34: #{tpu_custom_call.1} parent=11 // pred_check_branch
          %375 = sbr.rel (%p373) target = $region36
        $region35: #{tpu_custom_call.1} parent=11 // pred_region
          %s377 = ssub.s32 16384, 16384
          %378 = vsyncadd [#allocation6], %s377
          %s379 = sshll.u32 [#allocation5], 4
          %s380 = int_to_ptr.vmem [resolvable:$true] %s379
          %385 = dma.hbm_to_vmem [thread:$0]  %s7, 16384, %s380, [#allocation6], 512, 512, 32
        $region36: #{tpu_custom_call.1} parent=11 // pred_fallthru
          _
        // Predicated region
        $region37: #{tpu_custom_call.1} parent=11 // pred_check
          %p386 = pneg %p223
        $region38: #{tpu_custom_call.1} parent=11 // pred_check_branch
          %388 = sbr.rel (%p386) target = $region40
        $region39: #{tpu_custom_call.1} parent=11 // pred_region
          _
        $region40: #{tpu_custom_call.1} parent=11 // pred_fallthru
          _
        // Predicated region
        $region41: #{tpu_custom_call.1} parent=11 // pred_check
          %p389 = pneg %p244
        $region42: #{tpu_custom_call.1} parent=11 // pred_check_branch
          %391 = sbr.rel (%p389) target = $region44
        $region43: #{tpu_custom_call.1} parent=11 // pred_region
          _
        $region44: #{tpu_custom_call.1} parent=11 // pred_fallthru
          _
        // Predicated region
        $region45: #{tpu_custom_call.1} parent=11 // pred_check
          %p392 = pneg %p265
        $region46: #{tpu_custom_call.1} parent=11 // pred_check_branch
          %394 = sbr.rel (%p392) target = $region48
        $region47: #{tpu_custom_call.1} parent=11 // pred_region
          _
        $region48: #{tpu_custom_call.1} parent=11 // pred_fallthru
          _
        // Predicated region
        $region49: #{tpu_custom_call.1} parent=11 // pred_check
          %p395 = pneg %p286
        $region50: #{tpu_custom_call.1} parent=11 // pred_check_branch
          %397 = sbr.rel (%p395) target = $region52
        $region51: #{tpu_custom_call.1} parent=11 // pred_region
          %s399 = ssub.s32 2048, 2048
          %400 = vsyncadd [#allocation6], %s399
          %s401 = sshll.u32 [#allocation7], 4
          %s402 = int_to_ptr.vmem [resolvable:$true] %s401
          %407 = dma.hbm_to_vmem [thread:$0]  %s11, 2048, %s402, [#allocation6], 128, 128, 8
        $region52: #{tpu_custom_call.1} parent=11 // pred_fallthru
          _
        // Predicated region
        $region53: #{tpu_custom_call.1} parent=11 // pred_check
          %p408 = pneg %p307
        $region54: #{tpu_custom_call.1} parent=11 // pred_check_branch
          %410 = sbr.rel (%p408) target = $region56
        $region55: #{tpu_custom_call.1} parent=11 // pred_region
          _
        $region56: #{tpu_custom_call.1} parent=11 // pred_fallthru
          _
      $region12: #{tpu_custom_call.1} parent=5 // pred_fallthru
        _
      %p411 = scmp.lt.s32.totalorder %s24, 2
      // Predicated region
      $region57: #{tpu_custom_call.1} parent=5 // pred_check
        %p412 = pneg %p411
      $region58: #{tpu_custom_call.1} parent=5 // pred_check_branch
        %414 = sbr.rel (%p412) target = $region60
      $region59: #{tpu_custom_call.1} parent=5 // pred_region
        // Predicated region
        $region61: #{tpu_custom_call.1} parent=59 // pred_check
          %p415 = pneg %p44
        $region62: #{tpu_custom_call.1} parent=59 // pred_check_branch
          %417 = sbr.rel (%p415) target = $region64
        $region63: #{tpu_custom_call.1} parent=59 // pred_region
          %s418 = smul.u32 32, %s24
          %p419 = scmp.lt.s32.totalorder %s418, 63
          %s420 = scalar_select %p419, %s418, 63
          %s421 = smul.addr %s420, 8
          %s422 = scalar_lea.vmem %s0, %s421
          %s423 = smul.u32 32, %s24
        $region64: #{tpu_custom_call.1} parent=59 // pred_fallthru
          _
        // Predicated region
        $region65: #{tpu_custom_call.1} parent=59 // pred_check
          %p424 = pneg %p70
        $region66: #{tpu_custom_call.1} parent=59 // pred_check_branch
          %426 = sbr.rel (%p424) target = $region68
        $region67: #{tpu_custom_call.1} parent=59 // pred_region
          %s427 = smul.u32 32, %s24
          %p428 = scmp.lt.s32.totalorder %s427, 63
          %s429 = scalar_select %p428, %s427, 63
          %s430 = smul.addr %s429, 8
          %s431 = scalar_lea.vmem %s1, %s430
          %s432 = smul.u32 32, %s24
        $region68: #{tpu_custom_call.1} parent=59 // pred_fallthru
          _
      $region60: #{tpu_custom_call.1} parent=5 // pred_fallthru
        _
      %p433 = scmp.le.s32.totalorder 1, %s24
      %p434 = scmp.lt.s32.totalorder %s24, 3
      %p435 = pnand %p433, %p434
      %p436 = pneg %p435
      // Predicated region
      $region69: #{tpu_custom_call.1} parent=5 // pred_check
        _
      $region70: #{tpu_custom_call.1} parent=5 // pred_check_branch
        %438 = sbr.rel (%p435) target = $region72
      $region71: #{tpu_custom_call.1} parent=5 // pred_region
        %s439 = ssub.s32 %s24, 1
        // Predicated region
        $region73: #{tpu_custom_call.1} parent=71 // pred_check
          %p440 = pneg %p118
        $region74: #{tpu_custom_call.1} parent=71 // pred_check_branch
          %442 = sbr.rel (%p440) target = $region76
        $region75: #{tpu_custom_call.1} parent=71 // pred_region
          %443 = dma.done [#allocation3], 512
        $region76: #{tpu_custom_call.1} parent=71 // pred_fallthru
          _
        // Predicated region
        $region77: #{tpu_custom_call.1} parent=71 // pred_check
          %p444 = pneg %p202
        $region78: #{tpu_custom_call.1} parent=71 // pred_check_branch
          %446 = sbr.rel (%p444) target = $region80
        $region79: #{tpu_custom_call.1} parent=71 // pred_region
          %447 = dma.done [#allocation6], 16384
        $region80: #{tpu_custom_call.1} parent=71 // pred_fallthru
          _
        // Predicated region
        $region81: #{tpu_custom_call.1} parent=71 // pred_check
          %p448 = pneg %p286
        $region82: #{tpu_custom_call.1} parent=71 // pred_check_branch
          %450 = sbr.rel (%p448) target = $region84
        $region83: #{tpu_custom_call.1} parent=71 // pred_region
          %451 = dma.done [#allocation6], 2048
        $region84: #{tpu_custom_call.1} parent=71 // pred_fallthru
          _
        %s452 = smul.u32 32, %s29
        %p453 = scmp.lt.s32.totalorder %s452, 63
        %s454 = scalar_select %p453, %s452, 63
        %s455 = smul.addr %s454, 8
        %s456 = scalar_lea.vmem %s0, %s455
        %p457 = pneg %p50
        %p458 = pneg %p47
        %s459 = smul.u32 32, %s29
        %p460 = scmp.lt.s32.totalorder %s459, 63
        %s461 = scalar_select %p460, %s459, 63
        %s462 = smul.addr %s461, 8
        %s463 = scalar_lea.vmem %s1, %s462
        %p464 = pneg %p76
        %p465 = pneg %p73
        %p466 = pneg %p97
        %p467 = pneg %p94
        %p468 = pneg %p118
        %p469 = pneg %p115
        %p470 = pneg %p139
        %p471 = pneg %p136
        %p472 = pneg %p160
        %p473 = pneg %p157
        %p474 = pneg %p181
        %p475 = pneg %p178
        %p476 = pneg %p202
        %p477 = pneg %p199
        %p478 = pneg %p223
        %p479 = pneg %p220
        %p480 = pneg %p244
        %p481 = pneg %p241
        %p482 = pneg %p265
        %p483 = pneg %p262
        %p484 = pneg %p286
        %p485 = pneg %p283
        %p486 = pneg %p307
        %p487 = pneg %p304
        %p488 = pneg %p333
        %p489 = pneg %p330
        %s490 = sand.u32 %s320, 1
        %s491 = scalar_lea.sflag [#allocation4], %s490
        %s492 = sand.u32 %s320, 1
        %s493 = smul.addr %s492, 256
        %s494 = scalar_lea.vmem [#allocation8], %s493
        %s495 = smul.u32 32, %s29
        %p496 = scmp.lt.s32.totalorder %s495, 63
        %s497 = scalar_select %p496, %s495, 63
        %s498 = smul.addr %s497, 8
        %s499 = scalar_lea.vmem %s0, %s498
        %s500 = smul.u32 32, %s29
        %s501 = smul.u32 32, %s29
        %p502 = scmp.lt.s32.totalorder %s501, 63
        %s503 = scalar_select %p502, %s501, 63
        %s504 = smul.addr %s503, 8
        %s505 = scalar_lea.vmem %s1, %s504
        %s506 = smul.u32 32, %s29
        %s507 = smul.u32 32, %s29
        %v508 = vld [vmem:[%s499] sm:$0xff]
        %v509 = vld [vmem:[%s499 + $0x8] sm:$0xff]
        %v510 = vld [vmem:[%s499 + $0x10] sm:$0xff]
        %v511 = vld [vmem:[%s499 + $0x18] sm:$0xff]
        %v512 = vld [vmem:[%s499 + $0x20] sm:$0xff]
        %v513 = vld [vmem:[%s499 + $0x28] sm:$0xff]
        %v514 = vld [vmem:[%s499 + $0x30] sm:$0xff]
        %v515 = vld [vmem:[%s499 + $0x38] sm:$0xff]
        %v516 = vld [vmem:[%s499 + $0x40] sm:$0xff]
        %v517 = vld [vmem:[%s499 + $0x48] sm:$0xff]
        %v518 = vld [vmem:[%s499 + $0x50] sm:$0xff]
        %v519 = vld [vmem:[%s499 + $0x58] sm:$0xff]
        %v520 = vld [vmem:[%s499 + $0x60] sm:$0xff]
        %v521 = vld [vmem:[%s499 + $0x68] sm:$0xff]
        %v522 = vld [vmem:[%s499 + $0x70] sm:$0xff]
        %v523 = vld [vmem:[%s499 + $0x78] sm:$0xff]
        %v524 = vld [vmem:[%s499 + $0x80] sm:$0xff]
        %v525 = vld [vmem:[%s499 + $0x88] sm:$0xff]
        %v526 = vld [vmem:[%s499 + $0x90] sm:$0xff]
        %v527 = vld [vmem:[%s499 + $0x98] sm:$0xff]
        %v528 = vld [vmem:[%s499 + $0xa0] sm:$0xff]
        %v529 = vld [vmem:[%s499 + $0xa8] sm:$0xff]
        %v530 = vld [vmem:[%s499 + $0xb0] sm:$0xff]
        %v531 = vld [vmem:[%s499 + $0xb8] sm:$0xff]
        %v532 = vld [vmem:[%s499 + $0xc0] sm:$0xff]
        %v533 = vld [vmem:[%s499 + $0xc8] sm:$0xff]
        %v534 = vld [vmem:[%s499 + $0xd0] sm:$0xff]
        %v535 = vld [vmem:[%s499 + $0xd8] sm:$0xff]
        %v536 = vld [vmem:[%s499 + $0xe0] sm:$0xff]
        %v537 = vld [vmem:[%s499 + $0xe8] sm:$0xff]
        %v538 = vld [vmem:[%s499 + $0xf0] sm:$0xff]
        %v539 = vld [vmem:[%s499 + $0xf8] sm:$0xff]
        %v540 = vld [vmem:[%s505] sm:$0xff]
        %v541 = vld [vmem:[%s505 + $0x8] sm:$0xff]
        %v542 = vld [vmem:[%s505 + $0x10] sm:$0xff]
        %v543 = vld [vmem:[%s505 + $0x18] sm:$0xff]
        %v544 = vld [vmem:[%s505 + $0x20] sm:$0xff]
        %v545 = vld [vmem:[%s505 + $0x28] sm:$0xff]
        %v546 = vld [vmem:[%s505 + $0x30] sm:$0xff]
        %v547 = vld [vmem:[%s505 + $0x38] sm:$0xff]
        %v548 = vld [vmem:[%s505 + $0x40] sm:$0xff]
        %v549 = vld [vmem:[%s505 + $0x48] sm:$0xff]
        %v550 = vld [vmem:[%s505 + $0x50] sm:$0xff]
        %v551 = vld [vmem:[%s505 + $0x58] sm:$0xff]
        %v552 = vld [vmem:[%s505 + $0x60] sm:$0xff]
        %v553 = vld [vmem:[%s505 + $0x68] sm:$0xff]
        %v554 = vld [vmem:[%s505 + $0x70] sm:$0xff]
        %v555 = vld [vmem:[%s505 + $0x78] sm:$0xff]
        %v556 = vld [vmem:[%s505 + $0x80] sm:$0xff]
        %v557 = vld [vmem:[%s505 + $0x88] sm:$0xff]
        %v558 = vld [vmem:[%s505 + $0x90] sm:$0xff]
        %v559 = vld [vmem:[%s505 + $0x98] sm:$0xff]
        %v560 = vld [vmem:[%s505 + $0xa0] sm:$0xff]
        %v561 = vld [vmem:[%s505 + $0xa8] sm:$0xff]
        %v562 = vld [vmem:[%s505 + $0xb0] sm:$0xff]
        %v563 = vld [vmem:[%s505 + $0xb8] sm:$0xff]
        %v564 = vld [vmem:[%s505 + $0xc0] sm:$0xff]
        %v565 = vld [vmem:[%s505 + $0xc8] sm:$0xff]
        %v566 = vld [vmem:[%s505 + $0xd0] sm:$0xff]
        %v567 = vld [vmem:[%s505 + $0xd8] sm:$0xff]
        %v568 = vld [vmem:[%s505 + $0xe0] sm:$0xff]
        %v569 = vld [vmem:[%s505 + $0xe8] sm:$0xff]
        %v570 = vld [vmem:[%s505 + $0xf0] sm:$0xff]
        %v571 = vld [vmem:[%s505 + $0xf8] sm:$0xff]
        %v572 = vld [vmem:[#allocation2] sm:$0xff]
        %v573 = vld [vmem:[#allocation2 + $0x8] sm:$0xff]
        %v574 = vld [vmem:[#allocation2 + $0x10] sm:$0xff]
        %v575 = vld [vmem:[#allocation2 + $0x18] sm:$0xff]
        %v576 = vld [vmem:[%s4] sm:$0x1]
        %v578 = vlaneseq
        %v579 = vshrl.u32 %v578, 7
        %v580 = vsub.s32 0, %v579
        %v581 = vrot.slane %v576, %v580
        %vm583 = vcmask 261120
        %v585 = vsel %vm583, %v508, 0
        %v588 = vsel %vm583, %v509, 0
        %v591 = vsel %vm583, %v510, 0
        %v594 = vsel %vm583, %v511, 0
        %v597 = vsel %vm583, %v512, 0
        %v600 = vsel %vm583, %v513, 0
        %v603 = vsel %vm583, %v514, 0
        %v606 = vsel %vm583, %v515, 0
        %v609 = vsel %vm583, %v516, 0
        %v612 = vsel %vm583, %v517, 0
        %v615 = vsel %vm583, %v518, 0
        %v618 = vsel %vm583, %v519, 0
        %v621 = vsel %vm583, %v520, 0
        %v624 = vsel %vm583, %v521, 0
        %v627 = vsel %vm583, %v522, 0
        %v630 = vsel %vm583, %v523, 0
        %v633 = vsel %vm583, %v524, 0
        %v636 = vsel %vm583, %v525, 0
        %v639 = vsel %vm583, %v526, 0
        %v642 = vsel %vm583, %v527, 0
        %v645 = vsel %vm583, %v528, 0
        %v648 = vsel %vm583, %v529, 0
        %v651 = vsel %vm583, %v530, 0
        %v654 = vsel %vm583, %v531, 0
        %v657 = vsel %vm583, %v532, 0
        %v660 = vsel %vm583, %v533, 0
        %v663 = vsel %vm583, %v534, 0
        %v666 = vsel %vm583, %v535, 0
        %v669 = vsel %vm583, %v536, 0
        %v672 = vsel %vm583, %v537, 0
        %v675 = vsel %vm583, %v538, 0
        %v678 = vsel %vm583, %v539, 0
        %v681 = vsel %vm583, %v540, 0
        %v684 = vsel %vm583, %v541, 0
        %v687 = vsel %vm583, %v542, 0
        %v690 = vsel %vm583, %v543, 0
        %v693 = vsel %vm583, %v544, 0
        %v696 = vsel %vm583, %v545, 0
        %v699 = vsel %vm583, %v546, 0
        %v702 = vsel %vm583, %v547, 0
        %v705 = vsel %vm583, %v548, 0
        %v708 = vsel %vm583, %v549, 0
        %v711 = vsel %vm583, %v550, 0
        %v714 = vsel %vm583, %v551, 0
        %v717 = vsel %vm583, %v552, 0
        %v720 = vsel %vm583, %v553, 0
        %v723 = vsel %vm583, %v554, 0
        %v726 = vsel %vm583, %v555, 0
        %v729 = vsel %vm583, %v556, 0
        %v732 = vsel %vm583, %v557, 0
        %v735 = vsel %vm583, %v558, 0
        %v738 = vsel %vm583, %v559, 0
        %v741 = vsel %vm583, %v560, 0
        %v744 = vsel %vm583, %v561, 0
        %v747 = vsel %vm583, %v562, 0
        %v750 = vsel %vm583, %v563, 0
        %v753 = vsel %vm583, %v564, 0
        %v756 = vsel %vm583, %v565, 0
        %v759 = vsel %vm583, %v566, 0
        %v762 = vsel %vm583, %v567, 0
        %v765 = vsel %vm583, %v568, 0
        %v768 = vsel %vm583, %v569, 0
        %v771 = vsel %vm583, %v570, 0
        %v774 = vsel %vm583, %v571, 0
        %776 = vmatprep.subr.mxu0 0.0
        %777 = vmatpush1.msra.mxu0 %v572
        %778 = vmatprep.subr.mxu0 0.0
        %779 = vmatpush1.msra.mxu0 %v573
        %780 = vmatprep.subr.mxu0 0.0
        %781 = vmatpush1.msra.mxu0 %v574
        %782 = vmatprep.subr.mxu0 0.0
        %783 = vmatpush1.msra.mxu0 %v575
        %784 = vmatprep.subr.mxu0 0.0
        %785 = vmatpush1.msra.mxu0 0.0
        %786 = vmatprep.subr.mxu0 0.0
        %787 = vmatpush1.msra.mxu0 0.0
        %788 = vmatprep.subr.mxu0 0.0
        %789 = vmatpush1.msra.mxu0 0.0
        %790 = vmatprep.subr.mxu0 0.0
        %791 = vmatpush1.msra.mxu0 0.0
        %792 = vmatprep.subr.mxu0 0.0
        %793 = vmatpush1.msra.mxu0 0.0
        %794 = vmatprep.subr.mxu0 0.0
        %795 = vmatpush1.msra.mxu0 0.0
        %796 = vmatprep.subr.mxu0 0.0
        %797 = vmatpush1.msra.mxu0 0.0
        %798 = vmatprep.subr.mxu0 0.0
        %799 = vmatpush1.msra.mxu0 0.0
        %800 = vmatprep.subr.mxu0 0.0
        %801 = vmatpush1.msra.mxu0 0.0
        %802 = vmatprep.subr.mxu0 0.0
        %803 = vmatpush1.msra.mxu0 0.0
        %804 = vmatprep.subr.mxu0 0.0
        %805 = vmatpush1.msra.mxu0 0.0
        %806 = vmatprep.subr.mxu0 0.0
        %807 = vmatpush1.msra.mxu0 0.0
        %808 = vmatprep.subr.mxu0 0.0
        %809 = vmatpush1.msra.mxu0 0.0
        %810 = vmatprep.subr.mxu0 0.0
        %811 = vmatpush1.msra.mxu0 0.0
        %812 = vmatprep.subr.mxu0 0.0
        %813 = vmatpush1.msra.mxu0 0.0
        %814 = vmatprep.subr.mxu0 0.0
        %815 = vmatpush1.msra.mxu0 0.0
        %816 = vmatprep.subr.mxu0 0.0
        %817 = vmatpush1.msra.mxu0 0.0
        %818 = vmatprep.subr.mxu0 0.0
        %819 = vmatpush1.msra.mxu0 0.0
        %820 = vmatprep.subr.mxu0 0.0
        %821 = vmatpush1.msra.mxu0 0.0
        %822 = vmatprep.subr.mxu0 0.0
        %823 = vmatpush1.msra.mxu0 0.0
        %824 = vmatprep.subr.mxu0 0.0
        %825 = vmatpush1.msra.mxu0 0.0
        %826 = vmatprep.subr.mxu0 0.0
        %827 = vmatpush1.msra.mxu0 0.0
        %828 = vmatprep.subr.mxu0 0.0
        %829 = vmatpush1.msra.mxu0 0.0
        %830 = vmatprep.subr.mxu0 0.0
        %831 = vmatpush1.msra.mxu0 0.0
        %832 = vmatprep.subr.mxu0 0.0
        %833 = vmatpush1.msra.mxu0 0.0
        %834 = vmatprep.subr.mxu0 0.0
        %835 = vmatpush1.msra.mxu0 0.0
        %836 = vmatprep.subr.mxu0 0.0
        %837 = vmatpush1.msra.mxu0 0.0
        %838 = vmatprep.subr.mxu0 0.0
        %839 = vmatpush1.msra.mxu0 0.0
        %840 = vmatprep.mubr.f32.mxu0 0.0
        %841 = vmatmul.mubr.f32.gmra.mrb[0].mxu0 %v585
        %v842 = vpop.f32.mrb[0].mxu0
        %v843 = vadd.f32 %v581, %v842
        %v844 = vpop.f32.mrb[0].mxu0
        %845 = vmatprep.mubr.f32.mxu0 0.0
        %846 = vmatmul.mubr.f32.gmra.mrb[0].mxu0 %v588
        %v847 = vpop.f32.mrb[0].mxu0
        %v848 = vadd.f32 %v581, %v847
        %v849 = vpop.f32.mrb[0].mxu0
        %850 = vmatprep.mubr.f32.mxu0 0.0
        %851 = vmatmul.mubr.f32.gmra.mrb[0].mxu0 %v591
        %v852 = vpop.f32.mrb[0].mxu0
        %v853 = vadd.f32 %v581, %v852
        %v854 = vpop.f32.mrb[0].mxu0
        %855 = vmatprep.mubr.f32.mxu0 0.0
        %856 = vmatmul.mubr.f32.gmra.mrb[0].mxu0 %v594
        %v857 = vpop.f32.mrb[0].mxu0
        %v858 = vadd.f32 %v581, %v857
        %v859 = vpop.f32.mrb[0].mxu0
        %860 = vmatprep.mubr.f32.mxu0 0.0
        %861 = vmatmul.mubr.f32.gmra.mrb[0].mxu0 %v597
        %v862 = vpop.f32.mrb[0].mxu0
        %v863 = vadd.f32 %v581, %v862
        %v864 = vpop.f32.mrb[0].mxu0
        %865 = vmatprep.mubr.f32.mxu0 0.0
        %866 = vmatmul.mubr.f32.gmra.mrb[0].mxu0 %v600
        %v867 = vpop.f32.mrb[0].mxu0
        %v868 = vadd.f32 %v581, %v867
        %v869 = vpop.f32.mrb[0].mxu0
        %870 = vmatprep.mubr.f32.mxu0 0.0
        %871 = vmatmul.mubr.f32.gmra.mrb[0].mxu0 %v603
        %v872 = vpop.f32.mrb[0].mxu0
        %v873 = vadd.f32 %v581, %v872
        %v874 = vpop.f32.mrb[0].mxu0
        %875 = vmatprep.mubr.f32.mxu0 0.0
        %876 = vmatmul.mubr.f32.gmra.mrb[0].mxu0 %v606
        %v877 = vpop.f32.mrb[0].mxu0
        %v878 = vadd.f32 %v581, %v877
        %v879 = vpop.f32.mrb[0].mxu0
        %880 = vmatprep.mubr.f32.mxu0 0.0
        %881 = vmatmul.mubr.f32.gmra.mrb[0].mxu0 %v609
        %v882 = vpop.f32.mrb[0].mxu0
        %v883 = vadd.f32 %v581, %v882
        %v884 = vpop.f32.mrb[0].mxu0
        %885 = vmatprep.mubr.f32.mxu0 0.0
        %886 = vmatmul.mubr.f32.gmra.mrb[0].mxu0 %v612
        %v887 = vpop.f32.mrb[0].mxu0
        %v888 = vadd.f32 %v581, %v887
        %v889 = vpop.f32.mrb[0].mxu0
        %890 = vmatprep.mubr.f32.mxu0 0.0
        %891 = vmatmul.mubr.f32.gmra.mrb[0].mxu0 %v615
        %v892 = vpop.f32.mrb[0].mxu0
        %v893 = vadd.f32 %v581, %v892
        %v894 = vpop.f32.mrb[0].mxu0
        %895 = vmatprep.mubr.f32.mxu0 0.0
        %896 = vmatmul.mubr.f32.gmra.mrb[0].mxu0 %v618
        %v897 = vpop.f32.mrb[0].mxu0
        %v898 = vadd.f32 %v581, %v897
        %v899 = vpop.f32.mrb[0].mxu0
        %900 = vmatprep.mubr.f32.mxu0 0.0
        %901 = vmatmul.mubr.f32.gmra.mrb[0].mxu0 %v621
        %v902 = vpop.f32.mrb[0].mxu0
        %v903 = vadd.f32 %v581, %v902
        %v904 = vpop.f32.mrb[0].mxu0
        %905 = vmatprep.mubr.f32.mxu0 0.0
        %906 = vmatmul.mubr.f32.gmra.mrb[0].mxu0 %v624
        %v907 = vpop.f32.mrb[0].mxu0
        %v908 = vadd.f32 %v581, %v907
        %v909 = vpop.f32.mrb[0].mxu0
        %910 = vmatprep.mubr.f32.mxu0 0.0
        %911 = vmatmul.mubr.f32.gmra.mrb[0].mxu0 %v627
        %v912 = vpop.f32.mrb[0].mxu0
        %v913 = vadd.f32 %v581, %v912
        %v914 = vpop.f32.mrb[0].mxu0
        %915 = vmatprep.mubr.f32.mxu0 0.0
        %916 = vmatmul.mubr.f32.gmra.mrb[0].mxu0 %v630
        %v917 = vpop.f32.mrb[0].mxu0
        %v918 = vadd.f32 %v581, %v917
        %v919 = vpop.f32.mrb[0].mxu0
        %920 = vmatprep.mubr.f32.mxu0 0.0
        %921 = vmatmul.mubr.f32.gmra.mrb[0].mxu0 %v633
        %v922 = vpop.f32.mrb[0].mxu0
        %v923 = vadd.f32 %v581, %v922
        %v924 = vpop.f32.mrb[0].mxu0
        %925 = vmatprep.mubr.f32.mxu0 0.0
        %926 = vmatmul.mubr.f32.gmra.mrb[0].mxu0 %v636
        %v927 = vpop.f32.mrb[0].mxu0
        %v928 = vadd.f32 %v581, %v927
        %v929 = vpop.f32.mrb[0].mxu0
        %930 = vmatprep.mubr.f32.mxu0 0.0
        %931 = vmatmul.mubr.f32.gmra.mrb[0].mxu0 %v639
        %v932 = vpop.f32.mrb[0].mxu0
        %v933 = vadd.f32 %v581, %v932
        %v934 = vpop.f32.mrb[0].mxu0
        %935 = vmatprep.mubr.f32.mxu0 0.0
        %936 = vmatmul.mubr.f32.gmra.mrb[0].mxu0 %v642
        %v937 = vpop.f32.mrb[0].mxu0
        %v938 = vadd.f32 %v581, %v937
        %v939 = vpop.f32.mrb[0].mxu0
        %940 = vmatprep.mubr.f32.mxu0 0.0
        %941 = vmatmul.mubr.f32.gmra.mrb[0].mxu0 %v645
        %v942 = vpop.f32.mrb[0].mxu0
        %v943 = vadd.f32 %v581, %v942
        %v944 = vpop.f32.mrb[0].mxu0
        %945 = vmatprep.mubr.f32.mxu0 0.0
        %946 = vmatmul.mubr.f32.gmra.mrb[0].mxu0 %v648
        %v947 = vpop.f32.mrb[0].mxu0
        %v948 = vadd.f32 %v581, %v947
        %v949 = vpop.f32.mrb[0].mxu0
        %950 = vmatprep.mubr.f32.mxu0 0.0
        %951 = vmatmul.mubr.f32.gmra.mrb[0].mxu0 %v651
        %v952 = vpop.f32.mrb[0].mxu0
        %v953 = vadd.f32 %v581, %v952
        %v954 = vpop.f32.mrb[0].mxu0
        %955 = vmatprep.mubr.f32.mxu0 0.0
        %956 = vmatmul.mubr.f32.gmra.mrb[0].mxu0 %v654
        %v957 = vpop.f32.mrb[0].mxu0
        %v958 = vadd.f32 %v581, %v957
        %v959 = vpop.f32.mrb[0].mxu0
        %960 = vmatprep.mubr.f32.mxu0 0.0
        %961 = vmatmul.mubr.f32.gmra.mrb[0].mxu0 %v657
        %v962 = vpop.f32.mrb[0].mxu0
        %v963 = vadd.f32 %v581, %v962
        %v964 = vpop.f32.mrb[0].mxu0
        %965 = vmatprep.mubr.f32.mxu0 0.0
        %966 = vmatmul.mubr.f32.gmra.mrb[0].mxu0 %v660
        %v967 = vpop.f32.mrb[0].mxu0
        %v968 = vadd.f32 %v581, %v967
        %v969 = vpop.f32.mrb[0].mxu0
        %970 = vmatprep.mubr.f32.mxu0 0.0
        %971 = vmatmul.mubr.f32.gmra.mrb[0].mxu0 %v663
        %v972 = vpop.f32.mrb[0].mxu0
        %v973 = vadd.f32 %v581, %v972
        %v974 = vpop.f32.mrb[0].mxu0
        %975 = vmatprep.mubr.f32.mxu0 0.0
        %976 = vmatmul.mubr.f32.gmra.mrb[0].mxu0 %v666
        %v977 = vpop.f32.mrb[0].mxu0
        %v978 = vadd.f32 %v581, %v977
        %v979 = vpop.f32.mrb[0].mxu0
        %980 = vmatprep.mubr.f32.mxu0 0.0
        %981 = vmatmul.mubr.f32.gmra.mrb[0].mxu0 %v669
        %v982 = vpop.f32.mrb[0].mxu0
        %v983 = vadd.f32 %v581, %v982
        %v984 = vpop.f32.mrb[0].mxu0
        %985 = vmatprep.mubr.f32.mxu0 0.0
        %986 = vmatmul.mubr.f32.gmra.mrb[0].mxu0 %v672
        %v987 = vpop.f32.mrb[0].mxu0
        %v988 = vadd.f32 %v581, %v987
        %v989 = vpop.f32.mrb[0].mxu0
        %990 = vmatprep.mubr.f32.mxu0 0.0
        %991 = vmatmul.mubr.f32.gmra.mrb[0].mxu0 %v675
        %v992 = vpop.f32.mrb[0].mxu0
        %v993 = vadd.f32 %v581, %v992
        %v994 = vpop.f32.mrb[0].mxu0
        %995 = vmatprep.mubr.f32.mxu0 0.0
        %996 = vmatmul.mubr.f32.gmra.mrb[0].mxu0 %v678
        %v997 = vpop.f32.mrb[0].mxu0
        %v998 = vadd.f32 %v581, %v997
        %v999 = vpop.f32.mrb[0].mxu0
        %1000 = vmatprep.mubr.f32.mxu0 0.0
        %1001 = vmatmul.mubr.f32.gmra.mrb[0].mxu0 %v681
        %v1002 = vpop.f32.mrb[0].mxu0
        %v1003 = vadd.f32 %v581, %v1002
        %v1004 = vpop.f32.mrb[0].mxu0
        %1005 = vmatprep.mubr.f32.mxu0 0.0
        %1006 = vmatmul.mubr.f32.gmra.mrb[0].mxu0 %v684
        %v1007 = vpop.f32.mrb[0].mxu0
        %v1008 = vadd.f32 %v581, %v1007
        %v1009 = vpop.f32.mrb[0].mxu0
        %1010 = vmatprep.mubr.f32.mxu0 0.0
        %1011 = vmatmul.mubr.f32.gmra.mrb[0].mxu0 %v687
        %v1012 = vpop.f32.mrb[0].mxu0
        %v1013 = vadd.f32 %v581, %v1012
        %v1014 = vpop.f32.mrb[0].mxu0
        %1015 = vmatprep.mubr.f32.mxu0 0.0
        %1016 = vmatmul.mubr.f32.gmra.mrb[0].mxu0 %v690
        %v1017 = vpop.f32.mrb[0].mxu0
        %v1018 = vadd.f32 %v581, %v1017
        %v1019 = vpop.f32.mrb[0].mxu0
        %1020 = vmatprep.mubr.f32.mxu0 0.0
        %1021 = vmatmul.mubr.f32.gmra.mrb[0].mxu0 %v693
        %v1022 = vpop.f32.mrb[0].mxu0
        %v1023 = vadd.f32 %v581, %v1022
        %v1024 = vpop.f32.mrb[0].mxu0
        %1025 = vmatprep.mubr.f32.mxu0 0.0
        %1026 = vmatmul.mubr.f32.gmra.mrb[0].mxu0 %v696
        %v1027 = vpop.f32.mrb[0].mxu0
        %v1028 = vadd.f32 %v581, %v1027
        %v1029 = vpop.f32.mrb[0].mxu0
        %1030 = vmatprep.mubr.f32.mxu0 0.0
        %1031 = vmatmul.mubr.f32.gmra.mrb[0].mxu0 %v699
        %v1032 = vpop.f32.mrb[0].mxu0
        %v1033 = vadd.f32 %v581, %v1032
        %v1034 = vpop.f32.mrb[0].mxu0
        %1035 = vmatprep.mubr.f32.mxu0 0.0
        %1036 = vmatmul.mubr.f32.gmra.mrb[0].mxu0 %v702
        %v1037 = vpop.f32.mrb[0].mxu0
        %v1038 = vadd.f32 %v581, %v1037
        %v1039 = vpop.f32.mrb[0].mxu0
        %1040 = vmatprep.mubr.f32.mxu0 0.0
        %1041 = vmatmul.mubr.f32.gmra.mrb[0].mxu0 %v705
        %v1042 = vpop.f32.mrb[0].mxu0
        %v1043 = vadd.f32 %v581, %v1042
        %v1044 = vpop.f32.mrb[0].mxu0
        %1045 = vmatprep.mubr.f32.mxu0 0.0
        %1046 = vmatmul.mubr.f32.gmra.mrb[0].mxu0 %v708
        %v1047 = vpop.f32.mrb[0].mxu0
        %v1048 = vadd.f32 %v581, %v1047
        %v1049 = vpop.f32.mrb[0].mxu0
        %1050 = vmatprep.mubr.f32.mxu0 0.0
        %1051 = vmatmul.mubr.f32.gmra.mrb[0].mxu0 %v711
        %v1052 = vpop.f32.mrb[0].mxu0
        %v1053 = vadd.f32 %v581, %v1052
        %v1054 = vpop.f32.mrb[0].mxu0
        %1055 = vmatprep.mubr.f32.mxu0 0.0
        %1056 = vmatmul.mubr.f32.gmra.mrb[0].mxu0 %v714
        %v1057 = vpop.f32.mrb[0].mxu0
        %v1058 = vadd.f32 %v581, %v1057
        %v1059 = vpop.f32.mrb[0].mxu0
        %1060 = vmatprep.mubr.f32.mxu0 0.0
        %1061 = vmatmul.mubr.f32.gmra.mrb[0].mxu0 %v717
        %v1062 = vpop.f32.mrb[0].mxu0
        %v1063 = vadd.f32 %v581, %v1062
        %v1064 = vpop.f32.mrb[0].mxu0
        %1065 = vmatprep.mubr.f32.mxu0 0.0
        %1066 = vmatmul.mubr.f32.gmra.mrb[0].mxu0 %v720
        %v1067 = vpop.f32.mrb[0].mxu0
        %v1068 = vadd.f32 %v581, %v1067
        %v1069 = vpop.f32.mrb[0].mxu0
        %1070 = vmatprep.mubr.f32.mxu0 0.0
        %1071 = vmatmul.mubr.f32.gmra.mrb[0].mxu0 %v723
        %v1072 = vpop.f32.mrb[0].mxu0
        %v1073 = vadd.f32 %v581, %v1072
        %v1074 = vpop.f32.mrb[0].mxu0
        %1075 = vmatprep.mubr.f32.mxu0 0.0
        %1076 = vmatmul.mubr.f32.gmra.mrb[0].mxu0 %v726
        %v1077 = vpop.f32.mrb[0].mxu0
        %v1078 = vadd.f32 %v581, %v1077
        %v1079 = vpop.f32.mrb[0].mxu0
        %1080 = vmatprep.mubr.f32.mxu0 0.0
        %1081 = vmatmul.mubr.f32.gmra.mrb[0].mxu0 %v729
        %v1082 = vpop.f32.mrb[0].mxu0
        %v1083 = vadd.f32 %v581, %v1082
        %v1084 = vpop.f32.mrb[0].mxu0
        %1085 = vmatprep.mubr.f32.mxu0 0.0
        %1086 = vmatmul.mubr.f32.gmra.mrb[0].mxu0 %v732
        %v1087 = vpop.f32.mrb[0].mxu0
        %v1088 = vadd.f32 %v581, %v1087
        %v1089 = vpop.f32.mrb[0].mxu0
        %1090 = vmatprep.mubr.f32.mxu0 0.0
        %1091 = vmatmul.mubr.f32.gmra.mrb[0].mxu0 %v735
        %v1092 = vpop.f32.mrb[0].mxu0
        %v1093 = vadd.f32 %v581, %v1092
        %v1094 = vpop.f32.mrb[0].mxu0
        %1095 = vmatprep.mubr.f32.mxu0 0.0
        %1096 = vmatmul.mubr.f32.gmra.mrb[0].mxu0 %v738
        %v1097 = vpop.f32.mrb[0].mxu0
        %v1098 = vadd.f32 %v581, %v1097
        %v1099 = vpop.f32.mrb[0].mxu0
        %1100 = vmatprep.mubr.f32.mxu0 0.0
        %1101 = vmatmul.mubr.f32.gmra.mrb[0].mxu0 %v741
        %v1102 = vpop.f32.mrb[0].mxu0
        %v1103 = vadd.f32 %v581, %v1102
        %v1104 = vpop.f32.mrb[0].mxu0
        %1105 = vmatprep.mubr.f32.mxu0 0.0
        %1106 = vmatmul.mubr.f32.gmra.mrb[0].mxu0 %v744
        %v1107 = vpop.f32.mrb[0].mxu0
        %v1108 = vadd.f32 %v581, %v1107
        %v1109 = vpop.f32.mrb[0].mxu0
        %1110 = vmatprep.mubr.f32.mxu0 0.0
        %1111 = vmatmul.mubr.f32.gmra.mrb[0].mxu0 %v747
        %v1112 = vpop.f32.mrb[0].mxu0
        %v1113 = vadd.f32 %v581, %v1112
        %v1114 = vpop.f32.mrb[0].mxu0
        %1115 = vmatprep.mubr.f32.mxu0 0.0
        %1116 = vmatmul.mubr.f32.gmra.mrb[0].mxu0 %v750
        %v1117 = vpop.f32.mrb[0].mxu0
        %v1118 = vadd.f32 %v581, %v1117
        %v1119 = vpop.f32.mrb[0].mxu0
        %1120 = vmatprep.mubr.f32.mxu0 0.0
        %1121 = vmatmul.mubr.f32.gmra.mrb[0].mxu0 %v753
        %v1122 = vpop.f32.mrb[0].mxu0
        %v1123 = vadd.f32 %v581, %v1122
        %v1124 = vpop.f32.mrb[0].mxu0
        %1125 = vmatprep.mubr.f32.mxu0 0.0
        %1126 = vmatmul.mubr.f32.gmra.mrb[0].mxu0 %v756
        %v1127 = vpop.f32.mrb[0].mxu0
        %v1128 = vadd.f32 %v581, %v1127
        %v1129 = vpop.f32.mrb[0].mxu0
        %1130 = vmatprep.mubr.f32.mxu0 0.0
        %1131 = vmatmul.mubr.f32.gmra.mrb[0].mxu0 %v759
        %v1132 = vpop.f32.mrb[0].mxu0
        %v1133 = vadd.f32 %v581, %v1132
        %v1134 = vpop.f32.mrb[0].mxu0
        %1135 = vmatprep.mubr.f32.mxu0 0.0
        %1136 = vmatmul.mubr.f32.gmra.mrb[0].mxu0 %v762
        %v1137 = vpop.f32.mrb[0].mxu0
        %v1138 = vadd.f32 %v581, %v1137
        %v1139 = vpop.f32.mrb[0].mxu0
        %1140 = vmatprep.mubr.f32.mxu0 0.0
        %1141 = vmatmul.mubr.f32.gmra.mrb[0].mxu0 %v765
        %v1142 = vpop.f32.mrb[0].mxu0
        %v1143 = vadd.f32 %v581, %v1142
        %v1144 = vpop.f32.mrb[0].mxu0
        %1145 = vmatprep.mubr.f32.mxu0 0.0
        %1146 = vmatmul.mubr.f32.gmra.mrb[0].mxu0 %v768
        %v1147 = vpop.f32.mrb[0].mxu0
        %v1148 = vadd.f32 %v581, %v1147
        %v1149 = vpop.f32.mrb[0].mxu0
        %1150 = vmatprep.mubr.f32.mxu0 0.0
        %1151 = vmatmul.mubr.f32.gmra.mrb[0].mxu0 %v771
        %v1152 = vpop.f32.mrb[0].mxu0
        %v1153 = vadd.f32 %v581, %v1152
        %v1154 = vpop.f32.mrb[0].mxu0
        %1155 = vmatprep.mubr.f32.mxu0 0.0
        %1156 = vmatmul.mubr.f32.gmra.mrb[0].mxu0 %v774
        %v1157 = vpop.f32.mrb[0].mxu0
        %v1158 = vadd.f32 %v581, %v1157
        %v1159 = vpop.f32.mrb[0].mxu0
        %1160 = vdwg.mxu0
        %v1161 = vld [vmem:[%s5] sm:$0xff]
        %v1162 = vld [vmem:[%s5 + $0x8] sm:$0xff]
        %v1163 = vld [vmem:[%s5 + $0x10] sm:$0xff]
        %v1164 = vld [vmem:[%s5 + $0x18] sm:$0xff]
        %v1165 = vld [vmem:[%s5 + $0x20] sm:$0xff]
        %v1166 = vld [vmem:[%s5 + $0x28] sm:$0xff]
        %v1167 = vld [vmem:[%s5 + $0x30] sm:$0xff]
        %v1168 = vld [vmem:[%s5 + $0x38] sm:$0xff]
        %v1169 = vld [vmem:[%s5 + $0x40] sm:$0xff]
        %v1170 = vld [vmem:[%s5 + $0x48] sm:$0xff]
        %v1171 = vld [vmem:[%s5 + $0x50] sm:$0xff]
        %v1172 = vld [vmem:[%s5 + $0x58] sm:$0xff]
        %v1173 = vld [vmem:[%s5 + $0x60] sm:$0xff]
        %v1174 = vld [vmem:[%s5 + $0x68] sm:$0xff]
        %v1175 = vld [vmem:[%s5 + $0x70] sm:$0xff]
        %v1176 = vld [vmem:[%s5 + $0x78] sm:$0xff]
        %v1177 = vld [vmem:[%s5 + $0x80] sm:$0xff]
        %v1178 = vld [vmem:[%s5 + $0x88] sm:$0xff]
        %v1179 = vld [vmem:[%s5 + $0x90] sm:$0xff]
        %v1180 = vld [vmem:[%s5 + $0x98] sm:$0xff]
        %v1181 = vld [vmem:[%s5 + $0xa0] sm:$0xff]
        %v1182 = vld [vmem:[%s5 + $0xa8] sm:$0xff]
        %v1183 = vld [vmem:[%s5 + $0xb0] sm:$0xff]
        %v1184 = vld [vmem:[%s5 + $0xb8] sm:$0xff]
        %v1185 = vld [vmem:[%s5 + $0xc0] sm:$0xff]
        %v1186 = vld [vmem:[%s5 + $0xc8] sm:$0xff]
        %v1187 = vld [vmem:[%s5 + $0xd0] sm:$0xff]
        %v1188 = vld [vmem:[%s5 + $0xd8] sm:$0xff]
        %v1189 = vld [vmem:[%s5 + $0xe0] sm:$0xff]
        %v1190 = vld [vmem:[%s5 + $0xe8] sm:$0xff]
        %v1191 = vld [vmem:[%s5 + $0xf0] sm:$0xff]
        %v1192 = vld [vmem:[%s5 + $0xf8] sm:$0xff]
        %v1193 = vld [vmem:[%s5 + $0x100] sm:$0xff]
        %v1194 = vld [vmem:[%s5 + $0x108] sm:$0xff]
        %v1195 = vld [vmem:[%s5 + $0x110] sm:$0xff]
        %v1196 = vld [vmem:[%s5 + $0x118] sm:$0xff]
        %v1197 = vld [vmem:[%s5 + $0x120] sm:$0xff]
        %v1198 = vld [vmem:[%s5 + $0x128] sm:$0xff]
        %v1199 = vld [vmem:[%s5 + $0x130] sm:$0xff]
        %v1200 = vld [vmem:[%s5 + $0x138] sm:$0xff]
        %v1201 = vld [vmem:[%s5 + $0x140] sm:$0xff]
        %v1202 = vld [vmem:[%s5 + $0x148] sm:$0xff]
        %v1203 = vld [vmem:[%s5 + $0x150] sm:$0xff]
        %v1204 = vld [vmem:[%s5 + $0x158] sm:$0xff]
        %v1205 = vld [vmem:[%s5 + $0x160] sm:$0xff]
        %v1206 = vld [vmem:[%s5 + $0x168] sm:$0xff]
        %v1207 = vld [vmem:[%s5 + $0x170] sm:$0xff]
        %v1208 = vld [vmem:[%s5 + $0x178] sm:$0xff]
        %v1209 = vld [vmem:[%s5 + $0x180] sm:$0xff]
        %v1210 = vld [vmem:[%s5 + $0x188] sm:$0xff]
        %v1211 = vld [vmem:[%s5 + $0x190] sm:$0xff]
        %v1212 = vld [vmem:[%s5 + $0x198] sm:$0xff]
        %v1213 = vld [vmem:[%s5 + $0x1a0] sm:$0xff]
        %v1214 = vld [vmem:[%s5 + $0x1a8] sm:$0xff]
        %v1215 = vld [vmem:[%s5 + $0x1b0] sm:$0xff]
        %v1216 = vld [vmem:[%s5 + $0x1b8] sm:$0xff]
        %v1217 = vld [vmem:[%s5 + $0x1c0] sm:$0xff]
        %v1218 = vld [vmem:[%s5 + $0x1c8] sm:$0xff]
        %v1219 = vld [vmem:[%s5 + $0x1d0] sm:$0xff]
        %v1220 = vld [vmem:[%s5 + $0x1d8] sm:$0xff]
        %v1221 = vld [vmem:[%s5 + $0x1e0] sm:$0xff]
        %v1222 = vld [vmem:[%s5 + $0x1e8] sm:$0xff]
        %v1223 = vld [vmem:[%s5 + $0x1f0] sm:$0xff]
        %v1224 = vld [vmem:[%s5 + $0x1f8] sm:$0xff]
        %v1225 = vld [vmem:[%s5 + $0x200] sm:$0xff]
        %v1226 = vld [vmem:[%s5 + $0x208] sm:$0xff]
        %v1227 = vld [vmem:[%s5 + $0x210] sm:$0xff]
        %v1228 = vld [vmem:[%s5 + $0x218] sm:$0xff]
        %v1229 = vld [vmem:[%s5 + $0x220] sm:$0xff]
        %v1230 = vld [vmem:[%s5 + $0x228] sm:$0xff]
        %v1231 = vld [vmem:[%s5 + $0x230] sm:$0xff]
        %v1232 = vld [vmem:[%s5 + $0x238] sm:$0xff]
        %v1233 = vld [vmem:[%s5 + $0x240] sm:$0xff]
        %v1234 = vld [vmem:[%s5 + $0x248] sm:$0xff]
        %v1235 = vld [vmem:[%s5 + $0x250] sm:$0xff]
        %v1236 = vld [vmem:[%s5 + $0x258] sm:$0xff]
        %v1237 = vld [vmem:[%s5 + $0x260] sm:$0xff]
        %v1238 = vld [vmem:[%s5 + $0x268] sm:$0xff]
        %v1239 = vld [vmem:[%s5 + $0x270] sm:$0xff]
        %v1240 = vld [vmem:[%s5 + $0x278] sm:$0xff]
        %v1241 = vld [vmem:[%s5 + $0x280] sm:$0xff]
        %v1242 = vld [vmem:[%s5 + $0x288] sm:$0xff]
        %v1243 = vld [vmem:[%s5 + $0x290] sm:$0xff]
        %v1244 = vld [vmem:[%s5 + $0x298] sm:$0xff]
        %v1245 = vld [vmem:[%s5 + $0x2a0] sm:$0xff]
        %v1246 = vld [vmem:[%s5 + $0x2a8] sm:$0xff]
        %v1247 = vld [vmem:[%s5 + $0x2b0] sm:$0xff]
        %v1248 = vld [vmem:[%s5 + $0x2b8] sm:$0xff]
        %v1249 = vld [vmem:[%s5 + $0x2c0] sm:$0xff]
        %v1250 = vld [vmem:[%s5 + $0x2c8] sm:$0xff]
        %v1251 = vld [vmem:[%s5 + $0x2d0] sm:$0xff]
        %v1252 = vld [vmem:[%s5 + $0x2d8] sm:$0xff]
        %v1253 = vld [vmem:[%s5 + $0x2e0] sm:$0xff]
        %v1254 = vld [vmem:[%s5 + $0x2e8] sm:$0xff]
        %v1255 = vld [vmem:[%s5 + $0x2f0] sm:$0xff]
        %v1256 = vld [vmem:[%s5 + $0x2f8] sm:$0xff]
        %v1257 = vld [vmem:[%s5 + $0x300] sm:$0xff]
        %v1258 = vld [vmem:[%s5 + $0x308] sm:$0xff]
        %v1259 = vld [vmem:[%s5 + $0x310] sm:$0xff]
        %v1260 = vld [vmem:[%s5 + $0x318] sm:$0xff]
        %v1261 = vld [vmem:[%s5 + $0x320] sm:$0xff]
        %v1262 = vld [vmem:[%s5 + $0x328] sm:$0xff]
        %v1263 = vld [vmem:[%s5 + $0x330] sm:$0xff]
        %v1264 = vld [vmem:[%s5 + $0x338] sm:$0xff]
        %v1265 = vld [vmem:[%s5 + $0x340] sm:$0xff]
        %v1266 = vld [vmem:[%s5 + $0x348] sm:$0xff]
        %v1267 = vld [vmem:[%s5 + $0x350] sm:$0xff]
        %v1268 = vld [vmem:[%s5 + $0x358] sm:$0xff]
        %v1269 = vld [vmem:[%s5 + $0x360] sm:$0xff]
        %v1270 = vld [vmem:[%s5 + $0x368] sm:$0xff]
        %v1271 = vld [vmem:[%s5 + $0x370] sm:$0xff]
        %v1272 = vld [vmem:[%s5 + $0x378] sm:$0xff]
        %v1273 = vld [vmem:[%s5 + $0x380] sm:$0xff]
        %v1274 = vld [vmem:[%s5 + $0x388] sm:$0xff]
        %v1275 = vld [vmem:[%s5 + $0x390] sm:$0xff]
        %v1276 = vld [vmem:[%s5 + $0x398] sm:$0xff]
        %v1277 = vld [vmem:[%s5 + $0x3a0] sm:$0xff]
        %v1278 = vld [vmem:[%s5 + $0x3a8] sm:$0xff]
        %v1279 = vld [vmem:[%s5 + $0x3b0] sm:$0xff]
        %v1280 = vld [vmem:[%s5 + $0x3b8] sm:$0xff]
        %v1281 = vld [vmem:[%s5 + $0x3c0] sm:$0xff]
        %v1282 = vld [vmem:[%s5 + $0x3c8] sm:$0xff]
        %v1283 = vld [vmem:[%s5 + $0x3d0] sm:$0xff]
        %v1284 = vld [vmem:[%s5 + $0x3d8] sm:$0xff]
        %v1285 = vld [vmem:[%s5 + $0x3e0] sm:$0xff]
        %v1286 = vld [vmem:[%s5 + $0x3e8] sm:$0xff]
        %v1287 = vld [vmem:[%s5 + $0x3f0] sm:$0xff]
        %v1288 = vld [vmem:[%s5 + $0x3f8] sm:$0xff]
        %v1289 = vld [vmem:[%s6] sm:$0xf]
        %v1291 = vlaneseq
        %v1292 = vshrl.u32 %v1291, 7
        %v1293 = vsub.s32 0, %v1292
        %v1294 = vrot.slane %v1289, %v1293
        %v1295 = vlaneseq
        %v1296 = vshrl.u32 %v1295, 7
        %v1297 = vsub.s32 1, %v1296
        %v1298 = vrot.slane %v1289, %v1297
        %v1299 = vlaneseq
        %v1300 = vshrl.u32 %v1299, 7
        %v1301 = vsub.s32 2, %v1300
        %v1302 = vrot.slane %v1289, %v1301
        %v1303 = vlaneseq
        %v1304 = vshrl.u32 %v1303, 7
        %v1305 = vsub.s32 3, %v1304
        %v1306 = vrot.slane %v1289, %v1305
        %1311 = vmatprep.subr.mxu0 %v1162
        %1312 = vmatpush1.msra.mxu0 %v1161
        %1313 = vmatprep.subr.mxu0 %v1166
        %1314 = vmatpush1.msra.mxu0 %v1165
        %1315 = vmatprep.subr.mxu0 %v1170
        %1316 = vmatpush1.msra.mxu0 %v1169
        %1317 = vmatprep.subr.mxu0 %v1174
        %1318 = vmatpush1.msra.mxu0 %v1173
        %1319 = vmatprep.subr.mxu0 %v1178
        %1320 = vmatpush1.msra.mxu0 %v1177
        %1321 = vmatprep.subr.mxu0 %v1182
        %1322 = vmatpush1.msra.mxu0 %v1181
        %1323 = vmatprep.subr.mxu0 %v1186
        %1324 = vmatpush1.msra.mxu0 %v1185
        %1325 = vmatprep.subr.mxu0 %v1190
        %1326 = vmatpush1.msra.mxu0 %v1189
        %1327 = vmatprep.subr.mxu0 %v1194
        %1328 = vmatpush1.msra.mxu0 %v1193
        %1329 = vmatprep.subr.mxu0 %v1198
        %1330 = vmatpush1.msra.mxu0 %v1197
        %1331 = vmatprep.subr.mxu0 %v1202
        %1332 = vmatpush1.msra.mxu0 %v1201
        %1333 = vmatprep.subr.mxu0 %v1206
        %1334 = vmatpush1.msra.mxu0 %v1205
        %1335 = vmatprep.subr.mxu0 %v1210
        %1336 = vmatpush1.msra.mxu0 %v1209
        %1337 = vmatprep.subr.mxu0 %v1214
        %1338 = vmatpush1.msra.mxu0 %v1213
        %1339 = vmatprep.subr.mxu0 %v1218
        %1340 = vmatpush1.msra.mxu0 %v1217
        %1341 = vmatprep.subr.mxu0 %v1222
        %1342 = vmatpush1.msra.mxu0 %v1221
        %1343 = vmatprep.subr.mxu0 %v1226
        %1344 = vmatpush1.msra.mxu0 %v1225
        %1345 = vmatprep.subr.mxu0 %v1230
        %1346 = vmatpush1.msra.mxu0 %v1229
        %1347 = vmatprep.subr.mxu0 %v1234
        %1348 = vmatpush1.msra.mxu0 %v1233
        %1349 = vmatprep.subr.mxu0 %v1238
        %1350 = vmatpush1.msra.mxu0 %v1237
        %1351 = vmatprep.subr.mxu0 %v1242
        %1352 = vmatpush1.msra.mxu0 %v1241
        %1353 = vmatprep.subr.mxu0 %v1246
        %1354 = vmatpush1.msra.mxu0 %v1245
        %1355 = vmatprep.subr.mxu0 %v1250
        %1356 = vmatpush1.msra.mxu0 %v1249
        %1357 = vmatprep.subr.mxu0 %v1254
        %1358 = vmatpush1.msra.mxu0 %v1253
        %1359 = vmatprep.subr.mxu0 %v1258
        %1360 = vmatpush1.msra.mxu0 %v1257
        %1361 = vmatprep.subr.mxu0 %v1262
        %1362 = vmatpush1.msra.mxu0 %v1261
        %1363 = vmatprep.subr.mxu0 %v1266
        %1364 = vmatpush1.msra.mxu0 %v1265
        %1365 = vmatprep.subr.mxu0 %v1270
        %1366 = vmatpush1.msra.mxu0 %v1269
        %1367 = vmatprep.subr.mxu0 %v1274
        %1368 = vmatpush1.msra.mxu0 %v1273
        %1369 = vmatprep.subr.mxu0 %v1278
        %1370 = vmatpush1.msra.mxu0 %v1277
        %1371 = vmatprep.subr.mxu0 %v1282
        %1372 = vmatpush1.msra.mxu0 %v1281
        %1373 = vmatprep.subr.mxu0 %v1286
        %1374 = vmatpush1.msra.mxu0 %v1285
        %1375 = vmatprep.mubr.f32.mxu0 %v1003
        %1376 = vmatmul.mubr.f32.gmra.mrb[0].mxu0 %v843
        %v1377 = vpop.f32.mrb[0].mxu0
        %v1378 = vadd.f32 %v1294, %v1377
        %v1379 = vpop.f32.mrb[0].mxu0
        %v1380 = vadd.f32 %v1298, %v1379
        %1381 = vmatprep.mubr.f32.mxu0 %v1008
        %1382 = vmatmul.mubr.f32.gmra.mrb[0].mxu0 %v848
        %v1383 = vpop.f32.mrb[0].mxu0
        %v1384 = vadd.f32 %v1294, %v1383
        %v1385 = vpop.f32.mrb[0].mxu0
        %v1386 = vadd.f32 %v1298, %v1385
        %1387 = vmatprep.mubr.f32.mxu0 %v1013
        %1388 = vmatmul.mubr.f32.gmra.mrb[0].mxu0 %v853
        %v1389 = vpop.f32.mrb[0].mxu0
        %v1390 = vadd.f32 %v1294, %v1389
        %v1391 = vpop.f32.mrb[0].mxu0
        %v1392 = vadd.f32 %v1298, %v1391
        %1393 = vmatprep.mubr.f32.mxu0 %v1018
        %1394 = vmatmul.mubr.f32.gmra.mrb[0].mxu0 %v858
        %v1395 = vpop.f32.mrb[0].mxu0
        %v1396 = vadd.f32 %v1294, %v1395
        %v1397 = vpop.f32.mrb[0].mxu0
        %v1398 = vadd.f32 %v1298, %v1397
        %1399 = vmatprep.mubr.f32.mxu0 %v1023
        %1400 = vmatmul.mubr.f32.gmra.mrb[0].mxu0 %v863
        %v1401 = vpop.f32.mrb[0].mxu0
        %v1402 = vadd.f32 %v1294, %v1401
        %v1403 = vpop.f32.mrb[0].mxu0
        %v1404 = vadd.f32 %v1298, %v1403
        %1405 = vmatprep.mubr.f32.mxu0 %v1028
        %1406 = vmatmul.mubr.f32.gmra.mrb[0].mxu0 %v868
        %v1407 = vpop.f32.mrb[0].mxu0
        %v1408 = vadd.f32 %v1294, %v1407
        %v1409 = vpop.f32.mrb[0].mxu0
        %v1410 = vadd.f32 %v1298, %v1409
        %1411 = vmatprep.mubr.f32.mxu0 %v1033
        %1412 = vmatmul.mubr.f32.gmra.mrb[0].mxu0 %v873
        %v1413 = vpop.f32.mrb[0].mxu0
        %v1414 = vadd.f32 %v1294, %v1413
        %v1415 = vpop.f32.mrb[0].mxu0
        %v1416 = vadd.f32 %v1298, %v1415
        %1417 = vmatprep.mubr.f32.mxu0 %v1038
        %1418 = vmatmul.mubr.f32.gmra.mrb[0].mxu0 %v878
        %v1419 = vpop.f32.mrb[0].mxu0
        %v1420 = vadd.f32 %v1294, %v1419
        %v1421 = vpop.f32.mrb[0].mxu0
        %v1422 = vadd.f32 %v1298, %v1421
        %1423 = vmatprep.mubr.f32.mxu0 %v1043
        %1424 = vmatmul.mubr.f32.gmra.mrb[0].mxu0 %v883
        %v1425 = vpop.f32.mrb[0].mxu0
        %v1426 = vadd.f32 %v1294, %v1425
        %v1427 = vpop.f32.mrb[0].mxu0
        %v1428 = vadd.f32 %v1298, %v1427
        %1429 = vmatprep.mubr.f32.mxu0 %v1048
        %1430 = vmatmul.mubr.f32.gmra.mrb[0].mxu0 %v888
        %v1431 = vpop.f32.mrb[0].mxu0
        %v1432 = vadd.f32 %v1294, %v1431
        %v1433 = vpop.f32.mrb[0].mxu0
        %v1434 = vadd.f32 %v1298, %v1433
        %1435 = vmatprep.mubr.f32.mxu0 %v1053
        %1436 = vmatmul.mubr.f32.gmra.mrb[0].mxu0 %v893
        %v1437 = vpop.f32.mrb[0].mxu0
        %v1438 = vadd.f32 %v1294, %v1437
        %v1439 = vpop.f32.mrb[0].mxu0
        %v1440 = vadd.f32 %v1298, %v1439
        %1441 = vmatprep.mubr.f32.mxu0 %v1058
        %1442 = vmatmul.mubr.f32.gmra.mrb[0].mxu0 %v898
        %v1443 = vpop.f32.mrb[0].mxu0
        %v1444 = vadd.f32 %v1294, %v1443
        %v1445 = vpop.f32.mrb[0].mxu0
        %v1446 = vadd.f32 %v1298, %v1445
        %1447 = vmatprep.mubr.f32.mxu0 %v1063
        %1448 = vmatmul.mubr.f32.gmra.mrb[0].mxu0 %v903
        %v1449 = vpop.f32.mrb[0].mxu0
        %v1450 = vadd.f32 %v1294, %v1449
        %v1451 = vpop.f32.mrb[0].mxu0
        %v1452 = vadd.f32 %v1298, %v1451
        %1453 = vmatprep.mubr.f32.mxu0 %v1068
        %1454 = vmatmul.mubr.f32.gmra.mrb[0].mxu0 %v908
        %v1455 = vpop.f32.mrb[0].mxu0
        %v1456 = vadd.f32 %v1294, %v1455
        %v1457 = vpop.f32.mrb[0].mxu0
        %v1458 = vadd.f32 %v1298, %v1457
        %1459 = vmatprep.mubr.f32.mxu0 %v1073
        %1460 = vmatmul.mubr.f32.gmra.mrb[0].mxu0 %v913
        %v1461 = vpop.f32.mrb[0].mxu0
        %v1462 = vadd.f32 %v1294, %v1461
        %v1463 = vpop.f32.mrb[0].mxu0
        %v1464 = vadd.f32 %v1298, %v1463
        %1465 = vmatprep.mubr.f32.mxu0 %v1078
        %1466 = vmatmul.mubr.f32.gmra.mrb[0].mxu0 %v918
        %v1467 = vpop.f32.mrb[0].mxu0
        %v1468 = vadd.f32 %v1294, %v1467
        %v1469 = vpop.f32.mrb[0].mxu0
        %v1470 = vadd.f32 %v1298, %v1469
        %1471 = vmatprep.mubr.f32.mxu0 %v1083
        %1472 = vmatmul.mubr.f32.gmra.mrb[0].mxu0 %v923
        %v1473 = vpop.f32.mrb[0].mxu0
        %v1474 = vadd.f32 %v1294, %v1473
        %v1475 = vpop.f32.mrb[0].mxu0
        %v1476 = vadd.f32 %v1298, %v1475
        %1477 = vmatprep.mubr.f32.mxu0 %v1088
        %1478 = vmatmul.mubr.f32.gmra.mrb[0].mxu0 %v928
        %v1479 = vpop.f32.mrb[0].mxu0
        %v1480 = vadd.f32 %v1294, %v1479
        %v1481 = vpop.f32.mrb[0].mxu0
        %v1482 = vadd.f32 %v1298, %v1481
        %1483 = vmatprep.mubr.f32.mxu0 %v1093
        %1484 = vmatmul.mubr.f32.gmra.mrb[0].mxu0 %v933
        %v1485 = vpop.f32.mrb[0].mxu0
        %v1486 = vadd.f32 %v1294, %v1485
        %v1487 = vpop.f32.mrb[0].mxu0
        %v1488 = vadd.f32 %v1298, %v1487
        %1489 = vmatprep.mubr.f32.mxu0 %v1098
        %1490 = vmatmul.mubr.f32.gmra.mrb[0].mxu0 %v938
        %v1491 = vpop.f32.mrb[0].mxu0
        %v1492 = vadd.f32 %v1294, %v1491
        %v1493 = vpop.f32.mrb[0].mxu0
        %v1494 = vadd.f32 %v1298, %v1493
        %1495 = vmatprep.mubr.f32.mxu0 %v1103
        %1496 = vmatmul.mubr.f32.gmra.mrb[0].mxu0 %v943
        %v1497 = vpop.f32.mrb[0].mxu0
        %v1498 = vadd.f32 %v1294, %v1497
        %v1499 = vpop.f32.mrb[0].mxu0
        %v1500 = vadd.f32 %v1298, %v1499
        %1501 = vmatprep.mubr.f32.mxu0 %v1108
        %1502 = vmatmul.mubr.f32.gmra.mrb[0].mxu0 %v948
        %v1503 = vpop.f32.mrb[0].mxu0
        %v1504 = vadd.f32 %v1294, %v1503
        %v1505 = vpop.f32.mrb[0].mxu0
        %v1506 = vadd.f32 %v1298, %v1505
        %1507 = vmatprep.mubr.f32.mxu0 %v1113
        %1508 = vmatmul.mubr.f32.gmra.mrb[0].mxu0 %v953
        %v1509 = vpop.f32.mrb[0].mxu0
        %v1510 = vadd.f32 %v1294, %v1509
        %v1511 = vpop.f32.mrb[0].mxu0
        %v1512 = vadd.f32 %v1298, %v1511
        %1513 = vmatprep.mubr.f32.mxu0 %v1118
        %1514 = vmatmul.mubr.f32.gmra.mrb[0].mxu0 %v958
        %v1515 = vpop.f32.mrb[0].mxu0
        %v1516 = vadd.f32 %v1294, %v1515
        %v1517 = vpop.f32.mrb[0].mxu0
        %v1518 = vadd.f32 %v1298, %v1517
        %1519 = vmatprep.mubr.f32.mxu0 %v1123
        %1520 = vmatmul.mubr.f32.gmra.mrb[0].mxu0 %v963
        %v1521 = vpop.f32.mrb[0].mxu0
        %v1522 = vadd.f32 %v1294, %v1521
        %v1523 = vpop.f32.mrb[0].mxu0
        %v1524 = vadd.f32 %v1298, %v1523
        %1525 = vmatprep.mubr.f32.mxu0 %v1128
        %1526 = vmatmul.mubr.f32.gmra.mrb[0].mxu0 %v968
        %v1527 = vpop.f32.mrb[0].mxu0
        %v1528 = vadd.f32 %v1294, %v1527
        %v1529 = vpop.f32.mrb[0].mxu0
        %v1530 = vadd.f32 %v1298, %v1529
        %1531 = vmatprep.mubr.f32.mxu0 %v1133
        %1532 = vmatmul.mubr.f32.gmra.mrb[0].mxu0 %v973
        %v1533 = vpop.f32.mrb[0].mxu0
        %v1534 = vadd.f32 %v1294, %v1533
        %v1535 = vpop.f32.mrb[0].mxu0
        %v1536 = vadd.f32 %v1298, %v1535
        %1537 = vmatprep.mubr.f32.mxu0 %v1138
        %1538 = vmatmul.mubr.f32.gmra.mrb[0].mxu0 %v978
        %v1539 = vpop.f32.mrb[0].mxu0
        %v1540 = vadd.f32 %v1294, %v1539
        %v1541 = vpop.f32.mrb[0].mxu0
        %v1542 = vadd.f32 %v1298, %v1541
        %1543 = vmatprep.mubr.f32.mxu0 %v1143
        %1544 = vmatmul.mubr.f32.gmra.mrb[0].mxu0 %v983
        %v1545 = vpop.f32.mrb[0].mxu0
        %v1546 = vadd.f32 %v1294, %v1545
        %v1547 = vpop.f32.mrb[0].mxu0
        %v1548 = vadd.f32 %v1298, %v1547
        %1549 = vmatprep.mubr.f32.mxu0 %v1148
        %1550 = vmatmul.mubr.f32.gmra.mrb[0].mxu0 %v988
        %v1551 = vpop.f32.mrb[0].mxu0
        %v1552 = vadd.f32 %v1294, %v1551
        %v1553 = vpop.f32.mrb[0].mxu0
        %v1554 = vadd.f32 %v1298, %v1553
        %1555 = vmatprep.mubr.f32.mxu0 %v1153
        %1556 = vmatmul.mubr.f32.gmra.mrb[0].mxu0 %v993
        %v1557 = vpop.f32.mrb[0].mxu0
        %v1558 = vadd.f32 %v1294, %v1557
        %v1559 = vpop.f32.mrb[0].mxu0
        %v1560 = vadd.f32 %v1298, %v1559
        %1561 = vmatprep.mubr.f32.mxu0 %v1158
        %1562 = vmatmul.mubr.f32.gmra.mrb[0].mxu0 %v998
        %v1563 = vpop.f32.mrb[0].mxu0
        %v1564 = vadd.f32 %v1294, %v1563
        %v1565 = vpop.f32.mrb[0].mxu0
        %v1566 = vadd.f32 %v1298, %v1565
        %1567 = vdwg.mxu0
        %1568 = vmatprep.subr.mxu0 %v1164
        %1569 = vmatpush1.msra.mxu0 %v1163
        %1570 = vmatprep.subr.mxu0 %v1168
        %1571 = vmatpush1.msra.mxu0 %v1167
        %1572 = vmatprep.subr.mxu0 %v1172
        %1573 = vmatpush1.msra.mxu0 %v1171
        %1574 = vmatprep.subr.mxu0 %v1176
        %1575 = vmatpush1.msra.mxu0 %v1175
        %1576 = vmatprep.subr.mxu0 %v1180
        %1577 = vmatpush1.msra.mxu0 %v1179
        %1578 = vmatprep.subr.mxu0 %v1184
        %1579 = vmatpush1.msra.mxu0 %v1183
        %1580 = vmatprep.subr.mxu0 %v1188
        %1581 = vmatpush1.msra.mxu0 %v1187
        %1582 = vmatprep.subr.mxu0 %v1192
        %1583 = vmatpush1.msra.mxu0 %v1191
        %1584 = vmatprep.subr.mxu0 %v1196
        %1585 = vmatpush1.msra.mxu0 %v1195
        %1586 = vmatprep.subr.mxu0 %v1200
        %1587 = vmatpush1.msra.mxu0 %v1199
        %1588 = vmatprep.subr.mxu0 %v1204
        %1589 = vmatpush1.msra.mxu0 %v1203
        %1590 = vmatprep.subr.mxu0 %v1208
        %1591 = vmatpush1.msra.mxu0 %v1207
        %1592 = vmatprep.subr.mxu0 %v1212
        %1593 = vmatpush1.msra.mxu0 %v1211
        %1594 = vmatprep.subr.mxu0 %v1216
        %1595 = vmatpush1.msra.mxu0 %v1215
        %1596 = vmatprep.subr.mxu0 %v1220
        %1597 = vmatpush1.msra.mxu0 %v1219
        %1598 = vmatprep.subr.mxu0 %v1224
        %1599 = vmatpush1.msra.mxu0 %v1223
        %1600 = vmatprep.subr.mxu0 %v1228
        %1601 = vmatpush1.msra.mxu0 %v1227
        %1602 = vmatprep.subr.mxu0 %v1232
        %1603 = vmatpush1.msra.mxu0 %v1231
        %1604 = vmatprep.subr.mxu0 %v1236
        %1605 = vmatpush1.msra.mxu0 %v1235
        %1606 = vmatprep.subr.mxu0 %v1240
        %1607 = vmatpush1.msra.mxu0 %v1239
        %1608 = vmatprep.subr.mxu0 %v1244
        %1609 = vmatpush1.msra.mxu0 %v1243
        %1610 = vmatprep.subr.mxu0 %v1248
        %1611 = vmatpush1.msra.mxu0 %v1247
        %1612 = vmatprep.subr.mxu0 %v1252
        %1613 = vmatpush1.msra.mxu0 %v1251
        %1614 = vmatprep.subr.mxu0 %v1256
        %1615 = vmatpush1.msra.mxu0 %v1255
        %1616 = vmatprep.subr.mxu0 %v1260
        %1617 = vmatpush1.msra.mxu0 %v1259
        %1618 = vmatprep.subr.mxu0 %v1264
        %1619 = vmatpush1.msra.mxu0 %v1263
        %1620 = vmatprep.subr.mxu0 %v1268
        %1621 = vmatpush1.msra.mxu0 %v1267
        %1622 = vmatprep.subr.mxu0 %v1272
        %1623 = vmatpush1.msra.mxu0 %v1271
        %1624 = vmatprep.subr.mxu0 %v1276
        %1625 = vmatpush1.msra.mxu0 %v1275
        %1626 = vmatprep.subr.mxu0 %v1280
        %1627 = vmatpush1.msra.mxu0 %v1279
        %1628 = vmatprep.subr.mxu0 %v1284
        %1629 = vmatpush1.msra.mxu0 %v1283
        %1630 = vmatprep.subr.mxu0 %v1288
        %1631 = vmatpush1.msra.mxu0 %v1287
        %1632 = vmatprep.mubr.f32.mxu0 %v1003
        %1633 = vmatmul.mubr.f32.gmra.mrb[0].mxu0 %v843
        %v1634 = vpop.f32.mrb[0].mxu0
        %v1635 = vadd.f32 %v1302, %v1634
        %v1636 = vpop.f32.mrb[0].mxu0
        %v1637 = vadd.f32 %v1306, %v1636
        %1638 = vmatprep.mubr.f32.mxu0 %v1008
        %1639 = vmatmul.mubr.f32.gmra.mrb[0].mxu0 %v848
        %v1640 = vpop.f32.mrb[0].mxu0
        %v1641 = vadd.f32 %v1302, %v1640
        %v1642 = vpop.f32.mrb[0].mxu0
        %v1643 = vadd.f32 %v1306, %v1642
        %1644 = vmatprep.mubr.f32.mxu0 %v1013
        %1645 = vmatmul.mubr.f32.gmra.mrb[0].mxu0 %v853
        %v1646 = vpop.f32.mrb[0].mxu0
        %v1647 = vadd.f32 %v1302, %v1646
        %v1648 = vpop.f32.mrb[0].mxu0
        %v1649 = vadd.f32 %v1306, %v1648
        %1650 = vmatprep.mubr.f32.mxu0 %v1018
        %1651 = vmatmul.mubr.f32.gmra.mrb[0].mxu0 %v858
        %v1652 = vpop.f32.mrb[0].mxu0
        %v1653 = vadd.f32 %v1302, %v1652
        %v1654 = vpop.f32.mrb[0].mxu0
        %v1655 = vadd.f32 %v1306, %v1654
        %1656 = vmatprep.mubr.f32.mxu0 %v1023
        %1657 = vmatmul.mubr.f32.gmra.mrb[0].mxu0 %v863
        %v1658 = vpop.f32.mrb[0].mxu0
        %v1659 = vadd.f32 %v1302, %v1658
        %v1660 = vpop.f32.mrb[0].mxu0
        %v1661 = vadd.f32 %v1306, %v1660
        %1662 = vmatprep.mubr.f32.mxu0 %v1028
        %1663 = vmatmul.mubr.f32.gmra.mrb[0].mxu0 %v868
        %v1664 = vpop.f32.mrb[0].mxu0
        %v1665 = vadd.f32 %v1302, %v1664
        %v1666 = vpop.f32.mrb[0].mxu0
        %v1667 = vadd.f32 %v1306, %v1666
        %1668 = vmatprep.mubr.f32.mxu0 %v1033
        %1669 = vmatmul.mubr.f32.gmra.mrb[0].mxu0 %v873
        %v1670 = vpop.f32.mrb[0].mxu0
        %v1671 = vadd.f32 %v1302, %v1670
        %v1672 = vpop.f32.mrb[0].mxu0
        %v1673 = vadd.f32 %v1306, %v1672
        %1674 = vmatprep.mubr.f32.mxu0 %v1038
        %1675 = vmatmul.mubr.f32.gmra.mrb[0].mxu0 %v878
        %v1676 = vpop.f32.mrb[0].mxu0
        %v1677 = vadd.f32 %v1302, %v1676
        %v1678 = vpop.f32.mrb[0].mxu0
        %v1679 = vadd.f32 %v1306, %v1678
        %1680 = vmatprep.mubr.f32.mxu0 %v1043
        %1681 = vmatmul.mubr.f32.gmra.mrb[0].mxu0 %v883
        %v1682 = vpop.f32.mrb[0].mxu0
        %v1683 = vadd.f32 %v1302, %v1682
        %v1684 = vpop.f32.mrb[0].mxu0
        %v1685 = vadd.f32 %v1306, %v1684
        %1686 = vmatprep.mubr.f32.mxu0 %v1048
        %1687 = vmatmul.mubr.f32.gmra.mrb[0].mxu0 %v888
        %v1688 = vpop.f32.mrb[0].mxu0
        %v1689 = vadd.f32 %v1302, %v1688
        %v1690 = vpop.f32.mrb[0].mxu0
        %v1691 = vadd.f32 %v1306, %v1690
        %1692 = vmatprep.mubr.f32.mxu0 %v1053
        %1693 = vmatmul.mubr.f32.gmra.mrb[0].mxu0 %v893
        %v1694 = vpop.f32.mrb[0].mxu0
        %v1695 = vadd.f32 %v1302, %v1694
        %v1696 = vpop.f32.mrb[0].mxu0
        %v1697 = vadd.f32 %v1306, %v1696
        %1698 = vmatprep.mubr.f32.mxu0 %v1058
        %1699 = vmatmul.mubr.f32.gmra.mrb[0].mxu0 %v898
        %v1700 = vpop.f32.mrb[0].mxu0
        %v1701 = vadd.f32 %v1302, %v1700
        %v1702 = vpop.f32.mrb[0].mxu0
        %v1703 = vadd.f32 %v1306, %v1702
        %1704 = vmatprep.mubr.f32.mxu0 %v1063
        %1705 = vmatmul.mubr.f32.gmra.mrb[0].mxu0 %v903
        %v1706 = vpop.f32.mrb[0].mxu0
        %v1707 = vadd.f32 %v1302, %v1706
        %v1708 = vpop.f32.mrb[0].mxu0
        %v1709 = vadd.f32 %v1306, %v1708
        %1710 = vmatprep.mubr.f32.mxu0 %v1068
        %1711 = vmatmul.mubr.f32.gmra.mrb[0].mxu0 %v908
        %v1712 = vpop.f32.mrb[0].mxu0
        %v1713 = vadd.f32 %v1302, %v1712
        %v1714 = vpop.f32.mrb[0].mxu0
        %v1715 = vadd.f32 %v1306, %v1714
        %1716 = vmatprep.mubr.f32.mxu0 %v1073
        %1717 = vmatmul.mubr.f32.gmra.mrb[0].mxu0 %v913
        %v1718 = vpop.f32.mrb[0].mxu0
        %v1719 = vadd.f32 %v1302, %v1718
        %v1720 = vpop.f32.mrb[0].mxu0
        %v1721 = vadd.f32 %v1306, %v1720
        %1722 = vmatprep.mubr.f32.mxu0 %v1078
        %1723 = vmatmul.mubr.f32.gmra.mrb[0].mxu0 %v918
        %v1724 = vpop.f32.mrb[0].mxu0
        %v1725 = vadd.f32 %v1302, %v1724
        %v1726 = vpop.f32.mrb[0].mxu0
        %v1727 = vadd.f32 %v1306, %v1726
        %1728 = vmatprep.mubr.f32.mxu0 %v1083
        %1729 = vmatmul.mubr.f32.gmra.mrb[0].mxu0 %v923
        %v1730 = vpop.f32.mrb[0].mxu0
        %v1731 = vadd.f32 %v1302, %v1730
        %v1732 = vpop.f32.mrb[0].mxu0
        %v1733 = vadd.f32 %v1306, %v1732
        %1734 = vmatprep.mubr.f32.mxu0 %v1088
        %1735 = vmatmul.mubr.f32.gmra.mrb[0].mxu0 %v928
        %v1736 = vpop.f32.mrb[0].mxu0
        %v1737 = vadd.f32 %v1302, %v1736
        %v1738 = vpop.f32.mrb[0].mxu0
        %v1739 = vadd.f32 %v1306, %v1738
        %1740 = vmatprep.mubr.f32.mxu0 %v1093
        %1741 = vmatmul.mubr.f32.gmra.mrb[0].mxu0 %v933
        %v1742 = vpop.f32.mrb[0].mxu0
        %v1743 = vadd.f32 %v1302, %v1742
        %v1744 = vpop.f32.mrb[0].mxu0
        %v1745 = vadd.f32 %v1306, %v1744
        %1746 = vmatprep.mubr.f32.mxu0 %v1098
        %1747 = vmatmul.mubr.f32.gmra.mrb[0].mxu0 %v938
        %v1748 = vpop.f32.mrb[0].mxu0
        %v1749 = vadd.f32 %v1302, %v1748
        %v1750 = vpop.f32.mrb[0].mxu0
        %v1751 = vadd.f32 %v1306, %v1750
        %1752 = vmatprep.mubr.f32.mxu0 %v1103
        %1753 = vmatmul.mubr.f32.gmra.mrb[0].mxu0 %v943
        %v1754 = vpop.f32.mrb[0].mxu0
        %v1755 = vadd.f32 %v1302, %v1754
        %v1756 = vpop.f32.mrb[0].mxu0
        %v1757 = vadd.f32 %v1306, %v1756
        %1758 = vmatprep.mubr.f32.mxu0 %v1108
        %1759 = vmatmul.mubr.f32.gmra.mrb[0].mxu0 %v948
        %v1760 = vpop.f32.mrb[0].mxu0
        %v1761 = vadd.f32 %v1302, %v1760
        %v1762 = vpop.f32.mrb[0].mxu0
        %v1763 = vadd.f32 %v1306, %v1762
        %1764 = vmatprep.mubr.f32.mxu0 %v1113
        %1765 = vmatmul.mubr.f32.gmra.mrb[0].mxu0 %v953
        %v1766 = vpop.f32.mrb[0].mxu0
        %v1767 = vadd.f32 %v1302, %v1766
        %v1768 = vpop.f32.mrb[0].mxu0
        %v1769 = vadd.f32 %v1306, %v1768
        %1770 = vmatprep.mubr.f32.mxu0 %v1118
        %1771 = vmatmul.mubr.f32.gmra.mrb[0].mxu0 %v958
        %v1772 = vpop.f32.mrb[0].mxu0
        %v1773 = vadd.f32 %v1302, %v1772
        %v1774 = vpop.f32.mrb[0].mxu0
        %v1775 = vadd.f32 %v1306, %v1774
        %1776 = vmatprep.mubr.f32.mxu0 %v1123
        %1777 = vmatmul.mubr.f32.gmra.mrb[0].mxu0 %v963
        %v1778 = vpop.f32.mrb[0].mxu0
        %v1779 = vadd.f32 %v1302, %v1778
        %v1780 = vpop.f32.mrb[0].mxu0
        %v1781 = vadd.f32 %v1306, %v1780
        %1782 = vmatprep.mubr.f32.mxu0 %v1128
        %1783 = vmatmul.mubr.f32.gmra.mrb[0].mxu0 %v968
        %v1784 = vpop.f32.mrb[0].mxu0
        %v1785 = vadd.f32 %v1302, %v1784
        %v1786 = vpop.f32.mrb[0].mxu0
        %v1787 = vadd.f32 %v1306, %v1786
        %1788 = vmatprep.mubr.f32.mxu0 %v1133
        %1789 = vmatmul.mubr.f32.gmra.mrb[0].mxu0 %v973
        %v1790 = vpop.f32.mrb[0].mxu0
        %v1791 = vadd.f32 %v1302, %v1790
        %v1792 = vpop.f32.mrb[0].mxu0
        %v1793 = vadd.f32 %v1306, %v1792
        %1794 = vmatprep.mubr.f32.mxu0 %v1138
        %1795 = vmatmul.mubr.f32.gmra.mrb[0].mxu0 %v978
        %v1796 = vpop.f32.mrb[0].mxu0
        %v1797 = vadd.f32 %v1302, %v1796
        %v1798 = vpop.f32.mrb[0].mxu0
        %v1799 = vadd.f32 %v1306, %v1798
        %1800 = vmatprep.mubr.f32.mxu0 %v1143
        %1801 = vmatmul.mubr.f32.gmra.mrb[0].mxu0 %v983
        %v1802 = vpop.f32.mrb[0].mxu0
        %v1803 = vadd.f32 %v1302, %v1802
        %v1804 = vpop.f32.mrb[0].mxu0
        %v1805 = vadd.f32 %v1306, %v1804
        %1806 = vmatprep.mubr.f32.mxu0 %v1148
        %1807 = vmatmul.mubr.f32.gmra.mrb[0].mxu0 %v988
        %v1808 = vpop.f32.mrb[0].mxu0
        %v1809 = vadd.f32 %v1302, %v1808
        %v1810 = vpop.f32.mrb[0].mxu0
        %v1811 = vadd.f32 %v1306, %v1810
        %1812 = vmatprep.mubr.f32.mxu0 %v1153
        %1813 = vmatmul.mubr.f32.gmra.mrb[0].mxu0 %v993
        %v1814 = vpop.f32.mrb[0].mxu0
        %v1815 = vadd.f32 %v1302, %v1814
        %v1816 = vpop.f32.mrb[0].mxu0
        %v1817 = vadd.f32 %v1306, %v1816
        %1818 = vmatprep.mubr.f32.mxu0 %v1158
        %1819 = vmatmul.mubr.f32.gmra.mrb[0].mxu0 %v998
        %v1820 = vpop.f32.mrb[0].mxu0
        %v1821 = vadd.f32 %v1302, %v1820
        %v1822 = vpop.f32.mrb[0].mxu0
        %v1823 = vadd.f32 %v1306, %v1822
        %1824 = vdwg.mxu0
        %v1825 = vmul.f32 %v1378, 0.5
        %v1826 = vmul.f32 %v1384, 0.5
        %v1827 = vmul.f32 %v1390, 0.5
        %v1828 = vmul.f32 %v1396, 0.5
        %v1829 = vmul.f32 %v1402, 0.5
        %v1830 = vmul.f32 %v1408, 0.5
        %v1831 = vmul.f32 %v1414, 0.5
        %v1832 = vmul.f32 %v1420, 0.5
        %v1833 = vmul.f32 %v1426, 0.5
        %v1834 = vmul.f32 %v1432, 0.5
        %v1835 = vmul.f32 %v1438, 0.5
        %v1836 = vmul.f32 %v1444, 0.5
        %v1837 = vmul.f32 %v1450, 0.5
        %v1838 = vmul.f32 %v1456, 0.5
        %v1839 = vmul.f32 %v1462, 0.5
        %v1840 = vmul.f32 %v1468, 0.5
        %v1841 = vmul.f32 %v1474, 0.5
        %v1842 = vmul.f32 %v1480, 0.5
        %v1843 = vmul.f32 %v1486, 0.5
        %v1844 = vmul.f32 %v1492, 0.5
        %v1845 = vmul.f32 %v1498, 0.5
        %v1846 = vmul.f32 %v1504, 0.5
        %v1847 = vmul.f32 %v1510, 0.5
        %v1848 = vmul.f32 %v1516, 0.5
        %v1849 = vmul.f32 %v1522, 0.5
        %v1850 = vmul.f32 %v1528, 0.5
        %v1851 = vmul.f32 %v1534, 0.5
        %v1852 = vmul.f32 %v1540, 0.5
        %v1853 = vmul.f32 %v1546, 0.5
        %v1854 = vmul.f32 %v1552, 0.5
        %v1855 = vmul.f32 %v1558, 0.5
        %v1856 = vmul.f32 %v1564, 0.5
        %v1857 = vtanh.pop %v1825
        %v1858 = vtanh.pop %v1826
        %v1859 = vtanh.pop %v1827
        %v1860 = vtanh.pop %v1828
        %v1861 = vtanh.pop %v1829
        %v1862 = vtanh.pop %v1830
        %v1863 = vtanh.pop %v1831
        %v1864 = vtanh.pop %v1832
        %v1865 = vtanh.pop %v1833
        %v1866 = vtanh.pop %v1834
        %v1867 = vtanh.pop %v1835
        %v1868 = vtanh.pop %v1836
        %v1869 = vtanh.pop %v1837
        %v1870 = vtanh.pop %v1838
        %v1871 = vtanh.pop %v1839
        %v1872 = vtanh.pop %v1840
        %v1873 = vtanh.pop %v1841
        %v1874 = vtanh.pop %v1842
        %v1875 = vtanh.pop %v1843
        %v1876 = vtanh.pop %v1844
        %v1877 = vtanh.pop %v1845
        %v1878 = vtanh.pop %v1846
        %v1879 = vtanh.pop %v1847
        %v1880 = vtanh.pop %v1848
        %v1881 = vtanh.pop %v1849
        %v1882 = vtanh.pop %v1850
        %v1883 = vtanh.pop %v1851
        %v1884 = vtanh.pop %v1852
        %v1885 = vtanh.pop %v1853
        %v1886 = vtanh.pop %v1854
        %v1887 = vtanh.pop %v1855
        %v1888 = vtanh.pop %v1856
        %v1889 = vmul.f32 %v1857, 0.5
        %v1890 = vmul.f32 %v1858, 0.5
        %v1891 = vmul.f32 %v1859, 0.5
        %v1892 = vmul.f32 %v1860, 0.5
        %v1893 = vmul.f32 %v1861, 0.5
        %v1894 = vmul.f32 %v1862, 0.5
        %v1895 = vmul.f32 %v1863, 0.5
        %v1896 = vmul.f32 %v1864, 0.5
        %v1897 = vmul.f32 %v1865, 0.5
        %v1898 = vmul.f32 %v1866, 0.5
        %v1899 = vmul.f32 %v1867, 0.5
        %v1900 = vmul.f32 %v1868, 0.5
        %v1901 = vmul.f32 %v1869, 0.5
        %v1902 = vmul.f32 %v1870, 0.5
        %v1903 = vmul.f32 %v1871, 0.5
        %v1904 = vmul.f32 %v1872, 0.5
        %v1905 = vmul.f32 %v1873, 0.5
        %v1906 = vmul.f32 %v1874, 0.5
        %v1907 = vmul.f32 %v1875, 0.5
        %v1908 = vmul.f32 %v1876, 0.5
        %v1909 = vmul.f32 %v1877, 0.5
        %v1910 = vmul.f32 %v1878, 0.5
        %v1911 = vmul.f32 %v1879, 0.5
        %v1912 = vmul.f32 %v1880, 0.5
        %v1913 = vmul.f32 %v1881, 0.5
        %v1914 = vmul.f32 %v1882, 0.5
        %v1915 = vmul.f32 %v1883, 0.5
        %v1916 = vmul.f32 %v1884, 0.5
        %v1917 = vmul.f32 %v1885, 0.5
        %v1918 = vmul.f32 %v1886, 0.5
        %v1919 = vmul.f32 %v1887, 0.5
        %v1920 = vmul.f32 %v1888, 0.5
        %v1921 = vadd.f32 %v1889, 0.5
        %v1922 = vadd.f32 %v1890, 0.5
        %v1923 = vadd.f32 %v1891, 0.5
        %v1924 = vadd.f32 %v1892, 0.5
        %v1925 = vadd.f32 %v1893, 0.5
        %v1926 = vadd.f32 %v1894, 0.5
        %v1927 = vadd.f32 %v1895, 0.5
        %v1928 = vadd.f32 %v1896, 0.5
        %v1929 = vadd.f32 %v1897, 0.5
        %v1930 = vadd.f32 %v1898, 0.5
        %v1931 = vadd.f32 %v1899, 0.5
        %v1932 = vadd.f32 %v1900, 0.5
        %v1933 = vadd.f32 %v1901, 0.5
        %v1934 = vadd.f32 %v1902, 0.5
        %v1935 = vadd.f32 %v1903, 0.5
        %v1936 = vadd.f32 %v1904, 0.5
        %v1937 = vadd.f32 %v1905, 0.5
        %v1938 = vadd.f32 %v1906, 0.5
        %v1939 = vadd.f32 %v1907, 0.5
        %v1940 = vadd.f32 %v1908, 0.5
        %v1941 = vadd.f32 %v1909, 0.5
        %v1942 = vadd.f32 %v1910, 0.5
        %v1943 = vadd.f32 %v1911, 0.5
        %v1944 = vadd.f32 %v1912, 0.5
        %v1945 = vadd.f32 %v1913, 0.5
        %v1946 = vadd.f32 %v1914, 0.5
        %v1947 = vadd.f32 %v1915, 0.5
        %v1948 = vadd.f32 %v1916, 0.5
        %v1949 = vadd.f32 %v1917, 0.5
        %v1950 = vadd.f32 %v1918, 0.5
        %v1951 = vadd.f32 %v1919, 0.5
        %v1952 = vadd.f32 %v1920, 0.5
        %v1953 = vmul.f32 %v1380, 0.5
        %v1954 = vmul.f32 %v1386, 0.5
        %v1955 = vmul.f32 %v1392, 0.5
        %v1956 = vmul.f32 %v1398, 0.5
        %v1957 = vmul.f32 %v1404, 0.5
        %v1958 = vmul.f32 %v1410, 0.5
        %v1959 = vmul.f32 %v1416, 0.5
        %v1960 = vmul.f32 %v1422, 0.5
        %v1961 = vmul.f32 %v1428, 0.5
        %v1962 = vmul.f32 %v1434, 0.5
        %v1963 = vmul.f32 %v1440, 0.5
        %v1964 = vmul.f32 %v1446, 0.5
        %v1965 = vmul.f32 %v1452, 0.5
        %v1966 = vmul.f32 %v1458, 0.5
        %v1967 = vmul.f32 %v1464, 0.5
        %v1968 = vmul.f32 %v1470, 0.5
        %v1969 = vmul.f32 %v1476, 0.5
        %v1970 = vmul.f32 %v1482, 0.5
        %v1971 = vmul.f32 %v1488, 0.5
        %v1972 = vmul.f32 %v1494, 0.5
        %v1973 = vmul.f32 %v1500, 0.5
        %v1974 = vmul.f32 %v1506, 0.5
        %v1975 = vmul.f32 %v1512, 0.5
        %v1976 = vmul.f32 %v1518, 0.5
        %v1977 = vmul.f32 %v1524, 0.5
        %v1978 = vmul.f32 %v1530, 0.5
        %v1979 = vmul.f32 %v1536, 0.5
        %v1980 = vmul.f32 %v1542, 0.5
        %v1981 = vmul.f32 %v1548, 0.5
        %v1982 = vmul.f32 %v1554, 0.5
        %v1983 = vmul.f32 %v1560, 0.5
        %v1984 = vmul.f32 %v1566, 0.5
        %v1985 = vtanh.pop %v1953
        %v1986 = vtanh.pop %v1954
        %v1987 = vtanh.pop %v1955
        %v1988 = vtanh.pop %v1956
        %v1989 = vtanh.pop %v1957
        %v1990 = vtanh.pop %v1958
        %v1991 = vtanh.pop %v1959
        %v1992 = vtanh.pop %v1960
        %v1993 = vtanh.pop %v1961
        %v1994 = vtanh.pop %v1962
        %v1995 = vtanh.pop %v1963
        %v1996 = vtanh.pop %v1964
        %v1997 = vtanh.pop %v1965
        %v1998 = vtanh.pop %v1966
        %v1999 = vtanh.pop %v1967
        %v2000 = vtanh.pop %v1968
        %v2001 = vtanh.pop %v1969
        %v2002 = vtanh.pop %v1970
        %v2003 = vtanh.pop %v1971
        %v2004 = vtanh.pop %v1972
        %v2005 = vtanh.pop %v1973
        %v2006 = vtanh.pop %v1974
        %v2007 = vtanh.pop %v1975
        %v2008 = vtanh.pop %v1976
        %v2009 = vtanh.pop %v1977
        %v2010 = vtanh.pop %v1978
        %v2011 = vtanh.pop %v1979
        %v2012 = vtanh.pop %v1980
        %v2013 = vtanh.pop %v1981
        %v2014 = vtanh.pop %v1982
        %v2015 = vtanh.pop %v1983
        %v2016 = vtanh.pop %v1984
        %v2017 = vmul.f32 %v1985, 0.5
        %v2018 = vmul.f32 %v1986, 0.5
        %v2019 = vmul.f32 %v1987, 0.5
        %v2020 = vmul.f32 %v1988, 0.5
        %v2021 = vmul.f32 %v1989, 0.5
        %v2022 = vmul.f32 %v1990, 0.5
        %v2023 = vmul.f32 %v1991, 0.5
        %v2024 = vmul.f32 %v1992, 0.5
        %v2025 = vmul.f32 %v1993, 0.5
        %v2026 = vmul.f32 %v1994, 0.5
        %v2027 = vmul.f32 %v1995, 0.5
        %v2028 = vmul.f32 %v1996, 0.5
        %v2029 = vmul.f32 %v1997, 0.5
        %v2030 = vmul.f32 %v1998, 0.5
        %v2031 = vmul.f32 %v1999, 0.5
        %v2032 = vmul.f32 %v2000, 0.5
        %v2033 = vmul.f32 %v2001, 0.5
        %v2034 = vmul.f32 %v2002, 0.5
        %v2035 = vmul.f32 %v2003, 0.5
        %v2036 = vmul.f32 %v2004, 0.5
        %v2037 = vmul.f32 %v2005, 0.5
        %v2038 = vmul.f32 %v2006, 0.5
        %v2039 = vmul.f32 %v2007, 0.5
        %v2040 = vmul.f32 %v2008, 0.5
        %v2041 = vmul.f32 %v2009, 0.5
        %v2042 = vmul.f32 %v2010, 0.5
        %v2043 = vmul.f32 %v2011, 0.5
        %v2044 = vmul.f32 %v2012, 0.5
        %v2045 = vmul.f32 %v2013, 0.5
        %v2046 = vmul.f32 %v2014, 0.5
        %v2047 = vmul.f32 %v2015, 0.5
        %v2048 = vmul.f32 %v2016, 0.5
        %v2049 = vadd.f32 %v2017, 0.5
        %v2050 = vadd.f32 %v2018, 0.5
        %v2051 = vadd.f32 %v2019, 0.5
        %v2052 = vadd.f32 %v2020, 0.5
        %v2053 = vadd.f32 %v2021, 0.5
        %v2054 = vadd.f32 %v2022, 0.5
        %v2055 = vadd.f32 %v2023, 0.5
        %v2056 = vadd.f32 %v2024, 0.5
        %v2057 = vadd.f32 %v2025, 0.5
        %v2058 = vadd.f32 %v2026, 0.5
        %v2059 = vadd.f32 %v2027, 0.5
        %v2060 = vadd.f32 %v2028, 0.5
        %v2061 = vadd.f32 %v2029, 0.5
        %v2062 = vadd.f32 %v2030, 0.5
        %v2063 = vadd.f32 %v2031, 0.5
        %v2064 = vadd.f32 %v2032, 0.5
        %v2065 = vadd.f32 %v2033, 0.5
        %v2066 = vadd.f32 %v2034, 0.5
        %v2067 = vadd.f32 %v2035, 0.5
        %v2068 = vadd.f32 %v2036, 0.5
        %v2069 = vadd.f32 %v2037, 0.5
        %v2070 = vadd.f32 %v2038, 0.5
        %v2071 = vadd.f32 %v2039, 0.5
        %v2072 = vadd.f32 %v2040, 0.5
        %v2073 = vadd.f32 %v2041, 0.5
        %v2074 = vadd.f32 %v2042, 0.5
        %v2075 = vadd.f32 %v2043, 0.5
        %v2076 = vadd.f32 %v2044, 0.5
        %v2077 = vadd.f32 %v2045, 0.5
        %v2078 = vadd.f32 %v2046, 0.5
        %v2079 = vadd.f32 %v2047, 0.5
        %v2080 = vadd.f32 %v2048, 0.5
        %v2081 = vtanh.pop %v1635
        %v2082 = vtanh.pop %v1641
        %v2083 = vtanh.pop %v1647
        %v2084 = vtanh.pop %v1653
        %v2085 = vtanh.pop %v1659
        %v2086 = vtanh.pop %v1665
        %v2087 = vtanh.pop %v1671
        %v2088 = vtanh.pop %v1677
        %v2089 = vtanh.pop %v1683
        %v2090 = vtanh.pop %v1689
        %v2091 = vtanh.pop %v1695
        %v2092 = vtanh.pop %v1701
        %v2093 = vtanh.pop %v1707
        %v2094 = vtanh.pop %v1713
        %v2095 = vtanh.pop %v1719
        %v2096 = vtanh.pop %v1725
        %v2097 = vtanh.pop %v1731
        %v2098 = vtanh.pop %v1737
        %v2099 = vtanh.pop %v1743
        %v2100 = vtanh.pop %v1749
        %v2101 = vtanh.pop %v1755
        %v2102 = vtanh.pop %v1761
        %v2103 = vtanh.pop %v1767
        %v2104 = vtanh.pop %v1773
        %v2105 = vtanh.pop %v1779
        %v2106 = vtanh.pop %v1785
        %v2107 = vtanh.pop %v1791
        %v2108 = vtanh.pop %v1797
        %v2109 = vtanh.pop %v1803
        %v2110 = vtanh.pop %v1809
        %v2111 = vtanh.pop %v1815
        %v2112 = vtanh.pop %v1821
        %v2113 = vmul.f32 %v1637, 0.5
        %v2114 = vmul.f32 %v1643, 0.5
        %v2115 = vmul.f32 %v1649, 0.5
        %v2116 = vmul.f32 %v1655, 0.5
        %v2117 = vmul.f32 %v1661, 0.5
        %v2118 = vmul.f32 %v1667, 0.5
        %v2119 = vmul.f32 %v1673, 0.5
        %v2120 = vmul.f32 %v1679, 0.5
        %v2121 = vmul.f32 %v1685, 0.5
        %v2122 = vmul.f32 %v1691, 0.5
        %v2123 = vmul.f32 %v1697, 0.5
        %v2124 = vmul.f32 %v1703, 0.5
        %v2125 = vmul.f32 %v1709, 0.5
        %v2126 = vmul.f32 %v1715, 0.5
        %v2127 = vmul.f32 %v1721, 0.5
        %v2128 = vmul.f32 %v1727, 0.5
        %v2129 = vmul.f32 %v1733, 0.5
        %v2130 = vmul.f32 %v1739, 0.5
        %v2131 = vmul.f32 %v1745, 0.5
        %v2132 = vmul.f32 %v1751, 0.5
        %v2133 = vmul.f32 %v1757, 0.5
        %v2134 = vmul.f32 %v1763, 0.5
        %v2135 = vmul.f32 %v1769, 0.5
        %v2136 = vmul.f32 %v1775, 0.5
        %v2137 = vmul.f32 %v1781, 0.5
        %v2138 = vmul.f32 %v1787, 0.5
        %v2139 = vmul.f32 %v1793, 0.5
        %v2140 = vmul.f32 %v1799, 0.5
        %v2141 = vmul.f32 %v1805, 0.5
        %v2142 = vmul.f32 %v1811, 0.5
        %v2143 = vmul.f32 %v1817, 0.5
        %v2144 = vmul.f32 %v1823, 0.5
        %v2145 = vtanh.pop %v2113
        %v2146 = vtanh.pop %v2114
        %v2147 = vtanh.pop %v2115
        %v2148 = vtanh.pop %v2116
        %v2149 = vtanh.pop %v2117
        %v2150 = vtanh.pop %v2118
        %v2151 = vtanh.pop %v2119
        %v2152 = vtanh.pop %v2120
        %v2153 = vtanh.pop %v2121
        %v2154 = vtanh.pop %v2122
        %v2155 = vtanh.pop %v2123
        %v2156 = vtanh.pop %v2124
        %v2157 = vtanh.pop %v2125
        %v2158 = vtanh.pop %v2126
        %v2159 = vtanh.pop %v2127
        %v2160 = vtanh.pop %v2128
        %v2161 = vtanh.pop %v2129
        %v2162 = vtanh.pop %v2130
        %v2163 = vtanh.pop %v2131
        %v2164 = vtanh.pop %v2132
        %v2165 = vtanh.pop %v2133
        %v2166 = vtanh.pop %v2134
        %v2167 = vtanh.pop %v2135
        %v2168 = vtanh.pop %v2136
        %v2169 = vtanh.pop %v2137
        %v2170 = vtanh.pop %v2138
        %v2171 = vtanh.pop %v2139
        %v2172 = vtanh.pop %v2140
        %v2173 = vtanh.pop %v2141
        %v2174 = vtanh.pop %v2142
        %v2175 = vtanh.pop %v2143
        %v2176 = vtanh.pop %v2144
        %v2177 = vmul.f32 %v2145, 0.5
        %v2178 = vmul.f32 %v2146, 0.5
        %v2179 = vmul.f32 %v2147, 0.5
        %v2180 = vmul.f32 %v2148, 0.5
        %v2181 = vmul.f32 %v2149, 0.5
        %v2182 = vmul.f32 %v2150, 0.5
        %v2183 = vmul.f32 %v2151, 0.5
        %v2184 = vmul.f32 %v2152, 0.5
        %v2185 = vmul.f32 %v2153, 0.5
        %v2186 = vmul.f32 %v2154, 0.5
        %v2187 = vmul.f32 %v2155, 0.5
        %v2188 = vmul.f32 %v2156, 0.5
        %v2189 = vmul.f32 %v2157, 0.5
        %v2190 = vmul.f32 %v2158, 0.5
        %v2191 = vmul.f32 %v2159, 0.5
        %v2192 = vmul.f32 %v2160, 0.5
        %v2193 = vmul.f32 %v2161, 0.5
        %v2194 = vmul.f32 %v2162, 0.5
        %v2195 = vmul.f32 %v2163, 0.5
        %v2196 = vmul.f32 %v2164, 0.5
        %v2197 = vmul.f32 %v2165, 0.5
        %v2198 = vmul.f32 %v2166, 0.5
        %v2199 = vmul.f32 %v2167, 0.5
        %v2200 = vmul.f32 %v2168, 0.5
        %v2201 = vmul.f32 %v2169, 0.5
        %v2202 = vmul.f32 %v2170, 0.5
        %v2203 = vmul.f32 %v2171, 0.5
        %v2204 = vmul.f32 %v2172, 0.5
        %v2205 = vmul.f32 %v2173, 0.5
        %v2206 = vmul.f32 %v2174, 0.5
        %v2207 = vmul.f32 %v2175, 0.5
        %v2208 = vmul.f32 %v2176, 0.5
        %v2209 = vadd.f32 %v2177, 0.5
        %v2210 = vadd.f32 %v2178, 0.5
        %v2211 = vadd.f32 %v2179, 0.5
        %v2212 = vadd.f32 %v2180, 0.5
        %v2213 = vadd.f32 %v2181, 0.5
        %v2214 = vadd.f32 %v2182, 0.5
        %v2215 = vadd.f32 %v2183, 0.5
        %v2216 = vadd.f32 %v2184, 0.5
        %v2217 = vadd.f32 %v2185, 0.5
        %v2218 = vadd.f32 %v2186, 0.5
        %v2219 = vadd.f32 %v2187, 0.5
        %v2220 = vadd.f32 %v2188, 0.5
        %v2221 = vadd.f32 %v2189, 0.5
        %v2222 = vadd.f32 %v2190, 0.5
        %v2223 = vadd.f32 %v2191, 0.5
        %v2224 = vadd.f32 %v2192, 0.5
        %v2225 = vadd.f32 %v2193, 0.5
        %v2226 = vadd.f32 %v2194, 0.5
        %v2227 = vadd.f32 %v2195, 0.5
        %v2228 = vadd.f32 %v2196, 0.5
        %v2229 = vadd.f32 %v2197, 0.5
        %v2230 = vadd.f32 %v2198, 0.5
        %v2231 = vadd.f32 %v2199, 0.5
        %v2232 = vadd.f32 %v2200, 0.5
        %v2233 = vadd.f32 %v2201, 0.5
        %v2234 = vadd.f32 %v2202, 0.5
        %v2235 = vadd.f32 %v2203, 0.5
        %v2236 = vadd.f32 %v2204, 0.5
        %v2237 = vadd.f32 %v2205, 0.5
        %v2238 = vadd.f32 %v2206, 0.5
        %v2239 = vadd.f32 %v2207, 0.5
        %v2240 = vadd.f32 %v2208, 0.5
        %v2241 = vmul.f32 %v2049, %v1003
        %v2242 = vmul.f32 %v2050, %v1008
        %v2243 = vmul.f32 %v2051, %v1013
        %v2244 = vmul.f32 %v2052, %v1018
        %v2245 = vmul.f32 %v2053, %v1023
        %v2246 = vmul.f32 %v2054, %v1028
        %v2247 = vmul.f32 %v2055, %v1033
        %v2248 = vmul.f32 %v2056, %v1038
        %v2249 = vmul.f32 %v2057, %v1043
        %v2250 = vmul.f32 %v2058, %v1048
        %v2251 = vmul.f32 %v2059, %v1053
        %v2252 = vmul.f32 %v2060, %v1058
        %v2253 = vmul.f32 %v2061, %v1063
        %v2254 = vmul.f32 %v2062, %v1068
        %v2255 = vmul.f32 %v2063, %v1073
        %v2256 = vmul.f32 %v2064, %v1078
        %v2257 = vmul.f32 %v2065, %v1083
        %v2258 = vmul.f32 %v2066, %v1088
        %v2259 = vmul.f32 %v2067, %v1093
        %v2260 = vmul.f32 %v2068, %v1098
        %v2261 = vmul.f32 %v2069, %v1103
        %v2262 = vmul.f32 %v2070, %v1108
        %v2263 = vmul.f32 %v2071, %v1113
        %v2264 = vmul.f32 %v2072, %v1118
        %v2265 = vmul.f32 %v2073, %v1123
        %v2266 = vmul.f32 %v2074, %v1128
        %v2267 = vmul.f32 %v2075, %v1133
        %v2268 = vmul.f32 %v2076, %v1138
        %v2269 = vmul.f32 %v2077, %v1143
        %v2270 = vmul.f32 %v2078, %v1148
        %v2271 = vmul.f32 %v2079, %v1153
        %v2272 = vmul.f32 %v2080, %v1158
        %v2273 = vmul.f32 %v1921, %v2081
        %v2274 = vmul.f32 %v1922, %v2082
        %v2275 = vmul.f32 %v1923, %v2083
        %v2276 = vmul.f32 %v1924, %v2084
        %v2277 = vmul.f32 %v1925, %v2085
        %v2278 = vmul.f32 %v1926, %v2086
        %v2279 = vmul.f32 %v1927, %v2087
        %v2280 = vmul.f32 %v1928, %v2088
        %v2281 = vmul.f32 %v1929, %v2089
        %v2282 = vmul.f32 %v1930, %v2090
        %v2283 = vmul.f32 %v1931, %v2091
        %v2284 = vmul.f32 %v1932, %v2092
        %v2285 = vmul.f32 %v1933, %v2093
        %v2286 = vmul.f32 %v1934, %v2094
        %v2287 = vmul.f32 %v1935, %v2095
        %v2288 = vmul.f32 %v1936, %v2096
        %v2289 = vmul.f32 %v1937, %v2097
        %v2290 = vmul.f32 %v1938, %v2098
        %v2291 = vmul.f32 %v1939, %v2099
        %v2292 = vmul.f32 %v1940, %v2100
        %v2293 = vmul.f32 %v1941, %v2101
        %v2294 = vmul.f32 %v1942, %v2102
        %v2295 = vmul.f32 %v1943, %v2103
        %v2296 = vmul.f32 %v1944, %v2104
        %v2297 = vmul.f32 %v1945, %v2105
        %v2298 = vmul.f32 %v1946, %v2106
        %v2299 = vmul.f32 %v1947, %v2107
        %v2300 = vmul.f32 %v1948, %v2108
        %v2301 = vmul.f32 %v1949, %v2109
        %v2302 = vmul.f32 %v1950, %v2110
        %v2303 = vmul.f32 %v1951, %v2111
        %v2304 = vmul.f32 %v1952, %v2112
        %v2305 = vadd.f32 %v2241, %v2273
        %v2306 = vadd.f32 %v2242, %v2274
        %v2307 = vadd.f32 %v2243, %v2275
        %v2308 = vadd.f32 %v2244, %v2276
        %v2309 = vadd.f32 %v2245, %v2277
        %v2310 = vadd.f32 %v2246, %v2278
        %v2311 = vadd.f32 %v2247, %v2279
        %v2312 = vadd.f32 %v2248, %v2280
        %v2313 = vadd.f32 %v2249, %v2281
        %v2314 = vadd.f32 %v2250, %v2282
        %v2315 = vadd.f32 %v2251, %v2283
        %v2316 = vadd.f32 %v2252, %v2284
        %v2317 = vadd.f32 %v2253, %v2285
        %v2318 = vadd.f32 %v2254, %v2286
        %v2319 = vadd.f32 %v2255, %v2287
        %v2320 = vadd.f32 %v2256, %v2288
        %v2321 = vadd.f32 %v2257, %v2289
        %v2322 = vadd.f32 %v2258, %v2290
        %v2323 = vadd.f32 %v2259, %v2291
        %v2324 = vadd.f32 %v2260, %v2292
        %v2325 = vadd.f32 %v2261, %v2293
        %v2326 = vadd.f32 %v2262, %v2294
        %v2327 = vadd.f32 %v2263, %v2295
        %v2328 = vadd.f32 %v2264, %v2296
        %v2329 = vadd.f32 %v2265, %v2297
        %v2330 = vadd.f32 %v2266, %v2298
        %v2331 = vadd.f32 %v2267, %v2299
        %v2332 = vadd.f32 %v2268, %v2300
        %v2333 = vadd.f32 %v2269, %v2301
        %v2334 = vadd.f32 %v2270, %v2302
        %v2335 = vadd.f32 %v2271, %v2303
        %v2336 = vadd.f32 %v2272, %v2304
        %v2337 = vtanh.pop %v2305
        %v2338 = vtanh.pop %v2306
        %v2339 = vtanh.pop %v2307
        %v2340 = vtanh.pop %v2308
        %v2341 = vtanh.pop %v2309
        %v2342 = vtanh.pop %v2310
        %v2343 = vtanh.pop %v2311
        %v2344 = vtanh.pop %v2312
        %v2345 = vtanh.pop %v2313
        %v2346 = vtanh.pop %v2314
        %v2347 = vtanh.pop %v2315
        %v2348 = vtanh.pop %v2316
        %v2349 = vtanh.pop %v2317
        %v2350 = vtanh.pop %v2318
        %v2351 = vtanh.pop %v2319
        %v2352 = vtanh.pop %v2320
        %v2353 = vtanh.pop %v2321
        %v2354 = vtanh.pop %v2322
        %v2355 = vtanh.pop %v2323
        %v2356 = vtanh.pop %v2324
        %v2357 = vtanh.pop %v2325
        %v2358 = vtanh.pop %v2326
        %v2359 = vtanh.pop %v2327
        %v2360 = vtanh.pop %v2328
        %v2361 = vtanh.pop %v2329
        %v2362 = vtanh.pop %v2330
        %v2363 = vtanh.pop %v2331
        %v2364 = vtanh.pop %v2332
        %v2365 = vtanh.pop %v2333
        %v2366 = vtanh.pop %v2334
        %v2367 = vtanh.pop %v2335
        %v2368 = vtanh.pop %v2336
        %v2369 = vmul.f32 %v2209, %v2337
        %v2370 = vmul.f32 %v2210, %v2338
        %v2371 = vmul.f32 %v2211, %v2339
        %v2372 = vmul.f32 %v2212, %v2340
        %v2373 = vmul.f32 %v2213, %v2341
        %v2374 = vmul.f32 %v2214, %v2342
        %v2375 = vmul.f32 %v2215, %v2343
        %v2376 = vmul.f32 %v2216, %v2344
        %v2377 = vmul.f32 %v2217, %v2345
        %v2378 = vmul.f32 %v2218, %v2346
        %v2379 = vmul.f32 %v2219, %v2347
        %v2380 = vmul.f32 %v2220, %v2348
        %v2381 = vmul.f32 %v2221, %v2349
        %v2382 = vmul.f32 %v2222, %v2350
        %v2383 = vmul.f32 %v2223, %v2351
        %v2384 = vmul.f32 %v2224, %v2352
        %v2385 = vmul.f32 %v2225, %v2353
        %v2386 = vmul.f32 %v2226, %v2354
        %v2387 = vmul.f32 %v2227, %v2355
        %v2388 = vmul.f32 %v2228, %v2356
        %v2389 = vmul.f32 %v2229, %v2357
        %v2390 = vmul.f32 %v2230, %v2358
        %v2391 = vmul.f32 %v2231, %v2359
        %v2392 = vmul.f32 %v2232, %v2360
        %v2393 = vmul.f32 %v2233, %v2361
        %v2394 = vmul.f32 %v2234, %v2362
        %v2395 = vmul.f32 %v2235, %v2363
        %v2396 = vmul.f32 %v2236, %v2364
        %v2397 = vmul.f32 %v2237, %v2365
        %v2398 = vmul.f32 %v2238, %v2366
        %v2399 = vmul.f32 %v2239, %v2367
        %v2400 = vmul.f32 %v2240, %v2368
        %vm2401 = vcmask 97280
        %v2402 = vsel %vm2401, 0.0, %v508
        %v2403 = vsel %vm2401, 0.0, %v509
        %v2404 = vsel %vm2401, 0.0, %v510
        %v2405 = vsel %vm2401, 0.0, %v511
        %v2406 = vsel %vm2401, 0.0, %v512
        %v2407 = vsel %vm2401, 0.0, %v513
        %v2408 = vsel %vm2401, 0.0, %v514
        %v2409 = vsel %vm2401, 0.0, %v515
        %v2410 = vsel %vm2401, 0.0, %v516
        %v2411 = vsel %vm2401, 0.0, %v517
        %v2412 = vsel %vm2401, 0.0, %v518
        %v2413 = vsel %vm2401, 0.0, %v519
        %v2414 = vsel %vm2401, 0.0, %v520
        %v2415 = vsel %vm2401, 0.0, %v521
        %v2416 = vsel %vm2401, 0.0, %v522
        %v2417 = vsel %vm2401, 0.0, %v523
        %v2418 = vsel %vm2401, 0.0, %v524
        %v2419 = vsel %vm2401, 0.0, %v525
        %v2420 = vsel %vm2401, 0.0, %v526
        %v2421 = vsel %vm2401, 0.0, %v527
        %v2422 = vsel %vm2401, 0.0, %v528
        %v2423 = vsel %vm2401, 0.0, %v529
        %v2424 = vsel %vm2401, 0.0, %v530
        %v2425 = vsel %vm2401, 0.0, %v531
        %v2426 = vsel %vm2401, 0.0, %v532
        %v2427 = vsel %vm2401, 0.0, %v533
        %v2428 = vsel %vm2401, 0.0, %v534
        %v2429 = vsel %vm2401, 0.0, %v535
        %v2430 = vsel %vm2401, 0.0, %v536
        %v2431 = vsel %vm2401, 0.0, %v537
        %v2432 = vsel %vm2401, 0.0, %v538
        %v2433 = vsel %vm2401, 0.0, %v539
        %v2434 = vsel %vm583, %v2402, 0.0
        %v2435 = vsel %vm583, %v2403, 0.0
        %v2436 = vsel %vm583, %v2404, 0.0
        %v2437 = vsel %vm583, %v2405, 0.0
        %v2438 = vsel %vm583, %v2406, 0.0
        %v2439 = vsel %vm583, %v2407, 0.0
        %v2440 = vsel %vm583, %v2408, 0.0
        %v2441 = vsel %vm583, %v2409, 0.0
        %v2442 = vsel %vm583, %v2410, 0.0
        %v2443 = vsel %vm583, %v2411, 0.0
        %v2444 = vsel %vm583, %v2412, 0.0
        %v2445 = vsel %vm583, %v2413, 0.0
        %v2446 = vsel %vm583, %v2414, 0.0
        %v2447 = vsel %vm583, %v2415, 0.0
        %v2448 = vsel %vm583, %v2416, 0.0
        %v2449 = vsel %vm583, %v2417, 0.0
        %v2450 = vsel %vm583, %v2418, 0.0
        %v2451 = vsel %vm583, %v2419, 0.0
        %v2452 = vsel %vm583, %v2420, 0.0
        %v2453 = vsel %vm583, %v2421, 0.0
        %v2454 = vsel %vm583, %v2422, 0.0
        %v2455 = vsel %vm583, %v2423, 0.0
        %v2456 = vsel %vm583, %v2424, 0.0
        %v2457 = vsel %vm583, %v2425, 0.0
        %v2458 = vsel %vm583, %v2426, 0.0
        %v2459 = vsel %vm583, %v2427, 0.0
        %v2460 = vsel %vm583, %v2428, 0.0
        %v2461 = vsel %vm583, %v2429, 0.0
        %v2462 = vsel %vm583, %v2430, 0.0
        %v2463 = vsel %vm583, %v2431, 0.0
        %v2464 = vsel %vm583, %v2432, 0.0
        %v2465 = vsel %vm583, %v2433, 0.0
        %v2466 = vld [vmem:[%s2] sm:$0x1]
        %v2468 = vlaneseq
        %v2469 = vshrl.u32 %v2468, 7
        %v2470 = vsub.s32 0, %v2469
        %v2471 = vrot.slane %v2466, %v2470
        %v2473 = vmul.f32 %v2369, %v2471
        %v2474 = vmul.f32 %v2370, %v2471
        %v2475 = vmul.f32 %v2371, %v2471
        %v2476 = vmul.f32 %v2372, %v2471
        %v2477 = vmul.f32 %v2373, %v2471
        %v2478 = vmul.f32 %v2374, %v2471
        %v2479 = vmul.f32 %v2375, %v2471
        %v2480 = vmul.f32 %v2376, %v2471
        %v2481 = vmul.f32 %v2377, %v2471
        %v2482 = vmul.f32 %v2378, %v2471
        %v2483 = vmul.f32 %v2379, %v2471
        %v2484 = vmul.f32 %v2380, %v2471
        %v2485 = vmul.f32 %v2381, %v2471
        %v2486 = vmul.f32 %v2382, %v2471
        %v2487 = vmul.f32 %v2383, %v2471
        %v2488 = vmul.f32 %v2384, %v2471
        %v2489 = vmul.f32 %v2385, %v2471
        %v2490 = vmul.f32 %v2386, %v2471
        %v2491 = vmul.f32 %v2387, %v2471
        %v2492 = vmul.f32 %v2388, %v2471
        %v2493 = vmul.f32 %v2389, %v2471
        %v2494 = vmul.f32 %v2390, %v2471
        %v2495 = vmul.f32 %v2391, %v2471
        %v2496 = vmul.f32 %v2392, %v2471
        %v2497 = vmul.f32 %v2393, %v2471
        %v2498 = vmul.f32 %v2394, %v2471
        %v2499 = vmul.f32 %v2395, %v2471
        %v2500 = vmul.f32 %v2396, %v2471
        %v2501 = vmul.f32 %v2397, %v2471
        %v2502 = vmul.f32 %v2398, %v2471
        %v2503 = vmul.f32 %v2399, %v2471
        %v2504 = vmul.f32 %v2400, %v2471
        %v2505 = vadd.f32 %v2473, %v2434
        %v2506 = vadd.f32 %v2474, %v2435
        %v2507 = vadd.f32 %v2475, %v2436
        %v2508 = vadd.f32 %v2476, %v2437
        %v2509 = vadd.f32 %v2477, %v2438
        %v2510 = vadd.f32 %v2478, %v2439
        %v2511 = vadd.f32 %v2479, %v2440
        %v2512 = vadd.f32 %v2480, %v2441
        %v2513 = vadd.f32 %v2481, %v2442
        %v2514 = vadd.f32 %v2482, %v2443
        %v2515 = vadd.f32 %v2483, %v2444
        %v2516 = vadd.f32 %v2484, %v2445
        %v2517 = vadd.f32 %v2485, %v2446
        %v2518 = vadd.f32 %v2486, %v2447
        %v2519 = vadd.f32 %v2487, %v2448
        %v2520 = vadd.f32 %v2488, %v2449
        %v2521 = vadd.f32 %v2489, %v2450
        %v2522 = vadd.f32 %v2490, %v2451
        %v2523 = vadd.f32 %v2491, %v2452
        %v2524 = vadd.f32 %v2492, %v2453
        %v2525 = vadd.f32 %v2493, %v2454
        %v2526 = vadd.f32 %v2494, %v2455
        %v2527 = vadd.f32 %v2495, %v2456
        %v2528 = vadd.f32 %v2496, %v2457
        %v2529 = vadd.f32 %v2497, %v2458
        %v2530 = vadd.f32 %v2498, %v2459
        %v2531 = vadd.f32 %v2499, %v2460
        %v2532 = vadd.f32 %v2500, %v2461
        %v2533 = vadd.f32 %v2501, %v2462
        %v2534 = vadd.f32 %v2502, %v2463
        %v2535 = vadd.f32 %v2503, %v2464
        %v2536 = vadd.f32 %v2504, %v2465
        %v2537 = vld [vmem:[#allocation5] sm:$0xff]
        %v2538 = vld [vmem:[#allocation5 + $0x8] sm:$0xff]
        %v2539 = vld [vmem:[#allocation5 + $0x10] sm:$0xff]
        %v2540 = vld [vmem:[#allocation5 + $0x18] sm:$0xff]
        %v2541 = vld [vmem:[#allocation5 + $0x20] sm:$0xff]
        %v2542 = vld [vmem:[#allocation5 + $0x28] sm:$0xff]
        %v2543 = vld [vmem:[#allocation5 + $0x30] sm:$0xff]
        %v2544 = vld [vmem:[#allocation5 + $0x38] sm:$0xff]
        %v2545 = vld [vmem:[#allocation5 + $0x40] sm:$0xff]
        %v2546 = vld [vmem:[#allocation5 + $0x48] sm:$0xff]
        %v2547 = vld [vmem:[#allocation5 + $0x50] sm:$0xff]
        %v2548 = vld [vmem:[#allocation5 + $0x58] sm:$0xff]
        %v2549 = vld [vmem:[#allocation5 + $0x60] sm:$0xff]
        %v2550 = vld [vmem:[#allocation5 + $0x68] sm:$0xff]
        %v2551 = vld [vmem:[#allocation5 + $0x70] sm:$0xff]
        %v2552 = vld [vmem:[#allocation5 + $0x78] sm:$0xff]
        %v2553 = vld [vmem:[#allocation5 + $0x80] sm:$0xff]
        %v2554 = vld [vmem:[#allocation5 + $0x88] sm:$0xff]
        %v2555 = vld [vmem:[#allocation5 + $0x90] sm:$0xff]
        %v2556 = vld [vmem:[#allocation5 + $0x98] sm:$0xff]
        %v2557 = vld [vmem:[#allocation5 + $0xa0] sm:$0xff]
        %v2558 = vld [vmem:[#allocation5 + $0xa8] sm:$0xff]
        %v2559 = vld [vmem:[#allocation5 + $0xb0] sm:$0xff]
        %v2560 = vld [vmem:[#allocation5 + $0xb8] sm:$0xff]
        %v2561 = vld [vmem:[#allocation5 + $0xc0] sm:$0xff]
        %v2562 = vld [vmem:[#allocation5 + $0xc8] sm:$0xff]
        %v2563 = vld [vmem:[#allocation5 + $0xd0] sm:$0xff]
        %v2564 = vld [vmem:[#allocation5 + $0xd8] sm:$0xff]
        %v2565 = vld [vmem:[#allocation5 + $0xe0] sm:$0xff]
        %v2566 = vld [vmem:[#allocation5 + $0xe8] sm:$0xff]
        %v2567 = vld [vmem:[#allocation5 + $0xf0] sm:$0xff]
        %v2568 = vld [vmem:[#allocation5 + $0xf8] sm:$0xff]
        %v2569 = vld [vmem:[#allocation5 + $0x100] sm:$0xff]
        %v2570 = vld [vmem:[#allocation5 + $0x108] sm:$0xff]
        %v2571 = vld [vmem:[#allocation5 + $0x110] sm:$0xff]
        %v2572 = vld [vmem:[#allocation5 + $0x118] sm:$0xff]
        %v2573 = vld [vmem:[#allocation5 + $0x120] sm:$0xff]
        %v2574 = vld [vmem:[#allocation5 + $0x128] sm:$0xff]
        %v2575 = vld [vmem:[#allocation5 + $0x130] sm:$0xff]
        %v2576 = vld [vmem:[#allocation5 + $0x138] sm:$0xff]
        %v2577 = vld [vmem:[#allocation5 + $0x140] sm:$0xff]
        %v2578 = vld [vmem:[#allocation5 + $0x148] sm:$0xff]
        %v2579 = vld [vmem:[#allocation5 + $0x150] sm:$0xff]
        %v2580 = vld [vmem:[#allocation5 + $0x158] sm:$0xff]
        %v2581 = vld [vmem:[#allocation5 + $0x160] sm:$0xff]
        %v2582 = vld [vmem:[#allocation5 + $0x168] sm:$0xff]
        %v2583 = vld [vmem:[#allocation5 + $0x170] sm:$0xff]
        %v2584 = vld [vmem:[#allocation5 + $0x178] sm:$0xff]
        %v2585 = vld [vmem:[#allocation5 + $0x180] sm:$0xff]
        %v2586 = vld [vmem:[#allocation5 + $0x188] sm:$0xff]
        %v2587 = vld [vmem:[#allocation5 + $0x190] sm:$0xff]
        %v2588 = vld [vmem:[#allocation5 + $0x198] sm:$0xff]
        %v2589 = vld [vmem:[#allocation5 + $0x1a0] sm:$0xff]
        %v2590 = vld [vmem:[#allocation5 + $0x1a8] sm:$0xff]
        %v2591 = vld [vmem:[#allocation5 + $0x1b0] sm:$0xff]
        %v2592 = vld [vmem:[#allocation5 + $0x1b8] sm:$0xff]
        %v2593 = vld [vmem:[#allocation5 + $0x1c0] sm:$0xff]
        %v2594 = vld [vmem:[#allocation5 + $0x1c8] sm:$0xff]
        %v2595 = vld [vmem:[#allocation5 + $0x1d0] sm:$0xff]
        %v2596 = vld [vmem:[#allocation5 + $0x1d8] sm:$0xff]
        %v2597 = vld [vmem:[#allocation5 + $0x1e0] sm:$0xff]
        %v2598 = vld [vmem:[#allocation5 + $0x1e8] sm:$0xff]
        %v2599 = vld [vmem:[#allocation5 + $0x1f0] sm:$0xff]
        %v2600 = vld [vmem:[#allocation5 + $0x1f8] sm:$0xff]
        %v2601 = vld [vmem:[#allocation5 + $0x200] sm:$0xff]
        %v2602 = vld [vmem:[#allocation5 + $0x208] sm:$0xff]
        %v2603 = vld [vmem:[#allocation5 + $0x210] sm:$0xff]
        %v2604 = vld [vmem:[#allocation5 + $0x218] sm:$0xff]
        %v2605 = vld [vmem:[#allocation5 + $0x220] sm:$0xff]
        %v2606 = vld [vmem:[#allocation5 + $0x228] sm:$0xff]
        %v2607 = vld [vmem:[#allocation5 + $0x230] sm:$0xff]
        %v2608 = vld [vmem:[#allocation5 + $0x238] sm:$0xff]
        %v2609 = vld [vmem:[#allocation5 + $0x240] sm:$0xff]
        %v2610 = vld [vmem:[#allocation5 + $0x248] sm:$0xff]
        %v2611 = vld [vmem:[#allocation5 + $0x250] sm:$0xff]
        %v2612 = vld [vmem:[#allocation5 + $0x258] sm:$0xff]
        %v2613 = vld [vmem:[#allocation5 + $0x260] sm:$0xff]
        %v2614 = vld [vmem:[#allocation5 + $0x268] sm:$0xff]
        %v2615 = vld [vmem:[#allocation5 + $0x270] sm:$0xff]
        %v2616 = vld [vmem:[#allocation5 + $0x278] sm:$0xff]
        %v2617 = vld [vmem:[#allocation5 + $0x280] sm:$0xff]
        %v2618 = vld [vmem:[#allocation5 + $0x288] sm:$0xff]
        %v2619 = vld [vmem:[#allocation5 + $0x290] sm:$0xff]
        %v2620 = vld [vmem:[#allocation5 + $0x298] sm:$0xff]
        %v2621 = vld [vmem:[#allocation5 + $0x2a0] sm:$0xff]
        %v2622 = vld [vmem:[#allocation5 + $0x2a8] sm:$0xff]
        %v2623 = vld [vmem:[#allocation5 + $0x2b0] sm:$0xff]
        %v2624 = vld [vmem:[#allocation5 + $0x2b8] sm:$0xff]
        %v2625 = vld [vmem:[#allocation5 + $0x2c0] sm:$0xff]
        %v2626 = vld [vmem:[#allocation5 + $0x2c8] sm:$0xff]
        %v2627 = vld [vmem:[#allocation5 + $0x2d0] sm:$0xff]
        %v2628 = vld [vmem:[#allocation5 + $0x2d8] sm:$0xff]
        %v2629 = vld [vmem:[#allocation5 + $0x2e0] sm:$0xff]
        %v2630 = vld [vmem:[#allocation5 + $0x2e8] sm:$0xff]
        %v2631 = vld [vmem:[#allocation5 + $0x2f0] sm:$0xff]
        %v2632 = vld [vmem:[#allocation5 + $0x2f8] sm:$0xff]
        %v2633 = vld [vmem:[#allocation5 + $0x300] sm:$0xff]
        %v2634 = vld [vmem:[#allocation5 + $0x308] sm:$0xff]
        %v2635 = vld [vmem:[#allocation5 + $0x310] sm:$0xff]
        %v2636 = vld [vmem:[#allocation5 + $0x318] sm:$0xff]
        %v2637 = vld [vmem:[#allocation5 + $0x320] sm:$0xff]
        %v2638 = vld [vmem:[#allocation5 + $0x328] sm:$0xff]
        %v2639 = vld [vmem:[#allocation5 + $0x330] sm:$0xff]
        %v2640 = vld [vmem:[#allocation5 + $0x338] sm:$0xff]
        %v2641 = vld [vmem:[#allocation5 + $0x340] sm:$0xff]
        %v2642 = vld [vmem:[#allocation5 + $0x348] sm:$0xff]
        %v2643 = vld [vmem:[#allocation5 + $0x350] sm:$0xff]
        %v2644 = vld [vmem:[#allocation5 + $0x358] sm:$0xff]
        %v2645 = vld [vmem:[#allocation5 + $0x360] sm:$0xff]
        %v2646 = vld [vmem:[#allocation5 + $0x368] sm:$0xff]
        %v2647 = vld [vmem:[#allocation5 + $0x370] sm:$0xff]
        %v2648 = vld [vmem:[#allocation5 + $0x378] sm:$0xff]
        %v2649 = vld [vmem:[#allocation5 + $0x380] sm:$0xff]
        %v2650 = vld [vmem:[#allocation5 + $0x388] sm:$0xff]
        %v2651 = vld [vmem:[#allocation5 + $0x390] sm:$0xff]
        %v2652 = vld [vmem:[#allocation5 + $0x398] sm:$0xff]
        %v2653 = vld [vmem:[#allocation5 + $0x3a0] sm:$0xff]
        %v2654 = vld [vmem:[#allocation5 + $0x3a8] sm:$0xff]
        %v2655 = vld [vmem:[#allocation5 + $0x3b0] sm:$0xff]
        %v2656 = vld [vmem:[#allocation5 + $0x3b8] sm:$0xff]
        %v2657 = vld [vmem:[#allocation5 + $0x3c0] sm:$0xff]
        %v2658 = vld [vmem:[#allocation5 + $0x3c8] sm:$0xff]
        %v2659 = vld [vmem:[#allocation5 + $0x3d0] sm:$0xff]
        %v2660 = vld [vmem:[#allocation5 + $0x3d8] sm:$0xff]
        %v2661 = vld [vmem:[#allocation5 + $0x3e0] sm:$0xff]
        %v2662 = vld [vmem:[#allocation5 + $0x3e8] sm:$0xff]
        %v2663 = vld [vmem:[#allocation5 + $0x3f0] sm:$0xff]
        %v2664 = vld [vmem:[#allocation5 + $0x3f8] sm:$0xff]
        %v2665 = vld [vmem:[%s8] sm:$0xf]
        %v2667 = vlaneseq
        %v2668 = vshrl.u32 %v2667, 7
        %v2669 = vsub.s32 0, %v2668
        %v2670 = vrot.slane %v2665, %v2669
        %v2671 = vlaneseq
        %v2672 = vshrl.u32 %v2671, 7
        %v2673 = vsub.s32 1, %v2672
        %v2674 = vrot.slane %v2665, %v2673
        %v2675 = vlaneseq
        %v2676 = vshrl.u32 %v2675, 7
        %v2677 = vsub.s32 2, %v2676
        %v2678 = vrot.slane %v2665, %v2677
        %v2679 = vlaneseq
        %v2680 = vshrl.u32 %v2679, 7
        %v2681 = vsub.s32 3, %v2680
        %v2682 = vrot.slane %v2665, %v2681
        %2687 = vmatprep.subr.mxu0 %v2538
        %2688 = vmatpush1.msra.mxu0 %v2537
        %2689 = vmatprep.subr.mxu0 %v2542
        %2690 = vmatpush1.msra.mxu0 %v2541
        %2691 = vmatprep.subr.mxu0 %v2546
        %2692 = vmatpush1.msra.mxu0 %v2545
        %2693 = vmatprep.subr.mxu0 %v2550
        %2694 = vmatpush1.msra.mxu0 %v2549
        %2695 = vmatprep.subr.mxu0 %v2554
        %2696 = vmatpush1.msra.mxu0 %v2553
        %2697 = vmatprep.subr.mxu0 %v2558
        %2698 = vmatpush1.msra.mxu0 %v2557
        %2699 = vmatprep.subr.mxu0 %v2562
        %2700 = vmatpush1.msra.mxu0 %v2561
        %2701 = vmatprep.subr.mxu0 %v2566
        %2702 = vmatpush1.msra.mxu0 %v2565
        %2703 = vmatprep.subr.mxu0 %v2570
        %2704 = vmatpush1.msra.mxu0 %v2569
        %2705 = vmatprep.subr.mxu0 %v2574
        %2706 = vmatpush1.msra.mxu0 %v2573
        %2707 = vmatprep.subr.mxu0 %v2578
        %2708 = vmatpush1.msra.mxu0 %v2577
        %2709 = vmatprep.subr.mxu0 %v2582
        %2710 = vmatpush1.msra.mxu0 %v2581
        %2711 = vmatprep.subr.mxu0 %v2586
        %2712 = vmatpush1.msra.mxu0 %v2585
        %2713 = vmatprep.subr.mxu0 %v2590
        %2714 = vmatpush1.msra.mxu0 %v2589
        %2715 = vmatprep.subr.mxu0 %v2594
        %2716 = vmatpush1.msra.mxu0 %v2593
        %2717 = vmatprep.subr.mxu0 %v2598
        %2718 = vmatpush1.msra.mxu0 %v2597
        %2719 = vmatprep.subr.mxu0 %v2602
        %2720 = vmatpush1.msra.mxu0 %v2601
        %2721 = vmatprep.subr.mxu0 %v2606
        %2722 = vmatpush1.msra.mxu0 %v2605
        %2723 = vmatprep.subr.mxu0 %v2610
        %2724 = vmatpush1.msra.mxu0 %v2609
        %2725 = vmatprep.subr.mxu0 %v2614
        %2726 = vmatpush1.msra.mxu0 %v2613
        %2727 = vmatprep.subr.mxu0 %v2618
        %2728 = vmatpush1.msra.mxu0 %v2617
        %2729 = vmatprep.subr.mxu0 %v2622
        %2730 = vmatpush1.msra.mxu0 %v2621
        %2731 = vmatprep.subr.mxu0 %v2626
        %2732 = vmatpush1.msra.mxu0 %v2625
        %2733 = vmatprep.subr.mxu0 %v2630
        %2734 = vmatpush1.msra.mxu0 %v2629
        %2735 = vmatprep.subr.mxu0 %v2634
        %2736 = vmatpush1.msra.mxu0 %v2633
        %2737 = vmatprep.subr.mxu0 %v2638
        %2738 = vmatpush1.msra.mxu0 %v2637
        %2739 = vmatprep.subr.mxu0 %v2642
        %2740 = vmatpush1.msra.mxu0 %v2641
        %2741 = vmatprep.subr.mxu0 %v2646
        %2742 = vmatpush1.msra.mxu0 %v2645
        %2743 = vmatprep.subr.mxu0 %v2650
        %2744 = vmatpush1.msra.mxu0 %v2649
        %2745 = vmatprep.subr.mxu0 %v2654
        %2746 = vmatpush1.msra.mxu0 %v2653
        %2747 = vmatprep.subr.mxu0 %v2658
        %2748 = vmatpush1.msra.mxu0 %v2657
        %2749 = vmatprep.subr.mxu0 %v2662
        %2750 = vmatpush1.msra.mxu0 %v2661
        %2751 = vmatprep.mubr.f32.mxu0 %v1003
        %2752 = vmatmul.mubr.f32.gmra.mrb[0].mxu0 %v2505
        %v2753 = vpop.f32.mrb[0].mxu0
        %v2754 = vadd.f32 %v2670, %v2753
        %v2755 = vpop.f32.mrb[0].mxu0
        %v2756 = vadd.f32 %v2674, %v2755
        %2757 = vmatprep.mubr.f32.mxu0 %v1008
        %2758 = vmatmul.mubr.f32.gmra.mrb[0].mxu0 %v2506
        %v2759 = vpop.f32.mrb[0].mxu0
        %v2760 = vadd.f32 %v2670, %v2759
        %v2761 = vpop.f32.mrb[0].mxu0
        %v2762 = vadd.f32 %v2674, %v2761
        %2763 = vmatprep.mubr.f32.mxu0 %v1013
        %2764 = vmatmul.mubr.f32.gmra.mrb[0].mxu0 %v2507
        %v2765 = vpop.f32.mrb[0].mxu0
        %v2766 = vadd.f32 %v2670, %v2765
        %v2767 = vpop.f32.mrb[0].mxu0
        %v2768 = vadd.f32 %v2674, %v2767
        %2769 = vmatprep.mubr.f32.mxu0 %v1018
        %2770 = vmatmul.mubr.f32.gmra.mrb[0].mxu0 %v2508
        %v2771 = vpop.f32.mrb[0].mxu0
        %v2772 = vadd.f32 %v2670, %v2771
        %v2773 = vpop.f32.mrb[0].mxu0
        %v2774 = vadd.f32 %v2674, %v2773
        %2775 = vmatprep.mubr.f32.mxu0 %v1023
        %2776 = vmatmul.mubr.f32.gmra.mrb[0].mxu0 %v2509
        %v2777 = vpop.f32.mrb[0].mxu0
        %v2778 = vadd.f32 %v2670, %v2777
        %v2779 = vpop.f32.mrb[0].mxu0
        %v2780 = vadd.f32 %v2674, %v2779
        %2781 = vmatprep.mubr.f32.mxu0 %v1028
        %2782 = vmatmul.mubr.f32.gmra.mrb[0].mxu0 %v2510
        %v2783 = vpop.f32.mrb[0].mxu0
        %v2784 = vadd.f32 %v2670, %v2783
        %v2785 = vpop.f32.mrb[0].mxu0
        %v2786 = vadd.f32 %v2674, %v2785
        %2787 = vmatprep.mubr.f32.mxu0 %v1033
        %2788 = vmatmul.mubr.f32.gmra.mrb[0].mxu0 %v2511
        %v2789 = vpop.f32.mrb[0].mxu0
        %v2790 = vadd.f32 %v2670, %v2789
        %v2791 = vpop.f32.mrb[0].mxu0
        %v2792 = vadd.f32 %v2674, %v2791
        %2793 = vmatprep.mubr.f32.mxu0 %v1038
        %2794 = vmatmul.mubr.f32.gmra.mrb[0].mxu0 %v2512
        %v2795 = vpop.f32.mrb[0].mxu0
        %v2796 = vadd.f32 %v2670, %v2795
        %v2797 = vpop.f32.mrb[0].mxu0
        %v2798 = vadd.f32 %v2674, %v2797
        %2799 = vmatprep.mubr.f32.mxu0 %v1043
        %2800 = vmatmul.mubr.f32.gmra.mrb[0].mxu0 %v2513
        %v2801 = vpop.f32.mrb[0].mxu0
        %v2802 = vadd.f32 %v2670, %v2801
        %v2803 = vpop.f32.mrb[0].mxu0
        %v2804 = vadd.f32 %v2674, %v2803
        %2805 = vmatprep.mubr.f32.mxu0 %v1048
        %2806 = vmatmul.mubr.f32.gmra.mrb[0].mxu0 %v2514
        %v2807 = vpop.f32.mrb[0].mxu0
        %v2808 = vadd.f32 %v2670, %v2807
        %v2809 = vpop.f32.mrb[0].mxu0
        %v2810 = vadd.f32 %v2674, %v2809
        %2811 = vmatprep.mubr.f32.mxu0 %v1053
        %2812 = vmatmul.mubr.f32.gmra.mrb[0].mxu0 %v2515
        %v2813 = vpop.f32.mrb[0].mxu0
        %v2814 = vadd.f32 %v2670, %v2813
        %v2815 = vpop.f32.mrb[0].mxu0
        %v2816 = vadd.f32 %v2674, %v2815
        %2817 = vmatprep.mubr.f32.mxu0 %v1058
        %2818 = vmatmul.mubr.f32.gmra.mrb[0].mxu0 %v2516
        %v2819 = vpop.f32.mrb[0].mxu0
        %v2820 = vadd.f32 %v2670, %v2819
        %v2821 = vpop.f32.mrb[0].mxu0
        %v2822 = vadd.f32 %v2674, %v2821
        %2823 = vmatprep.mubr.f32.mxu0 %v1063
        %2824 = vmatmul.mubr.f32.gmra.mrb[0].mxu0 %v2517
        %v2825 = vpop.f32.mrb[0].mxu0
        %v2826 = vadd.f32 %v2670, %v2825
        %v2827 = vpop.f32.mrb[0].mxu0
        %v2828 = vadd.f32 %v2674, %v2827
        %2829 = vmatprep.mubr.f32.mxu0 %v1068
        %2830 = vmatmul.mubr.f32.gmra.mrb[0].mxu0 %v2518
        %v2831 = vpop.f32.mrb[0].mxu0
        %v2832 = vadd.f32 %v2670, %v2831
        %v2833 = vpop.f32.mrb[0].mxu0
        %v2834 = vadd.f32 %v2674, %v2833
        %2835 = vmatprep.mubr.f32.mxu0 %v1073
        %2836 = vmatmul.mubr.f32.gmra.mrb[0].mxu0 %v2519
        %v2837 = vpop.f32.mrb[0].mxu0
        %v2838 = vadd.f32 %v2670, %v2837
        %v2839 = vpop.f32.mrb[0].mxu0
        %v2840 = vadd.f32 %v2674, %v2839
        %2841 = vmatprep.mubr.f32.mxu0 %v1078
        %2842 = vmatmul.mubr.f32.gmra.mrb[0].mxu0 %v2520
        %v2843 = vpop.f32.mrb[0].mxu0
        %v2844 = vadd.f32 %v2670, %v2843
        %v2845 = vpop.f32.mrb[0].mxu0
        %v2846 = vadd.f32 %v2674, %v2845
        %2847 = vmatprep.mubr.f32.mxu0 %v1083
        %2848 = vmatmul.mubr.f32.gmra.mrb[0].mxu0 %v2521
        %v2849 = vpop.f32.mrb[0].mxu0
        %v2850 = vadd.f32 %v2670, %v2849
        %v2851 = vpop.f32.mrb[0].mxu0
        %v2852 = vadd.f32 %v2674, %v2851
        %2853 = vmatprep.mubr.f32.mxu0 %v1088
        %2854 = vmatmul.mubr.f32.gmra.mrb[0].mxu0 %v2522
        %v2855 = vpop.f32.mrb[0].mxu0
        %v2856 = vadd.f32 %v2670, %v2855
        %v2857 = vpop.f32.mrb[0].mxu0
        %v2858 = vadd.f32 %v2674, %v2857
        %2859 = vmatprep.mubr.f32.mxu0 %v1093
        %2860 = vmatmul.mubr.f32.gmra.mrb[0].mxu0 %v2523
        %v2861 = vpop.f32.mrb[0].mxu0
        %v2862 = vadd.f32 %v2670, %v2861
        %v2863 = vpop.f32.mrb[0].mxu0
        %v2864 = vadd.f32 %v2674, %v2863
        %2865 = vmatprep.mubr.f32.mxu0 %v1098
        %2866 = vmatmul.mubr.f32.gmra.mrb[0].mxu0 %v2524
        %v2867 = vpop.f32.mrb[0].mxu0
        %v2868 = vadd.f32 %v2670, %v2867
        %v2869 = vpop.f32.mrb[0].mxu0
        %v2870 = vadd.f32 %v2674, %v2869
        %2871 = vmatprep.mubr.f32.mxu0 %v1103
        %2872 = vmatmul.mubr.f32.gmra.mrb[0].mxu0 %v2525
        %v2873 = vpop.f32.mrb[0].mxu0
        %v2874 = vadd.f32 %v2670, %v2873
        %v2875 = vpop.f32.mrb[0].mxu0
        %v2876 = vadd.f32 %v2674, %v2875
        %2877 = vmatprep.mubr.f32.mxu0 %v1108
        %2878 = vmatmul.mubr.f32.gmra.mrb[0].mxu0 %v2526
        %v2879 = vpop.f32.mrb[0].mxu0
        %v2880 = vadd.f32 %v2670, %v2879
        %v2881 = vpop.f32.mrb[0].mxu0
        %v2882 = vadd.f32 %v2674, %v2881
        %2883 = vmatprep.mubr.f32.mxu0 %v1113
        %2884 = vmatmul.mubr.f32.gmra.mrb[0].mxu0 %v2527
        %v2885 = vpop.f32.mrb[0].mxu0
        %v2886 = vadd.f32 %v2670, %v2885
        %v2887 = vpop.f32.mrb[0].mxu0
        %v2888 = vadd.f32 %v2674, %v2887
        %2889 = vmatprep.mubr.f32.mxu0 %v1118
        %2890 = vmatmul.mubr.f32.gmra.mrb[0].mxu0 %v2528
        %v2891 = vpop.f32.mrb[0].mxu0
        %v2892 = vadd.f32 %v2670, %v2891
        %v2893 = vpop.f32.mrb[0].mxu0
        %v2894 = vadd.f32 %v2674, %v2893
        %2895 = vmatprep.mubr.f32.mxu0 %v1123
        %2896 = vmatmul.mubr.f32.gmra.mrb[0].mxu0 %v2529
        %v2897 = vpop.f32.mrb[0].mxu0
        %v2898 = vadd.f32 %v2670, %v2897
        %v2899 = vpop.f32.mrb[0].mxu0
        %v2900 = vadd.f32 %v2674, %v2899
        %2901 = vmatprep.mubr.f32.mxu0 %v1128
        %2902 = vmatmul.mubr.f32.gmra.mrb[0].mxu0 %v2530
        %v2903 = vpop.f32.mrb[0].mxu0
        %v2904 = vadd.f32 %v2670, %v2903
        %v2905 = vpop.f32.mrb[0].mxu0
        %v2906 = vadd.f32 %v2674, %v2905
        %2907 = vmatprep.mubr.f32.mxu0 %v1133
        %2908 = vmatmul.mubr.f32.gmra.mrb[0].mxu0 %v2531
        %v2909 = vpop.f32.mrb[0].mxu0
        %v2910 = vadd.f32 %v2670, %v2909
        %v2911 = vpop.f32.mrb[0].mxu0
        %v2912 = vadd.f32 %v2674, %v2911
        %2913 = vmatprep.mubr.f32.mxu0 %v1138
        %2914 = vmatmul.mubr.f32.gmra.mrb[0].mxu0 %v2532
        %v2915 = vpop.f32.mrb[0].mxu0
        %v2916 = vadd.f32 %v2670, %v2915
        %v2917 = vpop.f32.mrb[0].mxu0
        %v2918 = vadd.f32 %v2674, %v2917
        %2919 = vmatprep.mubr.f32.mxu0 %v1143
        %2920 = vmatmul.mubr.f32.gmra.mrb[0].mxu0 %v2533
        %v2921 = vpop.f32.mrb[0].mxu0
        %v2922 = vadd.f32 %v2670, %v2921
        %v2923 = vpop.f32.mrb[0].mxu0
        %v2924 = vadd.f32 %v2674, %v2923
        %2925 = vmatprep.mubr.f32.mxu0 %v1148
        %2926 = vmatmul.mubr.f32.gmra.mrb[0].mxu0 %v2534
        %v2927 = vpop.f32.mrb[0].mxu0
        %v2928 = vadd.f32 %v2670, %v2927
        %v2929 = vpop.f32.mrb[0].mxu0
        %v2930 = vadd.f32 %v2674, %v2929
        %2931 = vmatprep.mubr.f32.mxu0 %v1153
        %2932 = vmatmul.mubr.f32.gmra.mrb[0].mxu0 %v2535
        %v2933 = vpop.f32.mrb[0].mxu0
        %v2934 = vadd.f32 %v2670, %v2933
        %v2935 = vpop.f32.mrb[0].mxu0
        %v2936 = vadd.f32 %v2674, %v2935
        %2937 = vmatprep.mubr.f32.mxu0 %v1158
        %2938 = vmatmul.mubr.f32.gmra.mrb[0].mxu0 %v2536
        %v2939 = vpop.f32.mrb[0].mxu0
        %v2940 = vadd.f32 %v2670, %v2939
        %v2941 = vpop.f32.mrb[0].mxu0
        %v2942 = vadd.f32 %v2674, %v2941
        %2943 = vdwg.mxu0
        %2944 = vmatprep.subr.mxu0 %v2540
        %2945 = vmatpush1.msra.mxu0 %v2539
        %2946 = vmatprep.subr.mxu0 %v2544
        %2947 = vmatpush1.msra.mxu0 %v2543
        %2948 = vmatprep.subr.mxu0 %v2548
        %2949 = vmatpush1.msra.mxu0 %v2547
        %2950 = vmatprep.subr.mxu0 %v2552
        %2951 = vmatpush1.msra.mxu0 %v2551
        %2952 = vmatprep.subr.mxu0 %v2556
        %2953 = vmatpush1.msra.mxu0 %v2555
        %2954 = vmatprep.subr.mxu0 %v2560
        %2955 = vmatpush1.msra.mxu0 %v2559
        %2956 = vmatprep.subr.mxu0 %v2564
        %2957 = vmatpush1.msra.mxu0 %v2563
        %2958 = vmatprep.subr.mxu0 %v2568
        %2959 = vmatpush1.msra.mxu0 %v2567
        %2960 = vmatprep.subr.mxu0 %v2572
        %2961 = vmatpush1.msra.mxu0 %v2571
        %2962 = vmatprep.subr.mxu0 %v2576
        %2963 = vmatpush1.msra.mxu0 %v2575
        %2964 = vmatprep.subr.mxu0 %v2580
        %2965 = vmatpush1.msra.mxu0 %v2579
        %2966 = vmatprep.subr.mxu0 %v2584
        %2967 = vmatpush1.msra.mxu0 %v2583
        %2968 = vmatprep.subr.mxu0 %v2588
        %2969 = vmatpush1.msra.mxu0 %v2587
        %2970 = vmatprep.subr.mxu0 %v2592
        %2971 = vmatpush1.msra.mxu0 %v2591
        %2972 = vmatprep.subr.mxu0 %v2596
        %2973 = vmatpush1.msra.mxu0 %v2595
        %2974 = vmatprep.subr.mxu0 %v2600
        %2975 = vmatpush1.msra.mxu0 %v2599
        %2976 = vmatprep.subr.mxu0 %v2604
        %2977 = vmatpush1.msra.mxu0 %v2603
        %2978 = vmatprep.subr.mxu0 %v2608
        %2979 = vmatpush1.msra.mxu0 %v2607
        %2980 = vmatprep.subr.mxu0 %v2612
        %2981 = vmatpush1.msra.mxu0 %v2611
        %2982 = vmatprep.subr.mxu0 %v2616
        %2983 = vmatpush1.msra.mxu0 %v2615
        %2984 = vmatprep.subr.mxu0 %v2620
        %2985 = vmatpush1.msra.mxu0 %v2619
        %2986 = vmatprep.subr.mxu0 %v2624
        %2987 = vmatpush1.msra.mxu0 %v2623
        %2988 = vmatprep.subr.mxu0 %v2628
        %2989 = vmatpush1.msra.mxu0 %v2627
        %2990 = vmatprep.subr.mxu0 %v2632
        %2991 = vmatpush1.msra.mxu0 %v2631
        %2992 = vmatprep.subr.mxu0 %v2636
        %2993 = vmatpush1.msra.mxu0 %v2635
        %2994 = vmatprep.subr.mxu0 %v2640
        %2995 = vmatpush1.msra.mxu0 %v2639
        %2996 = vmatprep.subr.mxu0 %v2644
        %2997 = vmatpush1.msra.mxu0 %v2643
        %2998 = vmatprep.subr.mxu0 %v2648
        %2999 = vmatpush1.msra.mxu0 %v2647
        %3000 = vmatprep.subr.mxu0 %v2652
        %3001 = vmatpush1.msra.mxu0 %v2651
        %3002 = vmatprep.subr.mxu0 %v2656
        %3003 = vmatpush1.msra.mxu0 %v2655
        %3004 = vmatprep.subr.mxu0 %v2660
        %3005 = vmatpush1.msra.mxu0 %v2659
        %3006 = vmatprep.subr.mxu0 %v2664
        %3007 = vmatpush1.msra.mxu0 %v2663
        %3008 = vmatprep.mubr.f32.mxu0 %v1003
        %3009 = vmatmul.mubr.f32.gmra.mrb[0].mxu0 %v2505
        %v3010 = vpop.f32.mrb[0].mxu0
        %v3011 = vadd.f32 %v2678, %v3010
        %v3012 = vpop.f32.mrb[0].mxu0
        %v3013 = vadd.f32 %v2682, %v3012
        %3014 = vmatprep.mubr.f32.mxu0 %v1008
        %3015 = vmatmul.mubr.f32.gmra.mrb[0].mxu0 %v2506
        %v3016 = vpop.f32.mrb[0].mxu0
        %v3017 = vadd.f32 %v2678, %v3016
        %v3018 = vpop.f32.mrb[0].mxu0
        %v3019 = vadd.f32 %v2682, %v3018
        %3020 = vmatprep.mubr.f32.mxu0 %v1013
        %3021 = vmatmul.mubr.f32.gmra.mrb[0].mxu0 %v2507
        %v3022 = vpop.f32.mrb[0].mxu0
        %v3023 = vadd.f32 %v2678, %v3022
        %v3024 = vpop.f32.mrb[0].mxu0
        %v3025 = vadd.f32 %v2682, %v3024
        %3026 = vmatprep.mubr.f32.mxu0 %v1018
        %3027 = vmatmul.mubr.f32.gmra.mrb[0].mxu0 %v2508
        %v3028 = vpop.f32.mrb[0].mxu0
        %v3029 = vadd.f32 %v2678, %v3028
        %v3030 = vpop.f32.mrb[0].mxu0
        %v3031 = vadd.f32 %v2682, %v3030
        %3032 = vmatprep.mubr.f32.mxu0 %v1023
        %3033 = vmatmul.mubr.f32.gmra.mrb[0].mxu0 %v2509
        %v3034 = vpop.f32.mrb[0].mxu0
        %v3035 = vadd.f32 %v2678, %v3034
        %v3036 = vpop.f32.mrb[0].mxu0
        %v3037 = vadd.f32 %v2682, %v3036
        %3038 = vmatprep.mubr.f32.mxu0 %v1028
        %3039 = vmatmul.mubr.f32.gmra.mrb[0].mxu0 %v2510
        %v3040 = vpop.f32.mrb[0].mxu0
        %v3041 = vadd.f32 %v2678, %v3040
        %v3042 = vpop.f32.mrb[0].mxu0
        %v3043 = vadd.f32 %v2682, %v3042
        %3044 = vmatprep.mubr.f32.mxu0 %v1033
        %3045 = vmatmul.mubr.f32.gmra.mrb[0].mxu0 %v2511
        %v3046 = vpop.f32.mrb[0].mxu0
        %v3047 = vadd.f32 %v2678, %v3046
        %v3048 = vpop.f32.mrb[0].mxu0
        %v3049 = vadd.f32 %v2682, %v3048
        %3050 = vmatprep.mubr.f32.mxu0 %v1038
        %3051 = vmatmul.mubr.f32.gmra.mrb[0].mxu0 %v2512
        %v3052 = vpop.f32.mrb[0].mxu0
        %v3053 = vadd.f32 %v2678, %v3052
        %v3054 = vpop.f32.mrb[0].mxu0
        %v3055 = vadd.f32 %v2682, %v3054
        %3056 = vmatprep.mubr.f32.mxu0 %v1043
        %3057 = vmatmul.mubr.f32.gmra.mrb[0].mxu0 %v2513
        %v3058 = vpop.f32.mrb[0].mxu0
        %v3059 = vadd.f32 %v2678, %v3058
        %v3060 = vpop.f32.mrb[0].mxu0
        %v3061 = vadd.f32 %v2682, %v3060
        %3062 = vmatprep.mubr.f32.mxu0 %v1048
        %3063 = vmatmul.mubr.f32.gmra.mrb[0].mxu0 %v2514
        %v3064 = vpop.f32.mrb[0].mxu0
        %v3065 = vadd.f32 %v2678, %v3064
        %v3066 = vpop.f32.mrb[0].mxu0
        %v3067 = vadd.f32 %v2682, %v3066
        %3068 = vmatprep.mubr.f32.mxu0 %v1053
        %3069 = vmatmul.mubr.f32.gmra.mrb[0].mxu0 %v2515
        %v3070 = vpop.f32.mrb[0].mxu0
        %v3071 = vadd.f32 %v2678, %v3070
        %v3072 = vpop.f32.mrb[0].mxu0
        %v3073 = vadd.f32 %v2682, %v3072
        %3074 = vmatprep.mubr.f32.mxu0 %v1058
        %3075 = vmatmul.mubr.f32.gmra.mrb[0].mxu0 %v2516
        %v3076 = vpop.f32.mrb[0].mxu0
        %v3077 = vadd.f32 %v2678, %v3076
        %v3078 = vpop.f32.mrb[0].mxu0
        %v3079 = vadd.f32 %v2682, %v3078
        %3080 = vmatprep.mubr.f32.mxu0 %v1063
        %3081 = vmatmul.mubr.f32.gmra.mrb[0].mxu0 %v2517
        %v3082 = vpop.f32.mrb[0].mxu0
        %v3083 = vadd.f32 %v2678, %v3082
        %v3084 = vpop.f32.mrb[0].mxu0
        %v3085 = vadd.f32 %v2682, %v3084
        %3086 = vmatprep.mubr.f32.mxu0 %v1068
        %3087 = vmatmul.mubr.f32.gmra.mrb[0].mxu0 %v2518
        %v3088 = vpop.f32.mrb[0].mxu0
        %v3089 = vadd.f32 %v2678, %v3088
        %v3090 = vpop.f32.mrb[0].mxu0
        %v3091 = vadd.f32 %v2682, %v3090
        %3092 = vmatprep.mubr.f32.mxu0 %v1073
        %3093 = vmatmul.mubr.f32.gmra.mrb[0].mxu0 %v2519
        %v3094 = vpop.f32.mrb[0].mxu0
        %v3095 = vadd.f32 %v2678, %v3094
        %v3096 = vpop.f32.mrb[0].mxu0
        %v3097 = vadd.f32 %v2682, %v3096
        %3098 = vmatprep.mubr.f32.mxu0 %v1078
        %3099 = vmatmul.mubr.f32.gmra.mrb[0].mxu0 %v2520
        %v3100 = vpop.f32.mrb[0].mxu0
        %v3101 = vadd.f32 %v2678, %v3100
        %v3102 = vpop.f32.mrb[0].mxu0
        %v3103 = vadd.f32 %v2682, %v3102
        %3104 = vmatprep.mubr.f32.mxu0 %v1083
        %3105 = vmatmul.mubr.f32.gmra.mrb[0].mxu0 %v2521
        %v3106 = vpop.f32.mrb[0].mxu0
        %v3107 = vadd.f32 %v2678, %v3106
        %v3108 = vpop.f32.mrb[0].mxu0
        %v3109 = vadd.f32 %v2682, %v3108
        %3110 = vmatprep.mubr.f32.mxu0 %v1088
        %3111 = vmatmul.mubr.f32.gmra.mrb[0].mxu0 %v2522
        %v3112 = vpop.f32.mrb[0].mxu0
        %v3113 = vadd.f32 %v2678, %v3112
        %v3114 = vpop.f32.mrb[0].mxu0
        %v3115 = vadd.f32 %v2682, %v3114
        %3116 = vmatprep.mubr.f32.mxu0 %v1093
        %3117 = vmatmul.mubr.f32.gmra.mrb[0].mxu0 %v2523
        %v3118 = vpop.f32.mrb[0].mxu0
        %v3119 = vadd.f32 %v2678, %v3118
        %v3120 = vpop.f32.mrb[0].mxu0
        %v3121 = vadd.f32 %v2682, %v3120
        %3122 = vmatprep.mubr.f32.mxu0 %v1098
        %3123 = vmatmul.mubr.f32.gmra.mrb[0].mxu0 %v2524
        %v3124 = vpop.f32.mrb[0].mxu0
        %v3125 = vadd.f32 %v2678, %v3124
        %v3126 = vpop.f32.mrb[0].mxu0
        %v3127 = vadd.f32 %v2682, %v3126
        %3128 = vmatprep.mubr.f32.mxu0 %v1103
        %3129 = vmatmul.mubr.f32.gmra.mrb[0].mxu0 %v2525
        %v3130 = vpop.f32.mrb[0].mxu0
        %v3131 = vadd.f32 %v2678, %v3130
        %v3132 = vpop.f32.mrb[0].mxu0
        %v3133 = vadd.f32 %v2682, %v3132
        %3134 = vmatprep.mubr.f32.mxu0 %v1108
        %3135 = vmatmul.mubr.f32.gmra.mrb[0].mxu0 %v2526
        %v3136 = vpop.f32.mrb[0].mxu0
        %v3137 = vadd.f32 %v2678, %v3136
        %v3138 = vpop.f32.mrb[0].mxu0
        %v3139 = vadd.f32 %v2682, %v3138
        %3140 = vmatprep.mubr.f32.mxu0 %v1113
        %3141 = vmatmul.mubr.f32.gmra.mrb[0].mxu0 %v2527
        %v3142 = vpop.f32.mrb[0].mxu0
        %v3143 = vadd.f32 %v2678, %v3142
        %v3144 = vpop.f32.mrb[0].mxu0
        %v3145 = vadd.f32 %v2682, %v3144
        %3146 = vmatprep.mubr.f32.mxu0 %v1118
        %3147 = vmatmul.mubr.f32.gmra.mrb[0].mxu0 %v2528
        %v3148 = vpop.f32.mrb[0].mxu0
        %v3149 = vadd.f32 %v2678, %v3148
        %v3150 = vpop.f32.mrb[0].mxu0
        %v3151 = vadd.f32 %v2682, %v3150
        %3152 = vmatprep.mubr.f32.mxu0 %v1123
        %3153 = vmatmul.mubr.f32.gmra.mrb[0].mxu0 %v2529
        %v3154 = vpop.f32.mrb[0].mxu0
        %v3155 = vadd.f32 %v2678, %v3154
        %v3156 = vpop.f32.mrb[0].mxu0
        %v3157 = vadd.f32 %v2682, %v3156
        %3158 = vmatprep.mubr.f32.mxu0 %v1128
        %3159 = vmatmul.mubr.f32.gmra.mrb[0].mxu0 %v2530
        %v3160 = vpop.f32.mrb[0].mxu0
        %v3161 = vadd.f32 %v2678, %v3160
        %v3162 = vpop.f32.mrb[0].mxu0
        %v3163 = vadd.f32 %v2682, %v3162
        %3164 = vmatprep.mubr.f32.mxu0 %v1133
        %3165 = vmatmul.mubr.f32.gmra.mrb[0].mxu0 %v2531
        %v3166 = vpop.f32.mrb[0].mxu0
        %v3167 = vadd.f32 %v2678, %v3166
        %v3168 = vpop.f32.mrb[0].mxu0
        %v3169 = vadd.f32 %v2682, %v3168
        %3170 = vmatprep.mubr.f32.mxu0 %v1138
        %3171 = vmatmul.mubr.f32.gmra.mrb[0].mxu0 %v2532
        %v3172 = vpop.f32.mrb[0].mxu0
        %v3173 = vadd.f32 %v2678, %v3172
        %v3174 = vpop.f32.mrb[0].mxu0
        %v3175 = vadd.f32 %v2682, %v3174
        %3176 = vmatprep.mubr.f32.mxu0 %v1143
        %3177 = vmatmul.mubr.f32.gmra.mrb[0].mxu0 %v2533
        %v3178 = vpop.f32.mrb[0].mxu0
        %v3179 = vadd.f32 %v2678, %v3178
        %v3180 = vpop.f32.mrb[0].mxu0
        %v3181 = vadd.f32 %v2682, %v3180
        %3182 = vmatprep.mubr.f32.mxu0 %v1148
        %3183 = vmatmul.mubr.f32.gmra.mrb[0].mxu0 %v2534
        %v3184 = vpop.f32.mrb[0].mxu0
        %v3185 = vadd.f32 %v2678, %v3184
        %v3186 = vpop.f32.mrb[0].mxu0
        %v3187 = vadd.f32 %v2682, %v3186
        %3188 = vmatprep.mubr.f32.mxu0 %v1153
        %3189 = vmatmul.mubr.f32.gmra.mrb[0].mxu0 %v2535
        %v3190 = vpop.f32.mrb[0].mxu0
        %v3191 = vadd.f32 %v2678, %v3190
        %v3192 = vpop.f32.mrb[0].mxu0
        %v3193 = vadd.f32 %v2682, %v3192
        %3194 = vmatprep.mubr.f32.mxu0 %v1158
        %3195 = vmatmul.mubr.f32.gmra.mrb[0].mxu0 %v2536
        %v3196 = vpop.f32.mrb[0].mxu0
        %v3197 = vadd.f32 %v2678, %v3196
        %v3198 = vpop.f32.mrb[0].mxu0
        %v3199 = vadd.f32 %v2682, %v3198
        %3200 = vdwg.mxu0
        %v3201 = vmul.f32 %v2754, 0.5
        %v3202 = vmul.f32 %v2760, 0.5
        %v3203 = vmul.f32 %v2766, 0.5
        %v3204 = vmul.f32 %v2772, 0.5
        %v3205 = vmul.f32 %v2778, 0.5
        %v3206 = vmul.f32 %v2784, 0.5
        %v3207 = vmul.f32 %v2790, 0.5
        %v3208 = vmul.f32 %v2796, 0.5
        %v3209 = vmul.f32 %v2802, 0.5
        %v3210 = vmul.f32 %v2808, 0.5
        %v3211 = vmul.f32 %v2814, 0.5
        %v3212 = vmul.f32 %v2820, 0.5
        %v3213 = vmul.f32 %v2826, 0.5
        %v3214 = vmul.f32 %v2832, 0.5
        %v3215 = vmul.f32 %v2838, 0.5
        %v3216 = vmul.f32 %v2844, 0.5
        %v3217 = vmul.f32 %v2850, 0.5
        %v3218 = vmul.f32 %v2856, 0.5
        %v3219 = vmul.f32 %v2862, 0.5
        %v3220 = vmul.f32 %v2868, 0.5
        %v3221 = vmul.f32 %v2874, 0.5
        %v3222 = vmul.f32 %v2880, 0.5
        %v3223 = vmul.f32 %v2886, 0.5
        %v3224 = vmul.f32 %v2892, 0.5
        %v3225 = vmul.f32 %v2898, 0.5
        %v3226 = vmul.f32 %v2904, 0.5
        %v3227 = vmul.f32 %v2910, 0.5
        %v3228 = vmul.f32 %v2916, 0.5
        %v3229 = vmul.f32 %v2922, 0.5
        %v3230 = vmul.f32 %v2928, 0.5
        %v3231 = vmul.f32 %v2934, 0.5
        %v3232 = vmul.f32 %v2940, 0.5
        %v3233 = vtanh.pop %v3201
        %v3234 = vtanh.pop %v3202
        %v3235 = vtanh.pop %v3203
        %v3236 = vtanh.pop %v3204
        %v3237 = vtanh.pop %v3205
        %v3238 = vtanh.pop %v3206
        %v3239 = vtanh.pop %v3207
        %v3240 = vtanh.pop %v3208
        %v3241 = vtanh.pop %v3209
        %v3242 = vtanh.pop %v3210
        %v3243 = vtanh.pop %v3211
        %v3244 = vtanh.pop %v3212
        %v3245 = vtanh.pop %v3213
        %v3246 = vtanh.pop %v3214
        %v3247 = vtanh.pop %v3215
        %v3248 = vtanh.pop %v3216
        %v3249 = vtanh.pop %v3217
        %v3250 = vtanh.pop %v3218
        %v3251 = vtanh.pop %v3219
        %v3252 = vtanh.pop %v3220
        %v3253 = vtanh.pop %v3221
        %v3254 = vtanh.pop %v3222
        %v3255 = vtanh.pop %v3223
        %v3256 = vtanh.pop %v3224
        %v3257 = vtanh.pop %v3225
        %v3258 = vtanh.pop %v3226
        %v3259 = vtanh.pop %v3227
        %v3260 = vtanh.pop %v3228
        %v3261 = vtanh.pop %v3229
        %v3262 = vtanh.pop %v3230
        %v3263 = vtanh.pop %v3231
        %v3264 = vtanh.pop %v3232
        %v3265 = vmul.f32 %v3233, 0.5
        %v3266 = vmul.f32 %v3234, 0.5
        %v3267 = vmul.f32 %v3235, 0.5
        %v3268 = vmul.f32 %v3236, 0.5
        %v3269 = vmul.f32 %v3237, 0.5
        %v3270 = vmul.f32 %v3238, 0.5
        %v3271 = vmul.f32 %v3239, 0.5
        %v3272 = vmul.f32 %v3240, 0.5
        %v3273 = vmul.f32 %v3241, 0.5
        %v3274 = vmul.f32 %v3242, 0.5
        %v3275 = vmul.f32 %v3243, 0.5
        %v3276 = vmul.f32 %v3244, 0.5
        %v3277 = vmul.f32 %v3245, 0.5
        %v3278 = vmul.f32 %v3246, 0.5
        %v3279 = vmul.f32 %v3247, 0.5
        %v3280 = vmul.f32 %v3248, 0.5
        %v3281 = vmul.f32 %v3249, 0.5
        %v3282 = vmul.f32 %v3250, 0.5
        %v3283 = vmul.f32 %v3251, 0.5
        %v3284 = vmul.f32 %v3252, 0.5
        %v3285 = vmul.f32 %v3253, 0.5
        %v3286 = vmul.f32 %v3254, 0.5
        %v3287 = vmul.f32 %v3255, 0.5
        %v3288 = vmul.f32 %v3256, 0.5
        %v3289 = vmul.f32 %v3257, 0.5
        %v3290 = vmul.f32 %v3258, 0.5
        %v3291 = vmul.f32 %v3259, 0.5
        %v3292 = vmul.f32 %v3260, 0.5
        %v3293 = vmul.f32 %v3261, 0.5
        %v3294 = vmul.f32 %v3262, 0.5
        %v3295 = vmul.f32 %v3263, 0.5
        %v3296 = vmul.f32 %v3264, 0.5
        %v3297 = vadd.f32 %v3265, 0.5
        %v3298 = vadd.f32 %v3266, 0.5
        %v3299 = vadd.f32 %v3267, 0.5
        %v3300 = vadd.f32 %v3268, 0.5
        %v3301 = vadd.f32 %v3269, 0.5
        %v3302 = vadd.f32 %v3270, 0.5
        %v3303 = vadd.f32 %v3271, 0.5
        %v3304 = vadd.f32 %v3272, 0.5
        %v3305 = vadd.f32 %v3273, 0.5
        %v3306 = vadd.f32 %v3274, 0.5
        %v3307 = vadd.f32 %v3275, 0.5
        %v3308 = vadd.f32 %v3276, 0.5
        %v3309 = vadd.f32 %v3277, 0.5
        %v3310 = vadd.f32 %v3278, 0.5
        %v3311 = vadd.f32 %v3279, 0.5
        %v3312 = vadd.f32 %v3280, 0.5
        %v3313 = vadd.f32 %v3281, 0.5
        %v3314 = vadd.f32 %v3282, 0.5
        %v3315 = vadd.f32 %v3283, 0.5
        %v3316 = vadd.f32 %v3284, 0.5
        %v3317 = vadd.f32 %v3285, 0.5
        %v3318 = vadd.f32 %v3286, 0.5
        %v3319 = vadd.f32 %v3287, 0.5
        %v3320 = vadd.f32 %v3288, 0.5
        %v3321 = vadd.f32 %v3289, 0.5
        %v3322 = vadd.f32 %v3290, 0.5
        %v3323 = vadd.f32 %v3291, 0.5
        %v3324 = vadd.f32 %v3292, 0.5
        %v3325 = vadd.f32 %v3293, 0.5
        %v3326 = vadd.f32 %v3294, 0.5
        %v3327 = vadd.f32 %v3295, 0.5
        %v3328 = vadd.f32 %v3296, 0.5
        %v3329 = vmul.f32 %v2756, 0.5
        %v3330 = vmul.f32 %v2762, 0.5
        %v3331 = vmul.f32 %v2768, 0.5
        %v3332 = vmul.f32 %v2774, 0.5
        %v3333 = vmul.f32 %v2780, 0.5
        %v3334 = vmul.f32 %v2786, 0.5
        %v3335 = vmul.f32 %v2792, 0.5
        %v3336 = vmul.f32 %v2798, 0.5
        %v3337 = vmul.f32 %v2804, 0.5
        %v3338 = vmul.f32 %v2810, 0.5
        %v3339 = vmul.f32 %v2816, 0.5
        %v3340 = vmul.f32 %v2822, 0.5
        %v3341 = vmul.f32 %v2828, 0.5
        %v3342 = vmul.f32 %v2834, 0.5
        %v3343 = vmul.f32 %v2840, 0.5
        %v3344 = vmul.f32 %v2846, 0.5
        %v3345 = vmul.f32 %v2852, 0.5
        %v3346 = vmul.f32 %v2858, 0.5
        %v3347 = vmul.f32 %v2864, 0.5
        %v3348 = vmul.f32 %v2870, 0.5
        %v3349 = vmul.f32 %v2876, 0.5
        %v3350 = vmul.f32 %v2882, 0.5
        %v3351 = vmul.f32 %v2888, 0.5
        %v3352 = vmul.f32 %v2894, 0.5
        %v3353 = vmul.f32 %v2900, 0.5
        %v3354 = vmul.f32 %v2906, 0.5
        %v3355 = vmul.f32 %v2912, 0.5
        %v3356 = vmul.f32 %v2918, 0.5
        %v3357 = vmul.f32 %v2924, 0.5
        %v3358 = vmul.f32 %v2930, 0.5
        %v3359 = vmul.f32 %v2936, 0.5
        %v3360 = vmul.f32 %v2942, 0.5
        %v3361 = vtanh.pop %v3329
        %v3362 = vtanh.pop %v3330
        %v3363 = vtanh.pop %v3331
        %v3364 = vtanh.pop %v3332
        %v3365 = vtanh.pop %v3333
        %v3366 = vtanh.pop %v3334
        %v3367 = vtanh.pop %v3335
        %v3368 = vtanh.pop %v3336
        %v3369 = vtanh.pop %v3337
        %v3370 = vtanh.pop %v3338
        %v3371 = vtanh.pop %v3339
        %v3372 = vtanh.pop %v3340
        %v3373 = vtanh.pop %v3341
        %v3374 = vtanh.pop %v3342
        %v3375 = vtanh.pop %v3343
        %v3376 = vtanh.pop %v3344
        %v3377 = vtanh.pop %v3345
        %v3378 = vtanh.pop %v3346
        %v3379 = vtanh.pop %v3347
        %v3380 = vtanh.pop %v3348
        %v3381 = vtanh.pop %v3349
        %v3382 = vtanh.pop %v3350
        %v3383 = vtanh.pop %v3351
        %v3384 = vtanh.pop %v3352
        %v3385 = vtanh.pop %v3353
        %v3386 = vtanh.pop %v3354
        %v3387 = vtanh.pop %v3355
        %v3388 = vtanh.pop %v3356
        %v3389 = vtanh.pop %v3357
        %v3390 = vtanh.pop %v3358
        %v3391 = vtanh.pop %v3359
        %v3392 = vtanh.pop %v3360
        %v3393 = vmul.f32 %v3361, 0.5
        %v3394 = vmul.f32 %v3362, 0.5
        %v3395 = vmul.f32 %v3363, 0.5
        %v3396 = vmul.f32 %v3364, 0.5
        %v3397 = vmul.f32 %v3365, 0.5
        %v3398 = vmul.f32 %v3366, 0.5
        %v3399 = vmul.f32 %v3367, 0.5
        %v3400 = vmul.f32 %v3368, 0.5
        %v3401 = vmul.f32 %v3369, 0.5
        %v3402 = vmul.f32 %v3370, 0.5
        %v3403 = vmul.f32 %v3371, 0.5
        %v3404 = vmul.f32 %v3372, 0.5
        %v3405 = vmul.f32 %v3373, 0.5
        %v3406 = vmul.f32 %v3374, 0.5
        %v3407 = vmul.f32 %v3375, 0.5
        %v3408 = vmul.f32 %v3376, 0.5
        %v3409 = vmul.f32 %v3377, 0.5
        %v3410 = vmul.f32 %v3378, 0.5
        %v3411 = vmul.f32 %v3379, 0.5
        %v3412 = vmul.f32 %v3380, 0.5
        %v3413 = vmul.f32 %v3381, 0.5
        %v3414 = vmul.f32 %v3382, 0.5
        %v3415 = vmul.f32 %v3383, 0.5
        %v3416 = vmul.f32 %v3384, 0.5
        %v3417 = vmul.f32 %v3385, 0.5
        %v3418 = vmul.f32 %v3386, 0.5
        %v3419 = vmul.f32 %v3387, 0.5
        %v3420 = vmul.f32 %v3388, 0.5
        %v3421 = vmul.f32 %v3389, 0.5
        %v3422 = vmul.f32 %v3390, 0.5
        %v3423 = vmul.f32 %v3391, 0.5
        %v3424 = vmul.f32 %v3392, 0.5
        %v3425 = vadd.f32 %v3393, 0.5
        %v3426 = vadd.f32 %v3394, 0.5
        %v3427 = vadd.f32 %v3395, 0.5
        %v3428 = vadd.f32 %v3396, 0.5
        %v3429 = vadd.f32 %v3397, 0.5
        %v3430 = vadd.f32 %v3398, 0.5
        %v3431 = vadd.f32 %v3399, 0.5
        %v3432 = vadd.f32 %v3400, 0.5
        %v3433 = vadd.f32 %v3401, 0.5
        %v3434 = vadd.f32 %v3402, 0.5
        %v3435 = vadd.f32 %v3403, 0.5
        %v3436 = vadd.f32 %v3404, 0.5
        %v3437 = vadd.f32 %v3405, 0.5
        %v3438 = vadd.f32 %v3406, 0.5
        %v3439 = vadd.f32 %v3407, 0.5
        %v3440 = vadd.f32 %v3408, 0.5
        %v3441 = vadd.f32 %v3409, 0.5
        %v3442 = vadd.f32 %v3410, 0.5
        %v3443 = vadd.f32 %v3411, 0.5
        %v3444 = vadd.f32 %v3412, 0.5
        %v3445 = vadd.f32 %v3413, 0.5
        %v3446 = vadd.f32 %v3414, 0.5
        %v3447 = vadd.f32 %v3415, 0.5
        %v3448 = vadd.f32 %v3416, 0.5
        %v3449 = vadd.f32 %v3417, 0.5
        %v3450 = vadd.f32 %v3418, 0.5
        %v3451 = vadd.f32 %v3419, 0.5
        %v3452 = vadd.f32 %v3420, 0.5
        %v3453 = vadd.f32 %v3421, 0.5
        %v3454 = vadd.f32 %v3422, 0.5
        %v3455 = vadd.f32 %v3423, 0.5
        %v3456 = vadd.f32 %v3424, 0.5
        %v3457 = vtanh.pop %v3011
        %v3458 = vtanh.pop %v3017
        %v3459 = vtanh.pop %v3023
        %v3460 = vtanh.pop %v3029
        %v3461 = vtanh.pop %v3035
        %v3462 = vtanh.pop %v3041
        %v3463 = vtanh.pop %v3047
        %v3464 = vtanh.pop %v3053
        %v3465 = vtanh.pop %v3059
        %v3466 = vtanh.pop %v3065
        %v3467 = vtanh.pop %v3071
        %v3468 = vtanh.pop %v3077
        %v3469 = vtanh.pop %v3083
        %v3470 = vtanh.pop %v3089
        %v3471 = vtanh.pop %v3095
        %v3472 = vtanh.pop %v3101
        %v3473 = vtanh.pop %v3107
        %v3474 = vtanh.pop %v3113
        %v3475 = vtanh.pop %v3119
        %v3476 = vtanh.pop %v3125
        %v3477 = vtanh.pop %v3131
        %v3478 = vtanh.pop %v3137
        %v3479 = vtanh.pop %v3143
        %v3480 = vtanh.pop %v3149
        %v3481 = vtanh.pop %v3155
        %v3482 = vtanh.pop %v3161
        %v3483 = vtanh.pop %v3167
        %v3484 = vtanh.pop %v3173
        %v3485 = vtanh.pop %v3179
        %v3486 = vtanh.pop %v3185
        %v3487 = vtanh.pop %v3191
        %v3488 = vtanh.pop %v3197
        %v3489 = vmul.f32 %v3013, 0.5
        %v3490 = vmul.f32 %v3019, 0.5
        %v3491 = vmul.f32 %v3025, 0.5
        %v3492 = vmul.f32 %v3031, 0.5
        %v3493 = vmul.f32 %v3037, 0.5
        %v3494 = vmul.f32 %v3043, 0.5
        %v3495 = vmul.f32 %v3049, 0.5
        %v3496 = vmul.f32 %v3055, 0.5
        %v3497 = vmul.f32 %v3061, 0.5
        %v3498 = vmul.f32 %v3067, 0.5
        %v3499 = vmul.f32 %v3073, 0.5
        %v3500 = vmul.f32 %v3079, 0.5
        %v3501 = vmul.f32 %v3085, 0.5
        %v3502 = vmul.f32 %v3091, 0.5
        %v3503 = vmul.f32 %v3097, 0.5
        %v3504 = vmul.f32 %v3103, 0.5
        %v3505 = vmul.f32 %v3109, 0.5
        %v3506 = vmul.f32 %v3115, 0.5
        %v3507 = vmul.f32 %v3121, 0.5
        %v3508 = vmul.f32 %v3127, 0.5
        %v3509 = vmul.f32 %v3133, 0.5
        %v3510 = vmul.f32 %v3139, 0.5
        %v3511 = vmul.f32 %v3145, 0.5
        %v3512 = vmul.f32 %v3151, 0.5
        %v3513 = vmul.f32 %v3157, 0.5
        %v3514 = vmul.f32 %v3163, 0.5
        %v3515 = vmul.f32 %v3169, 0.5
        %v3516 = vmul.f32 %v3175, 0.5
        %v3517 = vmul.f32 %v3181, 0.5
        %v3518 = vmul.f32 %v3187, 0.5
        %v3519 = vmul.f32 %v3193, 0.5
        %v3520 = vmul.f32 %v3199, 0.5
        %v3521 = vtanh.pop %v3489
        %v3522 = vtanh.pop %v3490
        %v3523 = vtanh.pop %v3491
        %v3524 = vtanh.pop %v3492
        %v3525 = vtanh.pop %v3493
        %v3526 = vtanh.pop %v3494
        %v3527 = vtanh.pop %v3495
        %v3528 = vtanh.pop %v3496
        %v3529 = vtanh.pop %v3497
        %v3530 = vtanh.pop %v3498
        %v3531 = vtanh.pop %v3499
        %v3532 = vtanh.pop %v3500
        %v3533 = vtanh.pop %v3501
        %v3534 = vtanh.pop %v3502
        %v3535 = vtanh.pop %v3503
        %v3536 = vtanh.pop %v3504
        %v3537 = vtanh.pop %v3505
        %v3538 = vtanh.pop %v3506
        %v3539 = vtanh.pop %v3507
        %v3540 = vtanh.pop %v3508
        %v3541 = vtanh.pop %v3509
        %v3542 = vtanh.pop %v3510
        %v3543 = vtanh.pop %v3511
        %v3544 = vtanh.pop %v3512
        %v3545 = vtanh.pop %v3513
        %v3546 = vtanh.pop %v3514
        %v3547 = vtanh.pop %v3515
        %v3548 = vtanh.pop %v3516
        %v3549 = vtanh.pop %v3517
        %v3550 = vtanh.pop %v3518
        %v3551 = vtanh.pop %v3519
        %v3552 = vtanh.pop %v3520
        %v3553 = vmul.f32 %v3521, 0.5
        %v3554 = vmul.f32 %v3522, 0.5
        %v3555 = vmul.f32 %v3523, 0.5
        %v3556 = vmul.f32 %v3524, 0.5
        %v3557 = vmul.f32 %v3525, 0.5
        %v3558 = vmul.f32 %v3526, 0.5
        %v3559 = vmul.f32 %v3527, 0.5
        %v3560 = vmul.f32 %v3528, 0.5
        %v3561 = vmul.f32 %v3529, 0.5
        %v3562 = vmul.f32 %v3530, 0.5
        %v3563 = vmul.f32 %v3531, 0.5
        %v3564 = vmul.f32 %v3532, 0.5
        %v3565 = vmul.f32 %v3533, 0.5
        %v3566 = vmul.f32 %v3534, 0.5
        %v3567 = vmul.f32 %v3535, 0.5
        %v3568 = vmul.f32 %v3536, 0.5
        %v3569 = vmul.f32 %v3537, 0.5
        %v3570 = vmul.f32 %v3538, 0.5
        %v3571 = vmul.f32 %v3539, 0.5
        %v3572 = vmul.f32 %v3540, 0.5
        %v3573 = vmul.f32 %v3541, 0.5
        %v3574 = vmul.f32 %v3542, 0.5
        %v3575 = vmul.f32 %v3543, 0.5
        %v3576 = vmul.f32 %v3544, 0.5
        %v3577 = vmul.f32 %v3545, 0.5
        %v3578 = vmul.f32 %v3546, 0.5
        %v3579 = vmul.f32 %v3547, 0.5
        %v3580 = vmul.f32 %v3548, 0.5
        %v3581 = vmul.f32 %v3549, 0.5
        %v3582 = vmul.f32 %v3550, 0.5
        %v3583 = vmul.f32 %v3551, 0.5
        %v3584 = vmul.f32 %v3552, 0.5
        %v3585 = vadd.f32 %v3553, 0.5
        %v3586 = vadd.f32 %v3554, 0.5
        %v3587 = vadd.f32 %v3555, 0.5
        %v3588 = vadd.f32 %v3556, 0.5
        %v3589 = vadd.f32 %v3557, 0.5
        %v3590 = vadd.f32 %v3558, 0.5
        %v3591 = vadd.f32 %v3559, 0.5
        %v3592 = vadd.f32 %v3560, 0.5
        %v3593 = vadd.f32 %v3561, 0.5
        %v3594 = vadd.f32 %v3562, 0.5
        %v3595 = vadd.f32 %v3563, 0.5
        %v3596 = vadd.f32 %v3564, 0.5
        %v3597 = vadd.f32 %v3565, 0.5
        %v3598 = vadd.f32 %v3566, 0.5
        %v3599 = vadd.f32 %v3567, 0.5
        %v3600 = vadd.f32 %v3568, 0.5
        %v3601 = vadd.f32 %v3569, 0.5
        %v3602 = vadd.f32 %v3570, 0.5
        %v3603 = vadd.f32 %v3571, 0.5
        %v3604 = vadd.f32 %v3572, 0.5
        %v3605 = vadd.f32 %v3573, 0.5
        %v3606 = vadd.f32 %v3574, 0.5
        %v3607 = vadd.f32 %v3575, 0.5
        %v3608 = vadd.f32 %v3576, 0.5
        %v3609 = vadd.f32 %v3577, 0.5
        %v3610 = vadd.f32 %v3578, 0.5
        %v3611 = vadd.f32 %v3579, 0.5
        %v3612 = vadd.f32 %v3580, 0.5
        %v3613 = vadd.f32 %v3581, 0.5
        %v3614 = vadd.f32 %v3582, 0.5
        %v3615 = vadd.f32 %v3583, 0.5
        %v3616 = vadd.f32 %v3584, 0.5
        %v3617 = vmul.f32 %v3425, %v1003
        %v3618 = vmul.f32 %v3426, %v1008
        %v3619 = vmul.f32 %v3427, %v1013
        %v3620 = vmul.f32 %v3428, %v1018
        %v3621 = vmul.f32 %v3429, %v1023
        %v3622 = vmul.f32 %v3430, %v1028
        %v3623 = vmul.f32 %v3431, %v1033
        %v3624 = vmul.f32 %v3432, %v1038
        %v3625 = vmul.f32 %v3433, %v1043
        %v3626 = vmul.f32 %v3434, %v1048
        %v3627 = vmul.f32 %v3435, %v1053
        %v3628 = vmul.f32 %v3436, %v1058
        %v3629 = vmul.f32 %v3437, %v1063
        %v3630 = vmul.f32 %v3438, %v1068
        %v3631 = vmul.f32 %v3439, %v1073
        %v3632 = vmul.f32 %v3440, %v1078
        %v3633 = vmul.f32 %v3441, %v1083
        %v3634 = vmul.f32 %v3442, %v1088
        %v3635 = vmul.f32 %v3443, %v1093
        %v3636 = vmul.f32 %v3444, %v1098
        %v3637 = vmul.f32 %v3445, %v1103
        %v3638 = vmul.f32 %v3446, %v1108
        %v3639 = vmul.f32 %v3447, %v1113
        %v3640 = vmul.f32 %v3448, %v1118
        %v3641 = vmul.f32 %v3449, %v1123
        %v3642 = vmul.f32 %v3450, %v1128
        %v3643 = vmul.f32 %v3451, %v1133
        %v3644 = vmul.f32 %v3452, %v1138
        %v3645 = vmul.f32 %v3453, %v1143
        %v3646 = vmul.f32 %v3454, %v1148
        %v3647 = vmul.f32 %v3455, %v1153
        %v3648 = vmul.f32 %v3456, %v1158
        %v3649 = vmul.f32 %v3297, %v3457
        %v3650 = vmul.f32 %v3298, %v3458
        %v3651 = vmul.f32 %v3299, %v3459
        %v3652 = vmul.f32 %v3300, %v3460
        %v3653 = vmul.f32 %v3301, %v3461
        %v3654 = vmul.f32 %v3302, %v3462
        %v3655 = vmul.f32 %v3303, %v3463
        %v3656 = vmul.f32 %v3304, %v3464
        %v3657 = vmul.f32 %v3305, %v3465
        %v3658 = vmul.f32 %v3306, %v3466
        %v3659 = vmul.f32 %v3307, %v3467
        %v3660 = vmul.f32 %v3308, %v3468
        %v3661 = vmul.f32 %v3309, %v3469
        %v3662 = vmul.f32 %v3310, %v3470
        %v3663 = vmul.f32 %v3311, %v3471
        %v3664 = vmul.f32 %v3312, %v3472
        %v3665 = vmul.f32 %v3313, %v3473
        %v3666 = vmul.f32 %v3314, %v3474
        %v3667 = vmul.f32 %v3315, %v3475
        %v3668 = vmul.f32 %v3316, %v3476
        %v3669 = vmul.f32 %v3317, %v3477
        %v3670 = vmul.f32 %v3318, %v3478
        %v3671 = vmul.f32 %v3319, %v3479
        %v3672 = vmul.f32 %v3320, %v3480
        %v3673 = vmul.f32 %v3321, %v3481
        %v3674 = vmul.f32 %v3322, %v3482
        %v3675 = vmul.f32 %v3323, %v3483
        %v3676 = vmul.f32 %v3324, %v3484
        %v3677 = vmul.f32 %v3325, %v3485
        %v3678 = vmul.f32 %v3326, %v3486
        %v3679 = vmul.f32 %v3327, %v3487
        %v3680 = vmul.f32 %v3328, %v3488
        %v3681 = vadd.f32 %v3617, %v3649
        %v3682 = vadd.f32 %v3618, %v3650
        %v3683 = vadd.f32 %v3619, %v3651
        %v3684 = vadd.f32 %v3620, %v3652
        %v3685 = vadd.f32 %v3621, %v3653
        %v3686 = vadd.f32 %v3622, %v3654
        %v3687 = vadd.f32 %v3623, %v3655
        %v3688 = vadd.f32 %v3624, %v3656
        %v3689 = vadd.f32 %v3625, %v3657
        %v3690 = vadd.f32 %v3626, %v3658
        %v3691 = vadd.f32 %v3627, %v3659
        %v3692 = vadd.f32 %v3628, %v3660
        %v3693 = vadd.f32 %v3629, %v3661
        %v3694 = vadd.f32 %v3630, %v3662
        %v3695 = vadd.f32 %v3631, %v3663
        %v3696 = vadd.f32 %v3632, %v3664
        %v3697 = vadd.f32 %v3633, %v3665
        %v3698 = vadd.f32 %v3634, %v3666
        %v3699 = vadd.f32 %v3635, %v3667
        %v3700 = vadd.f32 %v3636, %v3668
        %v3701 = vadd.f32 %v3637, %v3669
        %v3702 = vadd.f32 %v3638, %v3670
        %v3703 = vadd.f32 %v3639, %v3671
        %v3704 = vadd.f32 %v3640, %v3672
        %v3705 = vadd.f32 %v3641, %v3673
        %v3706 = vadd.f32 %v3642, %v3674
        %v3707 = vadd.f32 %v3643, %v3675
        %v3708 = vadd.f32 %v3644, %v3676
        %v3709 = vadd.f32 %v3645, %v3677
        %v3710 = vadd.f32 %v3646, %v3678
        %v3711 = vadd.f32 %v3647, %v3679
        %v3712 = vadd.f32 %v3648, %v3680
        %v3713 = vtanh.pop %v3681
        %v3714 = vtanh.pop %v3682
        %v3715 = vtanh.pop %v3683
        %v3716 = vtanh.pop %v3684
        %v3717 = vtanh.pop %v3685
        %v3718 = vtanh.pop %v3686
        %v3719 = vtanh.pop %v3687
        %v3720 = vtanh.pop %v3688
        %v3721 = vtanh.pop %v3689
        %v3722 = vtanh.pop %v3690
        %v3723 = vtanh.pop %v3691
        %v3724 = vtanh.pop %v3692
        %v3725 = vtanh.pop %v3693
        %v3726 = vtanh.pop %v3694
        %v3727 = vtanh.pop %v3695
        %v3728 = vtanh.pop %v3696
        %v3729 = vtanh.pop %v3697
        %v3730 = vtanh.pop %v3698
        %v3731 = vtanh.pop %v3699
        %v3732 = vtanh.pop %v3700
        %v3733 = vtanh.pop %v3701
        %v3734 = vtanh.pop %v3702
        %v3735 = vtanh.pop %v3703
        %v3736 = vtanh.pop %v3704
        %v3737 = vtanh.pop %v3705
        %v3738 = vtanh.pop %v3706
        %v3739 = vtanh.pop %v3707
        %v3740 = vtanh.pop %v3708
        %v3741 = vtanh.pop %v3709
        %v3742 = vtanh.pop %v3710
        %v3743 = vtanh.pop %v3711
        %v3744 = vtanh.pop %v3712
        %v3745 = vmul.f32 %v3585, %v3713
        %v3746 = vmul.f32 %v3586, %v3714
        %v3747 = vmul.f32 %v3587, %v3715
        %v3748 = vmul.f32 %v3588, %v3716
        %v3749 = vmul.f32 %v3589, %v3717
        %v3750 = vmul.f32 %v3590, %v3718
        %v3751 = vmul.f32 %v3591, %v3719
        %v3752 = vmul.f32 %v3592, %v3720
        %v3753 = vmul.f32 %v3593, %v3721
        %v3754 = vmul.f32 %v3594, %v3722
        %v3755 = vmul.f32 %v3595, %v3723
        %v3756 = vmul.f32 %v3596, %v3724
        %v3757 = vmul.f32 %v3597, %v3725
        %v3758 = vmul.f32 %v3598, %v3726
        %v3759 = vmul.f32 %v3599, %v3727
        %v3760 = vmul.f32 %v3600, %v3728
        %v3761 = vmul.f32 %v3601, %v3729
        %v3762 = vmul.f32 %v3602, %v3730
        %v3763 = vmul.f32 %v3603, %v3731
        %v3764 = vmul.f32 %v3604, %v3732
        %v3765 = vmul.f32 %v3605, %v3733
        %v3766 = vmul.f32 %v3606, %v3734
        %v3767 = vmul.f32 %v3607, %v3735
        %v3768 = vmul.f32 %v3608, %v3736
        %v3769 = vmul.f32 %v3609, %v3737
        %v3770 = vmul.f32 %v3610, %v3738
        %v3771 = vmul.f32 %v3611, %v3739
        %v3772 = vmul.f32 %v3612, %v3740
        %v3773 = vmul.f32 %v3613, %v3741
        %v3774 = vmul.f32 %v3614, %v3742
        %v3775 = vmul.f32 %v3615, %v3743
        %v3776 = vmul.f32 %v3616, %v3744
        %v3777 = vld [vmem:[%s9] sm:$0xff]
        %v3778 = vld [vmem:[%s9 + $0x8] sm:$0xff]
        %v3779 = vld [vmem:[%s9 + $0x10] sm:$0xff]
        %v3780 = vld [vmem:[%s9 + $0x18] sm:$0xff]
        %v3781 = vld [vmem:[%s9 + $0x20] sm:$0xff]
        %v3782 = vld [vmem:[%s9 + $0x28] sm:$0xff]
        %v3783 = vld [vmem:[%s9 + $0x30] sm:$0xff]
        %v3784 = vld [vmem:[%s9 + $0x38] sm:$0xff]
        %v3785 = vld [vmem:[%s9 + $0x40] sm:$0xff]
        %v3786 = vld [vmem:[%s9 + $0x48] sm:$0xff]
        %v3787 = vld [vmem:[%s9 + $0x50] sm:$0xff]
        %v3788 = vld [vmem:[%s9 + $0x58] sm:$0xff]
        %v3789 = vld [vmem:[%s9 + $0x60] sm:$0xff]
        %v3790 = vld [vmem:[%s9 + $0x68] sm:$0xff]
        %v3791 = vld [vmem:[%s9 + $0x70] sm:$0xff]
        %v3792 = vld [vmem:[%s9 + $0x78] sm:$0xff]
        %v3793 = vld [vmem:[%s9 + $0x80] sm:$0xff]
        %v3794 = vld [vmem:[%s9 + $0x88] sm:$0xff]
        %v3795 = vld [vmem:[%s9 + $0x90] sm:$0xff]
        %v3796 = vld [vmem:[%s9 + $0x98] sm:$0xff]
        %v3797 = vld [vmem:[%s9 + $0xa0] sm:$0xff]
        %v3798 = vld [vmem:[%s9 + $0xa8] sm:$0xff]
        %v3799 = vld [vmem:[%s9 + $0xb0] sm:$0xff]
        %v3800 = vld [vmem:[%s9 + $0xb8] sm:$0xff]
        %v3801 = vld [vmem:[%s9 + $0xc0] sm:$0xff]
        %v3802 = vld [vmem:[%s9 + $0xc8] sm:$0xff]
        %v3803 = vld [vmem:[%s9 + $0xd0] sm:$0xff]
        %v3804 = vld [vmem:[%s9 + $0xd8] sm:$0xff]
        %v3805 = vld [vmem:[%s9 + $0xe0] sm:$0xff]
        %v3806 = vld [vmem:[%s9 + $0xe8] sm:$0xff]
        %v3807 = vld [vmem:[%s9 + $0xf0] sm:$0xff]
        %v3808 = vld [vmem:[%s9 + $0xf8] sm:$0xff]
        %v3809 = vld [vmem:[%s10] sm:$0x1]
        %v3811 = vlaneseq
        %v3812 = vshrl.u32 %v3811, 7
        %v3813 = vsub.s32 0, %v3812
        %v3814 = vrot.slane %v3809, %v3813
        %3816 = vmatprep.subr.mxu0 0.0
        %3817 = vmatpush1.msra.mxu0 %v3777
        %3818 = vmatprep.subr.mxu0 0.0
        %3819 = vmatpush1.msra.mxu0 %v3778
        %3820 = vmatprep.subr.mxu0 0.0
        %3821 = vmatpush1.msra.mxu0 %v3779
        %3822 = vmatprep.subr.mxu0 0.0
        %3823 = vmatpush1.msra.mxu0 %v3780
        %3824 = vmatprep.subr.mxu0 0.0
        %3825 = vmatpush1.msra.mxu0 %v3781
        %3826 = vmatprep.subr.mxu0 0.0
        %3827 = vmatpush1.msra.mxu0 %v3782
        %3828 = vmatprep.subr.mxu0 0.0
        %3829 = vmatpush1.msra.mxu0 %v3783
        %3830 = vmatprep.subr.mxu0 0.0
        %3831 = vmatpush1.msra.mxu0 %v3784
        %3832 = vmatprep.subr.mxu0 0.0
        %3833 = vmatpush1.msra.mxu0 %v3785
        %3834 = vmatprep.subr.mxu0 0.0
        %3835 = vmatpush1.msra.mxu0 %v3786
        %3836 = vmatprep.subr.mxu0 0.0
        %3837 = vmatpush1.msra.mxu0 %v3787
        %3838 = vmatprep.subr.mxu0 0.0
        %3839 = vmatpush1.msra.mxu0 %v3788
        %3840 = vmatprep.subr.mxu0 0.0
        %3841 = vmatpush1.msra.mxu0 %v3789
        %3842 = vmatprep.subr.mxu0 0.0
        %3843 = vmatpush1.msra.mxu0 %v3790
        %3844 = vmatprep.subr.mxu0 0.0
        %3845 = vmatpush1.msra.mxu0 %v3791
        %3846 = vmatprep.subr.mxu0 0.0
        %3847 = vmatpush1.msra.mxu0 %v3792
        %3848 = vmatprep.subr.mxu0 0.0
        %3849 = vmatpush1.msra.mxu0 %v3793
        %3850 = vmatprep.subr.mxu0 0.0
        %3851 = vmatpush1.msra.mxu0 %v3794
        %3852 = vmatprep.subr.mxu0 0.0
        %3853 = vmatpush1.msra.mxu0 %v3795
        %3854 = vmatprep.subr.mxu0 0.0
        %3855 = vmatpush1.msra.mxu0 %v3796
        %3856 = vmatprep.subr.mxu0 0.0
        %3857 = vmatpush1.msra.mxu0 %v3797
        %3858 = vmatprep.subr.mxu0 0.0
        %3859 = vmatpush1.msra.mxu0 %v3798
        %3860 = vmatprep.subr.mxu0 0.0
        %3861 = vmatpush1.msra.mxu0 %v3799
        %3862 = vmatprep.subr.mxu0 0.0
        %3863 = vmatpush1.msra.mxu0 %v3800
        %3864 = vmatprep.subr.mxu0 0.0
        %3865 = vmatpush1.msra.mxu0 %v3801
        %3866 = vmatprep.subr.mxu0 0.0
        %3867 = vmatpush1.msra.mxu0 %v3802
        %3868 = vmatprep.subr.mxu0 0.0
        %3869 = vmatpush1.msra.mxu0 %v3803
        %3870 = vmatprep.subr.mxu0 0.0
        %3871 = vmatpush1.msra.mxu0 %v3804
        %3872 = vmatprep.subr.mxu0 0.0
        %3873 = vmatpush1.msra.mxu0 %v3805
        %3874 = vmatprep.subr.mxu0 0.0
        %3875 = vmatpush1.msra.mxu0 %v3806
        %3876 = vmatprep.subr.mxu0 0.0
        %3877 = vmatpush1.msra.mxu0 %v3807
        %3878 = vmatprep.subr.mxu0 0.0
        %3879 = vmatpush1.msra.mxu0 %v3808
        %3880 = vmatprep.mubr.f32.mxu0 %v3681
        %3881 = vmatmul.mubr.f32.gmra.mrb[0].mxu0 %v3745
        %v3882 = vpop.f32.mrb[0].mxu0
        %v3883 = vadd.f32 %v3814, %v3882
        %v3884 = vpop.f32.mrb[0].mxu0
        %3885 = vmatprep.mubr.f32.mxu0 %v3682
        %3886 = vmatmul.mubr.f32.gmra.mrb[0].mxu0 %v3746
        %v3887 = vpop.f32.mrb[0].mxu0
        %v3888 = vadd.f32 %v3814, %v3887
        %v3889 = vpop.f32.mrb[0].mxu0
        %3890 = vmatprep.mubr.f32.mxu0 %v3683
        %3891 = vmatmul.mubr.f32.gmra.mrb[0].mxu0 %v3747
        %v3892 = vpop.f32.mrb[0].mxu0
        %v3893 = vadd.f32 %v3814, %v3892
        %v3894 = vpop.f32.mrb[0].mxu0
        %3895 = vmatprep.mubr.f32.mxu0 %v3684
        %3896 = vmatmul.mubr.f32.gmra.mrb[0].mxu0 %v3748
        %v3897 = vpop.f32.mrb[0].mxu0
        %v3898 = vadd.f32 %v3814, %v3897
        %v3899 = vpop.f32.mrb[0].mxu0
        %3900 = vmatprep.mubr.f32.mxu0 %v3685
        %3901 = vmatmul.mubr.f32.gmra.mrb[0].mxu0 %v3749
        %v3902 = vpop.f32.mrb[0].mxu0
        %v3903 = vadd.f32 %v3814, %v3902
        %v3904 = vpop.f32.mrb[0].mxu0
        %3905 = vmatprep.mubr.f32.mxu0 %v3686
        %3906 = vmatmul.mubr.f32.gmra.mrb[0].mxu0 %v3750
        %v3907 = vpop.f32.mrb[0].mxu0
        %v3908 = vadd.f32 %v3814, %v3907
        %v3909 = vpop.f32.mrb[0].mxu0
        %3910 = vmatprep.mubr.f32.mxu0 %v3687
        %3911 = vmatmul.mubr.f32.gmra.mrb[0].mxu0 %v3751
        %v3912 = vpop.f32.mrb[0].mxu0
        %v3913 = vadd.f32 %v3814, %v3912
        %v3914 = vpop.f32.mrb[0].mxu0
        %3915 = vmatprep.mubr.f32.mxu0 %v3688
        %3916 = vmatmul.mubr.f32.gmra.mrb[0].mxu0 %v3752
        %v3917 = vpop.f32.mrb[0].mxu0
        %v3918 = vadd.f32 %v3814, %v3917
        %v3919 = vpop.f32.mrb[0].mxu0
        %3920 = vmatprep.mubr.f32.mxu0 %v3689
        %3921 = vmatmul.mubr.f32.gmra.mrb[0].mxu0 %v3753
        %v3922 = vpop.f32.mrb[0].mxu0
        %v3923 = vadd.f32 %v3814, %v3922
        %v3924 = vpop.f32.mrb[0].mxu0
        %3925 = vmatprep.mubr.f32.mxu0 %v3690
        %3926 = vmatmul.mubr.f32.gmra.mrb[0].mxu0 %v3754
        %v3927 = vpop.f32.mrb[0].mxu0
        %v3928 = vadd.f32 %v3814, %v3927
        %v3929 = vpop.f32.mrb[0].mxu0
        %3930 = vmatprep.mubr.f32.mxu0 %v3691
        %3931 = vmatmul.mubr.f32.gmra.mrb[0].mxu0 %v3755
        %v3932 = vpop.f32.mrb[0].mxu0
        %v3933 = vadd.f32 %v3814, %v3932
        %v3934 = vpop.f32.mrb[0].mxu0
        %3935 = vmatprep.mubr.f32.mxu0 %v3692
        %3936 = vmatmul.mubr.f32.gmra.mrb[0].mxu0 %v3756
        %v3937 = vpop.f32.mrb[0].mxu0
        %v3938 = vadd.f32 %v3814, %v3937
        %v3939 = vpop.f32.mrb[0].mxu0
        %3940 = vmatprep.mubr.f32.mxu0 %v3693
        %3941 = vmatmul.mubr.f32.gmra.mrb[0].mxu0 %v3757
        %v3942 = vpop.f32.mrb[0].mxu0
        %v3943 = vadd.f32 %v3814, %v3942
        %v3944 = vpop.f32.mrb[0].mxu0
        %3945 = vmatprep.mubr.f32.mxu0 %v3694
        %3946 = vmatmul.mubr.f32.gmra.mrb[0].mxu0 %v3758
        %v3947 = vpop.f32.mrb[0].mxu0
        %v3948 = vadd.f32 %v3814, %v3947
        %v3949 = vpop.f32.mrb[0].mxu0
        %3950 = vmatprep.mubr.f32.mxu0 %v3695
        %3951 = vmatmul.mubr.f32.gmra.mrb[0].mxu0 %v3759
        %v3952 = vpop.f32.mrb[0].mxu0
        %v3953 = vadd.f32 %v3814, %v3952
        %v3954 = vpop.f32.mrb[0].mxu0
        %3955 = vmatprep.mubr.f32.mxu0 %v3696
        %3956 = vmatmul.mubr.f32.gmra.mrb[0].mxu0 %v3760
        %v3957 = vpop.f32.mrb[0].mxu0
        %v3958 = vadd.f32 %v3814, %v3957
        %v3959 = vpop.f32.mrb[0].mxu0
        %3960 = vmatprep.mubr.f32.mxu0 %v3697
        %3961 = vmatmul.mubr.f32.gmra.mrb[0].mxu0 %v3761
        %v3962 = vpop.f32.mrb[0].mxu0
        %v3963 = vadd.f32 %v3814, %v3962
        %v3964 = vpop.f32.mrb[0].mxu0
        %3965 = vmatprep.mubr.f32.mxu0 %v3698
        %3966 = vmatmul.mubr.f32.gmra.mrb[0].mxu0 %v3762
        %v3967 = vpop.f32.mrb[0].mxu0
        %v3968 = vadd.f32 %v3814, %v3967
        %v3969 = vpop.f32.mrb[0].mxu0
        %3970 = vmatprep.mubr.f32.mxu0 %v3699
        %3971 = vmatmul.mubr.f32.gmra.mrb[0].mxu0 %v3763
        %v3972 = vpop.f32.mrb[0].mxu0
        %v3973 = vadd.f32 %v3814, %v3972
        %v3974 = vpop.f32.mrb[0].mxu0
        %3975 = vmatprep.mubr.f32.mxu0 %v3700
        %3976 = vmatmul.mubr.f32.gmra.mrb[0].mxu0 %v3764
        %v3977 = vpop.f32.mrb[0].mxu0
        %v3978 = vadd.f32 %v3814, %v3977
        %v3979 = vpop.f32.mrb[0].mxu0
        %3980 = vmatprep.mubr.f32.mxu0 %v3701
        %3981 = vmatmul.mubr.f32.gmra.mrb[0].mxu0 %v3765
        %v3982 = vpop.f32.mrb[0].mxu0
        %v3983 = vadd.f32 %v3814, %v3982
        %v3984 = vpop.f32.mrb[0].mxu0
        %3985 = vmatprep.mubr.f32.mxu0 %v3702
        %3986 = vmatmul.mubr.f32.gmra.mrb[0].mxu0 %v3766
        %v3987 = vpop.f32.mrb[0].mxu0
        %v3988 = vadd.f32 %v3814, %v3987
        %v3989 = vpop.f32.mrb[0].mxu0
        %3990 = vmatprep.mubr.f32.mxu0 %v3703
        %3991 = vmatmul.mubr.f32.gmra.mrb[0].mxu0 %v3767
        %v3992 = vpop.f32.mrb[0].mxu0
        %v3993 = vadd.f32 %v3814, %v3992
        %v3994 = vpop.f32.mrb[0].mxu0
        %3995 = vmatprep.mubr.f32.mxu0 %v3704
        %3996 = vmatmul.mubr.f32.gmra.mrb[0].mxu0 %v3768
        %v3997 = vpop.f32.mrb[0].mxu0
        %v3998 = vadd.f32 %v3814, %v3997
        %v3999 = vpop.f32.mrb[0].mxu0
        %4000 = vmatprep.mubr.f32.mxu0 %v3705
        %4001 = vmatmul.mubr.f32.gmra.mrb[0].mxu0 %v3769
        %v4002 = vpop.f32.mrb[0].mxu0
        %v4003 = vadd.f32 %v3814, %v4002
        %v4004 = vpop.f32.mrb[0].mxu0
        %4005 = vmatprep.mubr.f32.mxu0 %v3706
        %4006 = vmatmul.mubr.f32.gmra.mrb[0].mxu0 %v3770
        %v4007 = vpop.f32.mrb[0].mxu0
        %v4008 = vadd.f32 %v3814, %v4007
        %v4009 = vpop.f32.mrb[0].mxu0
        %4010 = vmatprep.mubr.f32.mxu0 %v3707
        %4011 = vmatmul.mubr.f32.gmra.mrb[0].mxu0 %v3771
        %v4012 = vpop.f32.mrb[0].mxu0
        %v4013 = vadd.f32 %v3814, %v4012
        %v4014 = vpop.f32.mrb[0].mxu0
        %4015 = vmatprep.mubr.f32.mxu0 %v3708
        %4016 = vmatmul.mubr.f32.gmra.mrb[0].mxu0 %v3772
        %v4017 = vpop.f32.mrb[0].mxu0
        %v4018 = vadd.f32 %v3814, %v4017
        %v4019 = vpop.f32.mrb[0].mxu0
        %4020 = vmatprep.mubr.f32.mxu0 %v3709
        %4021 = vmatmul.mubr.f32.gmra.mrb[0].mxu0 %v3773
        %v4022 = vpop.f32.mrb[0].mxu0
        %v4023 = vadd.f32 %v3814, %v4022
        %v4024 = vpop.f32.mrb[0].mxu0
        %4025 = vmatprep.mubr.f32.mxu0 %v3710
        %4026 = vmatmul.mubr.f32.gmra.mrb[0].mxu0 %v3774
        %v4027 = vpop.f32.mrb[0].mxu0
        %v4028 = vadd.f32 %v3814, %v4027
        %v4029 = vpop.f32.mrb[0].mxu0
        %4030 = vmatprep.mubr.f32.mxu0 %v3711
        %4031 = vmatmul.mubr.f32.gmra.mrb[0].mxu0 %v3775
        %v4032 = vpop.f32.mrb[0].mxu0
        %v4033 = vadd.f32 %v3814, %v4032
        %v4034 = vpop.f32.mrb[0].mxu0
        %4035 = vmatprep.mubr.f32.mxu0 %v3712
        %4036 = vmatmul.mubr.f32.gmra.mrb[0].mxu0 %v3776
        %v4037 = vpop.f32.mrb[0].mxu0
        %v4038 = vadd.f32 %v3814, %v4037
        %v4039 = vpop.f32.mrb[0].mxu0
        %4040 = vdwg.mxu0
        %v4041 = vmax.f32 %v3883, 0.0
        %v4042 = vmax.f32 %v3888, 0.0
        %v4043 = vmax.f32 %v3893, 0.0
        %v4044 = vmax.f32 %v3898, 0.0
        %v4045 = vmax.f32 %v3903, 0.0
        %v4046 = vmax.f32 %v3908, 0.0
        %v4047 = vmax.f32 %v3913, 0.0
        %v4048 = vmax.f32 %v3918, 0.0
        %v4049 = vmax.f32 %v3923, 0.0
        %v4050 = vmax.f32 %v3928, 0.0
        %v4051 = vmax.f32 %v3933, 0.0
        %v4052 = vmax.f32 %v3938, 0.0
        %v4053 = vmax.f32 %v3943, 0.0
        %v4054 = vmax.f32 %v3948, 0.0
        %v4055 = vmax.f32 %v3953, 0.0
        %v4056 = vmax.f32 %v3958, 0.0
        %v4057 = vmax.f32 %v3963, 0.0
        %v4058 = vmax.f32 %v3968, 0.0
        %v4059 = vmax.f32 %v3973, 0.0
        %v4060 = vmax.f32 %v3978, 0.0
        %v4061 = vmax.f32 %v3983, 0.0
        %v4062 = vmax.f32 %v3988, 0.0
        %v4063 = vmax.f32 %v3993, 0.0
        %v4064 = vmax.f32 %v3998, 0.0
        %v4065 = vmax.f32 %v4003, 0.0
        %v4066 = vmax.f32 %v4008, 0.0
        %v4067 = vmax.f32 %v4013, 0.0
        %v4068 = vmax.f32 %v4018, 0.0
        %v4069 = vmax.f32 %v4023, 0.0
        %v4070 = vmax.f32 %v4028, 0.0
        %v4071 = vmax.f32 %v4033, 0.0
        %v4072 = vmax.f32 %v4038, 0.0
        %v4073 = vld [vmem:[#allocation7] sm:$0xff]
        %v4074 = vld [vmem:[#allocation7 + $0x8] sm:$0xff]
        %v4075 = vld [vmem:[#allocation7 + $0x10] sm:$0xff]
        %v4076 = vld [vmem:[#allocation7 + $0x18] sm:$0xff]
        %v4077 = vld [vmem:[#allocation7 + $0x20] sm:$0xff]
        %v4078 = vld [vmem:[#allocation7 + $0x28] sm:$0xff]
        %v4079 = vld [vmem:[#allocation7 + $0x30] sm:$0xff]
        %v4080 = vld [vmem:[#allocation7 + $0x38] sm:$0xff]
        %v4081 = vld [vmem:[#allocation7 + $0x40] sm:$0xff]
        %v4082 = vld [vmem:[#allocation7 + $0x48] sm:$0xff]
        %v4083 = vld [vmem:[#allocation7 + $0x50] sm:$0xff]
        %v4084 = vld [vmem:[#allocation7 + $0x58] sm:$0xff]
        %v4085 = vld [vmem:[#allocation7 + $0x60] sm:$0xff]
        %v4086 = vld [vmem:[#allocation7 + $0x68] sm:$0xff]
        %v4087 = vld [vmem:[#allocation7 + $0x70] sm:$0xff]
        %v4088 = vld [vmem:[#allocation7 + $0x78] sm:$0xff]
        %v4089 = vld [vmem:[%s12] sm:$0x1]
        %v4091 = vlaneseq
        %v4092 = vshrl.u32 %v4091, 7
        %v4093 = vsub.s32 0, %v4092
        %v4094 = vrot.slane %v4089, %v4093
        %4096 = vmatprep.subr.mxu0 0.0
        %4097 = vmatpush1.msra.mxu0 %v4073
        %4098 = vmatprep.subr.mxu0 0.0
        %4099 = vmatpush1.msra.mxu0 %v4074
        %4100 = vmatprep.subr.mxu0 0.0
        %4101 = vmatpush1.msra.mxu0 %v4075
        %4102 = vmatprep.subr.mxu0 0.0
        %4103 = vmatpush1.msra.mxu0 %v4076
        %4104 = vmatprep.subr.mxu0 0.0
        %4105 = vmatpush1.msra.mxu0 %v4077
        %4106 = vmatprep.subr.mxu0 0.0
        %4107 = vmatpush1.msra.mxu0 %v4078
        %4108 = vmatprep.subr.mxu0 0.0
        %4109 = vmatpush1.msra.mxu0 %v4079
        %4110 = vmatprep.subr.mxu0 0.0
        %4111 = vmatpush1.msra.mxu0 %v4080
        %4112 = vmatprep.subr.mxu0 0.0
        %4113 = vmatpush1.msra.mxu0 %v4081
        %4114 = vmatprep.subr.mxu0 0.0
        %4115 = vmatpush1.msra.mxu0 %v4082
        %4116 = vmatprep.subr.mxu0 0.0
        %4117 = vmatpush1.msra.mxu0 %v4083
        %4118 = vmatprep.subr.mxu0 0.0
        %4119 = vmatpush1.msra.mxu0 %v4084
        %4120 = vmatprep.subr.mxu0 0.0
        %4121 = vmatpush1.msra.mxu0 %v4085
        %4122 = vmatprep.subr.mxu0 0.0
        %4123 = vmatpush1.msra.mxu0 %v4086
        %4124 = vmatprep.subr.mxu0 0.0
        %4125 = vmatpush1.msra.mxu0 %v4087
        %4126 = vmatprep.subr.mxu0 0.0
        %4127 = vmatpush1.msra.mxu0 %v4088
        %4128 = vmatprep.subr.mxu0 0.0
        %4129 = vmatpush1.msra.mxu0 0.0
        %4130 = vmatprep.subr.mxu0 0.0
        %4131 = vmatpush1.msra.mxu0 0.0
        %4132 = vmatprep.subr.mxu0 0.0
        %4133 = vmatpush1.msra.mxu0 0.0
        %4134 = vmatprep.subr.mxu0 0.0
        %4135 = vmatpush1.msra.mxu0 0.0
        %4136 = vmatprep.subr.mxu0 0.0
        %4137 = vmatpush1.msra.mxu0 0.0
        %4138 = vmatprep.subr.mxu0 0.0
        %4139 = vmatpush1.msra.mxu0 0.0
        %4140 = vmatprep.subr.mxu0 0.0
        %4141 = vmatpush1.msra.mxu0 0.0
        %4142 = vmatprep.subr.mxu0 0.0
        %4143 = vmatpush1.msra.mxu0 0.0
        %4144 = vmatprep.subr.mxu0 0.0
        %4145 = vmatpush1.msra.mxu0 0.0
        %4146 = vmatprep.subr.mxu0 0.0
        %4147 = vmatpush1.msra.mxu0 0.0
        %4148 = vmatprep.subr.mxu0 0.0
        %4149 = vmatpush1.msra.mxu0 0.0
        %4150 = vmatprep.subr.mxu0 0.0
        %4151 = vmatpush1.msra.mxu0 0.0
        %4152 = vmatprep.subr.mxu0 0.0
        %4153 = vmatpush1.msra.mxu0 0.0
        %4154 = vmatprep.subr.mxu0 0.0
        %4155 = vmatpush1.msra.mxu0 0.0
        %4156 = vmatprep.subr.mxu0 0.0
        %4157 = vmatpush1.msra.mxu0 0.0
        %4158 = vmatprep.subr.mxu0 0.0
        %4159 = vmatpush1.msra.mxu0 0.0
        %4160 = vmatprep.mubr.f32.mxu0 0.0
        %4161 = vmatmul.mubr.f32.gmra.mrb[0].mxu0 %v4041
        %v4162 = vpop.f32.mrb[0].mxu0
        %v4163 = vadd.f32 %v4094, %v4162
        %v4164 = vpop.f32.mrb[0].mxu0
        %4165 = vmatprep.mubr.f32.mxu0 0.0
        %4166 = vmatmul.mubr.f32.gmra.mrb[0].mxu0 %v4042
        %v4167 = vpop.f32.mrb[0].mxu0
        %v4168 = vadd.f32 %v4094, %v4167
        %v4169 = vpop.f32.mrb[0].mxu0
        %4170 = vmatprep.mubr.f32.mxu0 0.0
        %4171 = vmatmul.mubr.f32.gmra.mrb[0].mxu0 %v4043
        %v4172 = vpop.f32.mrb[0].mxu0
        %v4173 = vadd.f32 %v4094, %v4172
        %v4174 = vpop.f32.mrb[0].mxu0
        %4175 = vmatprep.mubr.f32.mxu0 0.0
        %4176 = vmatmul.mubr.f32.gmra.mrb[0].mxu0 %v4044
        %v4177 = vpop.f32.mrb[0].mxu0
        %v4178 = vadd.f32 %v4094, %v4177
        %v4179 = vpop.f32.mrb[0].mxu0
        %4180 = vmatprep.mubr.f32.mxu0 0.0
        %4181 = vmatmul.mubr.f32.gmra.mrb[0].mxu0 %v4045
        %v4182 = vpop.f32.mrb[0].mxu0
        %v4183 = vadd.f32 %v4094, %v4182
        %v4184 = vpop.f32.mrb[0].mxu0
        %4185 = vmatprep.mubr.f32.mxu0 0.0
        %4186 = vmatmul.mubr.f32.gmra.mrb[0].mxu0 %v4046
        %v4187 = vpop.f32.mrb[0].mxu0
        %v4188 = vadd.f32 %v4094, %v4187
        %v4189 = vpop.f32.mrb[0].mxu0
        %4190 = vmatprep.mubr.f32.mxu0 0.0
        %4191 = vmatmul.mubr.f32.gmra.mrb[0].mxu0 %v4047
        %v4192 = vpop.f32.mrb[0].mxu0
        %v4193 = vadd.f32 %v4094, %v4192
        %v4194 = vpop.f32.mrb[0].mxu0
        %4195 = vmatprep.mubr.f32.mxu0 0.0
        %4196 = vmatmul.mubr.f32.gmra.mrb[0].mxu0 %v4048
        %v4197 = vpop.f32.mrb[0].mxu0
        %v4198 = vadd.f32 %v4094, %v4197
        %v4199 = vpop.f32.mrb[0].mxu0
        %4200 = vmatprep.mubr.f32.mxu0 0.0
        %4201 = vmatmul.mubr.f32.gmra.mrb[0].mxu0 %v4049
        %v4202 = vpop.f32.mrb[0].mxu0
        %v4203 = vadd.f32 %v4094, %v4202
        %v4204 = vpop.f32.mrb[0].mxu0
        %4205 = vmatprep.mubr.f32.mxu0 0.0
        %4206 = vmatmul.mubr.f32.gmra.mrb[0].mxu0 %v4050
        %v4207 = vpop.f32.mrb[0].mxu0
        %v4208 = vadd.f32 %v4094, %v4207
        %v4209 = vpop.f32.mrb[0].mxu0
        %4210 = vmatprep.mubr.f32.mxu0 0.0
        %4211 = vmatmul.mubr.f32.gmra.mrb[0].mxu0 %v4051
        %v4212 = vpop.f32.mrb[0].mxu0
        %v4213 = vadd.f32 %v4094, %v4212
        %v4214 = vpop.f32.mrb[0].mxu0
        %4215 = vmatprep.mubr.f32.mxu0 0.0
        %4216 = vmatmul.mubr.f32.gmra.mrb[0].mxu0 %v4052
        %v4217 = vpop.f32.mrb[0].mxu0
        %v4218 = vadd.f32 %v4094, %v4217
        %v4219 = vpop.f32.mrb[0].mxu0
        %4220 = vmatprep.mubr.f32.mxu0 0.0
        %4221 = vmatmul.mubr.f32.gmra.mrb[0].mxu0 %v4053
        %v4222 = vpop.f32.mrb[0].mxu0
        %v4223 = vadd.f32 %v4094, %v4222
        %v4224 = vpop.f32.mrb[0].mxu0
        %4225 = vmatprep.mubr.f32.mxu0 0.0
        %4226 = vmatmul.mubr.f32.gmra.mrb[0].mxu0 %v4054
        %v4227 = vpop.f32.mrb[0].mxu0
        %v4228 = vadd.f32 %v4094, %v4227
        %v4229 = vpop.f32.mrb[0].mxu0
        %4230 = vmatprep.mubr.f32.mxu0 0.0
        %4231 = vmatmul.mubr.f32.gmra.mrb[0].mxu0 %v4055
        %v4232 = vpop.f32.mrb[0].mxu0
        %v4233 = vadd.f32 %v4094, %v4232
        %v4234 = vpop.f32.mrb[0].mxu0
        %4235 = vmatprep.mubr.f32.mxu0 0.0
        %4236 = vmatmul.mubr.f32.gmra.mrb[0].mxu0 %v4056
        %v4237 = vpop.f32.mrb[0].mxu0
        %v4238 = vadd.f32 %v4094, %v4237
        %v4239 = vpop.f32.mrb[0].mxu0
        %4240 = vmatprep.mubr.f32.mxu0 0.0
        %4241 = vmatmul.mubr.f32.gmra.mrb[0].mxu0 %v4057
        %v4242 = vpop.f32.mrb[0].mxu0
        %v4243 = vadd.f32 %v4094, %v4242
        %v4244 = vpop.f32.mrb[0].mxu0
        %4245 = vmatprep.mubr.f32.mxu0 0.0
        %4246 = vmatmul.mubr.f32.gmra.mrb[0].mxu0 %v4058
        %v4247 = vpop.f32.mrb[0].mxu0
        %v4248 = vadd.f32 %v4094, %v4247
        %v4249 = vpop.f32.mrb[0].mxu0
        %4250 = vmatprep.mubr.f32.mxu0 0.0
        %4251 = vmatmul.mubr.f32.gmra.mrb[0].mxu0 %v4059
        %v4252 = vpop.f32.mrb[0].mxu0
        %v4253 = vadd.f32 %v4094, %v4252
        %v4254 = vpop.f32.mrb[0].mxu0
        %4255 = vmatprep.mubr.f32.mxu0 0.0
        %4256 = vmatmul.mubr.f32.gmra.mrb[0].mxu0 %v4060
        %v4257 = vpop.f32.mrb[0].mxu0
        %v4258 = vadd.f32 %v4094, %v4257
        %v4259 = vpop.f32.mrb[0].mxu0
        %4260 = vmatprep.mubr.f32.mxu0 0.0
        %4261 = vmatmul.mubr.f32.gmra.mrb[0].mxu0 %v4061
        %v4262 = vpop.f32.mrb[0].mxu0
        %v4263 = vadd.f32 %v4094, %v4262
        %v4264 = vpop.f32.mrb[0].mxu0
        %4265 = vmatprep.mubr.f32.mxu0 0.0
        %4266 = vmatmul.mubr.f32.gmra.mrb[0].mxu0 %v4062
        %v4267 = vpop.f32.mrb[0].mxu0
        %v4268 = vadd.f32 %v4094, %v4267
        %v4269 = vpop.f32.mrb[0].mxu0
        %4270 = vmatprep.mubr.f32.mxu0 0.0
        %4271 = vmatmul.mubr.f32.gmra.mrb[0].mxu0 %v4063
        %v4272 = vpop.f32.mrb[0].mxu0
        %v4273 = vadd.f32 %v4094, %v4272
        %v4274 = vpop.f32.mrb[0].mxu0
        %4275 = vmatprep.mubr.f32.mxu0 0.0
        %4276 = vmatmul.mubr.f32.gmra.mrb[0].mxu0 %v4064
        %v4277 = vpop.f32.mrb[0].mxu0
        %v4278 = vadd.f32 %v4094, %v4277
        %v4279 = vpop.f32.mrb[0].mxu0
        %4280 = vmatprep.mubr.f32.mxu0 0.0
        %4281 = vmatmul.mubr.f32.gmra.mrb[0].mxu0 %v4065
        %v4282 = vpop.f32.mrb[0].mxu0
        %v4283 = vadd.f32 %v4094, %v4282
        %v4284 = vpop.f32.mrb[0].mxu0
        %4285 = vmatprep.mubr.f32.mxu0 0.0
        %4286 = vmatmul.mubr.f32.gmra.mrb[0].mxu0 %v4066
        %v4287 = vpop.f32.mrb[0].mxu0
        %v4288 = vadd.f32 %v4094, %v4287
        %v4289 = vpop.f32.mrb[0].mxu0
        %4290 = vmatprep.mubr.f32.mxu0 0.0
        %4291 = vmatmul.mubr.f32.gmra.mrb[0].mxu0 %v4067
        %v4292 = vpop.f32.mrb[0].mxu0
        %v4293 = vadd.f32 %v4094, %v4292
        %v4294 = vpop.f32.mrb[0].mxu0
        %4295 = vmatprep.mubr.f32.mxu0 0.0
        %4296 = vmatmul.mubr.f32.gmra.mrb[0].mxu0 %v4068
        %v4297 = vpop.f32.mrb[0].mxu0
        %v4298 = vadd.f32 %v4094, %v4297
        %v4299 = vpop.f32.mrb[0].mxu0
        %4300 = vmatprep.mubr.f32.mxu0 0.0
        %4301 = vmatmul.mubr.f32.gmra.mrb[0].mxu0 %v4069
        %v4302 = vpop.f32.mrb[0].mxu0
        %v4303 = vadd.f32 %v4094, %v4302
        %v4304 = vpop.f32.mrb[0].mxu0
        %4305 = vmatprep.mubr.f32.mxu0 0.0
        %4306 = vmatmul.mubr.f32.gmra.mrb[0].mxu0 %v4070
        %v4307 = vpop.f32.mrb[0].mxu0
        %v4308 = vadd.f32 %v4094, %v4307
        %v4309 = vpop.f32.mrb[0].mxu0
        %4310 = vmatprep.mubr.f32.mxu0 0.0
        %4311 = vmatmul.mubr.f32.gmra.mrb[0].mxu0 %v4071
        %v4312 = vpop.f32.mrb[0].mxu0
        %v4313 = vadd.f32 %v4094, %v4312
        %v4314 = vpop.f32.mrb[0].mxu0
        %4315 = vmatprep.mubr.f32.mxu0 0.0
        %4316 = vmatmul.mubr.f32.gmra.mrb[0].mxu0 %v4072
        %v4317 = vpop.f32.mrb[0].mxu0
        %v4318 = vadd.f32 %v4094, %v4317
        %v4319 = vpop.f32.mrb[0].mxu0
        %4320 = vdwg.mxu0
        %4321 = vst [vmem:[%s494] sm:$0xff] %v4163
        %4322 = vst [vmem:[%s494 + $0x8] sm:$0xff] %v4168
        %4323 = vst [vmem:[%s494 + $0x10] sm:$0xff] %v4173
        %4324 = vst [vmem:[%s494 + $0x18] sm:$0xff] %v4178
        %4325 = vst [vmem:[%s494 + $0x20] sm:$0xff] %v4183
        %4326 = vst [vmem:[%s494 + $0x28] sm:$0xff] %v4188
        %4327 = vst [vmem:[%s494 + $0x30] sm:$0xff] %v4193
        %4328 = vst [vmem:[%s494 + $0x38] sm:$0xff] %v4198
        %4329 = vst [vmem:[%s494 + $0x40] sm:$0xff] %v4203
        %4330 = vst [vmem:[%s494 + $0x48] sm:$0xff] %v4208
        %4331 = vst [vmem:[%s494 + $0x50] sm:$0xff] %v4213
        %4332 = vst [vmem:[%s494 + $0x58] sm:$0xff] %v4218
        %4333 = vst [vmem:[%s494 + $0x60] sm:$0xff] %v4223
        %4334 = vst [vmem:[%s494 + $0x68] sm:$0xff] %v4228
        %4335 = vst [vmem:[%s494 + $0x70] sm:$0xff] %v4233
        %4336 = vst [vmem:[%s494 + $0x78] sm:$0xff] %v4238
        %4337 = vst [vmem:[%s494 + $0x80] sm:$0xff] %v4243
        %4338 = vst [vmem:[%s494 + $0x88] sm:$0xff] %v4248
        %4339 = vst [vmem:[%s494 + $0x90] sm:$0xff] %v4253
        %4340 = vst [vmem:[%s494 + $0x98] sm:$0xff] %v4258
        %4341 = vst [vmem:[%s494 + $0xa0] sm:$0xff] %v4263
        %4342 = vst [vmem:[%s494 + $0xa8] sm:$0xff] %v4268
        %4343 = vst [vmem:[%s494 + $0xb0] sm:$0xff] %v4273
        %4344 = vst [vmem:[%s494 + $0xb8] sm:$0xff] %v4278
        %4345 = vst [vmem:[%s494 + $0xc0] sm:$0xff] %v4283
        %4346 = vst [vmem:[%s494 + $0xc8] sm:$0xff] %v4288
        %4347 = vst [vmem:[%s494 + $0xd0] sm:$0xff] %v4293
        %4348 = vst [vmem:[%s494 + $0xd8] sm:$0xff] %v4298
        %4349 = vst [vmem:[%s494 + $0xe0] sm:$0xff] %v4303
        %4350 = vst [vmem:[%s494 + $0xe8] sm:$0xff] %v4308
        %4351 = vst [vmem:[%s494 + $0xf0] sm:$0xff] %v4313
        %4352 = vst [vmem:[%s494 + $0xf8] sm:$0xff] %v4318
        %s4353 = sand.u32 %s320, 1
        %s4354 = scalar_lea.sflag [#allocation4], %s4353
        %s4355 = sand.u32 %s320, 1
        %s4356 = smul.addr %s4355, 256
        %s4357 = scalar_lea.vmem [#allocation8], %s4356
        // Predicated region
        $region85: #{tpu_custom_call.1} parent=71 // pred_check
          %p4358 = pneg %p330
        $region86: #{tpu_custom_call.1} parent=71 // pred_check_branch
          %4360 = sbr.rel (%p4358) target = $region88
        $region87: #{tpu_custom_call.1} parent=71 // pred_region
          %s4361 = smul.u32 32, %s29
          %s4363 = ssub.s32 4096, 4096
          %4364 = vsyncadd %s4354, %s4363
          %s4365 = smul.addr %s4361, 128
          %s4366 = scalar_lea.hbm %s13, %s4365
          %s4367 = sshll.u32 %s4357, 4
          %s4368 = int_to_ptr.vmem [resolvable:$true] %s4367
          %4373 = dma.vmem_to_hbm [thread:$0]  %s4368, 4096, %s4366, %s4354, 128, 128, 8
        $region88: #{tpu_custom_call.1} parent=71 // pred_fallthru
          _
      $region72: #{tpu_custom_call.1} parent=5 // pred_fallthru
        _
      %p4374 = scmp.le.s32.totalorder 2, %s24
      // Predicated region
      $region89: #{tpu_custom_call.1} parent=5 // pred_check
        %p4375 = pneg %p4374
      $region90: #{tpu_custom_call.1} parent=5 // pred_check_branch
        %4377 = sbr.rel (%p4375) target = $region92
      $region91: #{tpu_custom_call.1} parent=5 // pred_region
        %s4378 = ssub.s32 %s24, 2
        // Predicated region
        $region93: #{tpu_custom_call.1} parent=91 // pred_check
          %p4379 = pneg %p336
        $region94: #{tpu_custom_call.1} parent=91 // pred_check_branch
          %4381 = sbr.rel (%p4379) target = $region96
        $region95: #{tpu_custom_call.1} parent=91 // pred_region
          %s4382 = sand.u32 %s321, 1
          %s4383 = scalar_lea.sflag [#allocation4], %s4382
          %s4384 = sand.u32 %s321, 1
          %s4385 = smul.addr %s4384, 256
          %s4386 = scalar_lea.vmem [#allocation8], %s4385
          %4387 = dma.done %s4383, 4096
        $region96: #{tpu_custom_call.1} parent=91 // pred_fallthru
          _
      $region92: #{tpu_custom_call.1} parent=5 // pred_fallthru
        _
    $region6: #{tpu_custom_call.1} parent=1 // loop_footer
      %s28 = sadd.s32 1, %s24
    $region7: #{tpu_custom_call.1} parent=1 // loop_footer_branch
      %23 = sbr.rel target = $region3
    $region8: #{tpu_custom_call.1} parent=1 // loop_exit
      _
    %4388 = vsyncpa [#allocation3], 1
    %s4389 = scalar_lea.sflag [#allocation3], 1
    %4390 = vsyncpa %s4389, 1
    %4391 = vsyncpa [#allocation6], 1
    %4392 = vsyncpa [#allocation4], 1
    %s4393 = scalar_lea.sflag [#allocation4], 1
    %4394 = vsyncpa %s4393, 1

</llo_original>
